<compile_context>
chip_gen: v6e
topology: v6e:2x2x1
jax: 0.10.0
libtpu: 0.0.40
codegen_flags: <defaults>
</compile_context>

<pallas_src>
import math

import jax
import jax.numpy as jnp
import numpy as np
from jax import lax
from jax.experimental import pallas as pl
from jax.experimental.pallas import tpu as pltpu

EPS = 1e-5
MATMUL_DTYPE = jnp.bfloat16           # MXU input dtype (accumulation stays f32)


def _round_up(x, m):
    return ((x + m - 1) // m) * m


def _fold_bn(gamma, beta, mean, var, conv_bias):
    scale = gamma / jnp.sqrt(var + EPS)
    shift = beta + (conv_bias - mean) * scale
    return (scale.reshape(1, -1).astype(jnp.float32),
            shift.reshape(1, -1).astype(jnp.float32))


def _geometry(L):
    Lp = L + 6                       # conv1 padding = 3 both sides
    L1 = (Lp - 5) // 2 + 1           # conv1 k=5 s=2
    P1 = (L1 - 5) // 2 + 1           # pool1 k=5 s=2
    L2 = (P1 - 5) // 2 + 1           # conv3 k=5 s=2
    P2 = (L2 - 3) // 2 + 1           # pool2 k=3 s=2
    L3 = P2 - 5 + 1                  # conv5 k=5 s=1
    P3 = (L3 - 3) // 2 + 1           # pool3 k=3 s=2
    L4 = P3 - 3 + 1                  # conv7 k=3 s=1
    P4 = (L4 - 3) // 2 + 1           # pool4 k=3 s=2
    L5 = P4 - 3 + 1                  # conv9 k=3 s=1
    return Lp, L1, P1, L2, P2, L3, P3, L4, P4, L5


def _net_phy_forward(x_ncl, p):
    N, cin0, L = x_ncl.shape
    assert cin0 == 1
    Lp, L1, P1, L2, P2, L3, P3, L4, P4, L5 = _geometry(L)
    assert L5 >= 1, "input too short for the conv/pool pyramid"

    # ---- batch tiling --------------------------------------------------------
    TB = 8 if N >= 16 else N          # N>=16: grid >= 2 (keeps both v7x TCs busy)
    N_pad = _round_up(N, TB)
    num_steps = N_pad // TB

    # ---- padded per-sample row counts (multiples of 16 so even/odd halves are
    #      8-row aligned and reshapes are sublane-clean) ------------------------
    L5p = _round_up(L5, 8)                              # conv9 output rows
    L4p = _round_up(max(L4, 2 * P4 + 2), 16)            # conv7 out (pool4 k=3 src)
    L3p = _round_up(max(L3, 2 * P3 + 2), 16)            # conv5 out (pool3 k=3 src)
    L2p = _round_up(max(L2, 2 * P2 + 2), 16)            # conv3 out (pool2 k=3 src)
    P1p = _round_up(max(P1, 2 * L2p + 4), 16)           # pool1 out (conv3 k=5 src)
    L1p = _round_up(max(L1, 2 * P1 + 4), 16)            # conv1 out (pool1 k=5 src)

    C1, C2, C3, C4, C5 = 16, 32, 64, 96, 96

    # ---- parameter preparation (tiny; constant-folded under jit) --------------
    (w1, b1) = p['conv1']; (w2, b2) = p['conv3']; (w3, b3) = p['conv5']
    (w4, b4) = p['conv7']; (w5, b5) = p['conv9']
    sc1, sh1 = _fold_bn(*p['bn1'], b1)
    sc2, sh2 = _fold_bn(*p['bn2'], b2)
    sc3, sh3 = _fold_bn(*p['bn3'], b3)
    sc4, sh4 = _fold_bn(*p['bn4'], b4)
    sc5, sh5 = _fold_bn(*p['bn5'], b5)

    def col_weight(w):                # (Cout, Cin, K) -> (K*Cin, Cout) bf16
        cout, cin, k = w.shape
        return jnp.transpose(w, (2, 1, 0)).reshape(k * cin, cout).astype(MATMUL_DTYPE)

    w1c = col_weight(w1)              # (5,   16)
    w2c = col_weight(w2)              # (80,  32)
    w3c = col_weight(w3)              # (160, 64)
    w4c = col_weight(w4)              # (192, 96)
    w5c = col_weight(w5)              # (288, 96)
    w_fc, b_fc = p['fc3']
    wfk = w_fc.T.astype(jnp.float32)          # (96, 4)
    bfk = b_fc.reshape(1, 4).astype(jnp.float32)

    # ---- XLA-side im2col for conv1 (stride 2, pad 3, k=5) ----------------------
    sig = x_ncl[:, 0, :]                                        # (N, L)
    sig = jnp.pad(sig, ((0, N_pad - N), (0, 0)))
    src_rows = 2 * (L1p - 1) + 5                                # positions needed
    sig = jnp.pad(sig, ((0, 0), (3, src_rows - L - 3)))         # left pad 3 + tail zeros
    pos = 2 * jnp.arange(L1p)[:, None] + jnp.arange(5)[None, :]  # (L1p, 5)
    x_col = sig[:, pos]                                         # (N_pad, L1p, 5)
    x_col = x_col.reshape(N_pad * L1p, 5).astype(MATMUL_DTYPE)

    # ---- the fused kernel ------------------------------------------------------
    def kernel(xc_ref,
               w1_ref, sc1_ref, sh1_ref,
               w2_ref, sc2_ref, sh2_ref,
               w3_ref, sc3_ref, sh3_ref,
               w4_ref, sc4_ref, sh4_ref,
               w5_ref, sc5_ref, sh5_ref,
               wf_ref, bf_ref,
               o_ref,
               s1, sm1, s2, s3, s4):

        f32 = jnp.float32

        def bn_relu(y, sc_ref, sh_ref):
            return jnp.maximum(y * sc_ref[...] + sh_ref[...], 0.0)

        def split_even_odd(ref, rows_ps, c):
            # One deinterleave pass (2 strided loads) per stride-2 stage.
            half = rows_ps // 2
            ev = ref[pl.ds(0, TB * half, 2), :].reshape(TB, half, c)
            od = ref[pl.ds(1, TB * half, 2), :].reshape(TB, half, c)
            return ev, od

        def maxpool(ref, rows_ps, c, pout, k):
            ev, od = split_even_odd(ref, rows_ps, c)
            out = ev[:, 0:pout, :]
            for t in range(1, k):
                h = ev if t % 2 == 0 else od
                out = jnp.maximum(out, h[:, t // 2:t // 2 + pout, :])
            return out                                   # (TB, pout, c)

        def pad_rows(v, rows):
            tb, r, c = v.shape
            if r >= rows:
                return v[:, :rows, :]
            z = jnp.zeros((tb, rows - r, c), v.dtype)
            return jnp.concatenate([v, z], axis=1)

        def conv_cols(taps, w_ref, sc_ref, sh_ref, n_rows):
            # taps: K values of (TB, n_rows, Cin) -> one MXU matmul with
            # contraction dim K*Cin and M = TB*n_rows.
            cin = taps[0].shape[-1]
            col = jnp.concatenate(taps, axis=-1).astype(MATMUL_DTYPE)
            col = col.reshape(TB * n_rows, len(taps) * cin)
            y = jnp.dot(col, w_ref[...], preferred_element_type=f32)
            return bn_relu(y, sc_ref, sh_ref)            # (TB*n_rows, Cout) f32

        # conv1 + bn1 + relu (input already im2col'd on the host side)
        y1 = jnp.dot(xc_ref[...], w1_ref[...], preferred_element_type=f32)
        s1[...] = bn_relu(y1, sc1_ref, sh1_ref)                   # (TB*L1p, 16)

        # pool1 (k=5, s=2) -> sm1 (zero-padded to P1p rows/sample)
        m1 = maxpool(s1, L1p, C1, P1, 5)                          # (TB, P1, 16)
        sm1[...] = pad_rows(m1, P1p).reshape(TB * P1p, C1)

        # conv3 (k=5, s=2) + bn2 + relu -> s2
        ev1, od1 = split_even_odd(sm1, P1p, C1)
        taps3 = [(ev1 if k % 2 == 0 else od1)[:, k // 2:k // 2 + L2p, :]
                 for k in range(5)]
        s2[...] = conv_cols(taps3, w2_ref, sc2_ref, sh2_ref, L2p)  # (TB*L2p, 32)

        # pool2 (k=3, s=2) ; conv5 (k=5, s=1) + bn3 + relu -> s3
        m2 = pad_rows(maxpool(s2, L2p, C2, P2, 3), L3p + 4)
        taps5 = [m2[:, k:k + L3p, :] for k in range(5)]
        s3[...] = conv_cols(taps5, w3_ref, sc3_ref, sh3_ref, L3p)  # (TB*L3p, 64)

        # pool3 (k=3, s=2) ; conv7 (k=3, s=1) + bn4 + relu -> s4
        m3 = pad_rows(maxpool(s3, L3p, C3, P3, 3), L4p + 2)
        taps7 = [m3[:, k:k + L4p, :] for k in range(3)]
        s4[...] = conv_cols(taps7, w4_ref, sc4_ref, sh4_ref, L4p)  # (TB*L4p, 96)

        # pool4 (k=3, s=2) ; conv9 (k=3, s=1) + bn5 + relu (kept as a value)
        m4 = pad_rows(maxpool(s4, L4p, C4, P4, 3), L5p + 2)
        taps9 = [m4[:, k:k + L5p, :] for k in range(3)]
        y5 = conv_cols(taps9, w5_ref, sc5_ref, sh5_ref, L5p)       # (TB*L5p, 96)

        # AdaptiveAvgPool1d(1) over the valid rows + Linear.
        pooled = jnp.mean(y5.reshape(TB, L5p, C5)[:, :L5, :], axis=1)   # (TB, 96)
        o_ref[...] = jnp.dot(pooled, wf_ref[...],
                             preferred_element_type=f32) + bf_ref[...]

    def cspec(a):                     # VMEM-resident 2-D constant
        return pl.BlockSpec(a.shape, lambda i: (0, 0))

    out = pl.pallas_call(
        kernel,
        out_shape=jax.ShapeDtypeStruct((N_pad, 4), jnp.float32),
        grid_spec=pltpu.PrefetchScalarGridSpec(
            num_scalar_prefetch=0,
            grid=(num_steps,),
            in_specs=[
                pl.BlockSpec((TB * L1p, 5), lambda i: (i, 0)),     # im2col'd input
                cspec(w1c), cspec(sc1), cspec(sh1),
                cspec(w2c), cspec(sc2), cspec(sh2),
                cspec(w3c), cspec(sc3), cspec(sh3),
                cspec(w4c), cspec(sc4), cspec(sh4),
                cspec(w5c), cspec(sc5), cspec(sh5),
                cspec(wfk), cspec(bfk),
            ],
            out_specs=pl.BlockSpec((TB, 4), lambda i: (i, 0)),
            scratch_shapes=[
                pltpu.VMEM((TB * L1p, C1), jnp.float32),   # conv1 output
                pltpu.VMEM((TB * P1p, C1), jnp.float32),   # pool1 output
                pltpu.VMEM((TB * L2p, C2), jnp.float32),   # conv3 output
                pltpu.VMEM((TB * L3p, C3), jnp.float32),   # conv5 output
                pltpu.VMEM((TB * L4p, C4), jnp.float32),   # conv7 output
            ],
        ),
        compiler_params=pltpu.CompilerParams(
            dimension_semantics=("parallel",),             # v7x: split batch over TCs
        ),
    )(x_col, w1c, sc1, sh1, w2c, sc2, sh2, w3c, sc3, sh3,
      w4c, sc4, sh4, w5c, sc5, sh5, wfk, bfk)

    return out[:N]


net_phy_forward = jax.jit(_net_phy_forward)


# ----------------------------------------------------------------------------
# Deterministic parameter init (shapes from the PyTorch __init__)
# ----------------------------------------------------------------------------
def init_params(key):
    keys = jax.random.split(key, 11)

    def conv_p(k, cout, cin, ksz):
        kw, kb = jax.random.split(k)
        bound = 1.0 / math.sqrt(cin * ksz)
        w = jax.random.uniform(kw, (cout, cin, ksz), jnp.float32, -bound, bound)
        b = jax.random.uniform(kb, (cout,), jnp.float32, -bound, bound)
        return (w, b)

    def bn_p(k, c):
        k1, k2, k3, k4 = jax.random.split(k, 4)
        gamma = jax.random.uniform(k1, (c,), jnp.float32, 0.5, 1.5)
        beta = 0.1 * jax.random.normal(k2, (c,), jnp.float32)
        mean = 0.1 * jax.random.normal(k3, (c,), jnp.float32)
        var = jax.random.uniform(k4, (c,), jnp.float32, 0.5, 1.5)
        return (gamma, beta, mean, var)

    def fc_p(k, cout, cin):
        kw, kb = jax.random.split(k)
        bound = 1.0 / math.sqrt(cin)
        w = jax.random.uniform(kw, (cout, cin), jnp.float32, -bound, bound)
        b = jax.random.uniform(kb, (cout,), jnp.float32, -bound, bound)
        return (w, b)

    return {
        'conv1': conv_p(keys[0], 16, 1, 5),  'bn1': bn_p(keys[1], 16),
        'conv3': conv_p(keys[2], 32, 16, 5), 'bn2': bn_p(keys[3], 32),
        'conv5': conv_p(keys[4], 64, 32, 5), 'bn3': bn_p(keys[5], 64),
        'conv7': conv_p(keys[6], 96, 64, 3), 'bn4': bn_p(keys[7], 96),
        'conv9': conv_p(keys[8], 96, 96, 3), 'bn5': bn_p(keys[9], 96),
        'fc3':   fc_p(keys[10], 4, 96),
    }


# ----------------------------------------------------------------------------
# Pure-JAX reference (correctness check only)
# ----------------------------------------------------------------------------
def reference_forward(x_ncl, p):
    def conv1d(x, w, b, stride, pad):
        y = lax.conv_general_dilated(
            x, w, window_strides=(stride,), padding=[(pad, pad)],
            dimension_numbers=('NCH', 'OIH', 'NCH'))
        return y + b[None, :, None]

    def bn(x, gamma, beta, mean, var):
        return ((x - mean[None, :, None]) / jnp.sqrt(var[None, :, None] + EPS)
                * gamma[None, :, None] + beta[None, :, None])

    def mp(x, K, s):
        return lax.reduce_window(x, -jnp.inf, lax.max,
                                 (1, 1, K), (1, 1, s), 'VALID')

    x = jax.nn.relu(bn(conv1d(x_ncl, *p['conv1'], 2, 3), *p['bn1']))
    x = mp(x, 5, 2)
    x = jax.nn.relu(bn(conv1d(x, *p['conv3'], 2, 0), *p['bn2']))
    x = mp(x, 3, 2)
    x = jax.nn.relu(bn(conv1d(x, *p['conv5'], 1, 0), *p['bn3']))
    x = mp(x, 3, 2)
    x = jax.nn.relu(bn(conv1d(x, *p['conv7'], 1, 0), *p['bn4']))
    x = mp(x, 3, 2)
    x = jax.nn.relu(bn(conv1d(x, *p['conv9'], 1, 0), *p['bn5']))
    x = jnp.mean(x, axis=2)                       # AdaptiveAvgPool1d(1) + flatten
    w_fc, b_fc = p['fc3']
    return x @ w_fc.T + b_fc


if __name__ == "__main__":
    key = jax.random.PRNGKey(0)
    kp, kx = jax.random.split(key)
    params = init_params(kp)

    # L=400 is the smallest convenient length above the conv/pool pyramid minimum.
    x = jax.random.normal(kx, (2, 1, 400), jnp.float32)

    out = jax.block_until_ready(net_phy_forward(x, params))
    assert out.shape == (2, 4), out.shape

    ref = jax.block_until_ready(reference_forward(x, params))
    # bf16 MXU operands (f32 accumulation / BN fold) => looser tolerance than
    # the pure-f32 reference.
    np.testing.assert_allclose(np.asarray(out), np.asarray(ref),
                               rtol=5e-2, atol=5e-2)
    print("KERNEL_OK")
</pallas_src>

<mosaic_0001>
module attributes {stable_mosaic.version = 11 : i64} {
  func.func @kernel(%arg0: i32, %arg1: memref<416x5xbf16, #tpu.memory_space<vmem>>, %arg2: memref<5x16xbf16, #tpu.memory_space<vmem>>, %arg3: memref<1x16xf32, #tpu.memory_space<vmem>>, %arg4: memref<1x16xf32, #tpu.memory_space<vmem>>, %arg5: memref<80x32xbf16, #tpu.memory_space<vmem>>, %arg6: memref<1x32xf32, #tpu.memory_space<vmem>>, %arg7: memref<1x32xf32, #tpu.memory_space<vmem>>, %arg8: memref<160x64xbf16, #tpu.memory_space<vmem>>, %arg9: memref<1x64xf32, #tpu.memory_space<vmem>>, %arg10: memref<1x64xf32, #tpu.memory_space<vmem>>, %arg11: memref<192x96xbf16, #tpu.memory_space<vmem>>, %arg12: memref<1x96xf32, #tpu.memory_space<vmem>>, %arg13: memref<1x96xf32, #tpu.memory_space<vmem>>, %arg14: memref<288x96xbf16, #tpu.memory_space<vmem>>, %arg15: memref<1x96xf32, #tpu.memory_space<vmem>>, %arg16: memref<1x96xf32, #tpu.memory_space<vmem>>, %arg17: memref<96x4xf32, #tpu.memory_space<vmem>>, %arg18: memref<1x4xf32, #tpu.memory_space<vmem>>, %arg19: memref<2x4xf32, #tpu.memory_space<vmem>>, %arg20: memref<416x16xf32, #tpu.memory_space<vmem>>, %arg21: memref<224x16xf32, #tpu.memory_space<vmem>>, %arg22: memref<96x32xf32, #tpu.memory_space<vmem>>, %arg23: memref<64x64xf32, #tpu.memory_space<vmem>>, %arg24: memref<32x96xf32, #tpu.memory_space<vmem>>) attributes {dimension_semantics = [#tpu.dimension_semantics<parallel>], iteration_bounds = array<i64: 1>, scalar_prefetch = 0 : i64, scratch_operands = 5 : i64, tpu.core_type = #tpu.core_type<tc>, window_params = [{transform_indices = @transform_0, window_bounds = array<i64: 416, 5>}, {pipeline_mode = #tpu.pipeline_mode<synchronous>, transform_indices = @transform_1, window_bounds = array<i64: 5, 16>}, {pipeline_mode = #tpu.pipeline_mode<synchronous>, transform_indices = @transform_2, window_bounds = array<i64: 1, 16>}, {pipeline_mode = #tpu.pipeline_mode<synchronous>, transform_indices = @transform_3, window_bounds = array<i64: 1, 16>}, {pipeline_mode = #tpu.pipeline_mode<synchronous>, transform_indices = @transform_4, window_bounds = array<i64: 80, 32>}, {pipeline_mode = #tpu.pipeline_mode<synchronous>, transform_indices = @transform_5, window_bounds = array<i64: 1, 32>}, {pipeline_mode = #tpu.pipeline_mode<synchronous>, transform_indices = @transform_6, window_bounds = array<i64: 1, 32>}, {pipeline_mode = #tpu.pipeline_mode<synchronous>, transform_indices = @transform_7, window_bounds = array<i64: 160, 64>}, {pipeline_mode = #tpu.pipeline_mode<synchronous>, transform_indices = @transform_8, window_bounds = array<i64: 1, 64>}, {pipeline_mode = #tpu.pipeline_mode<synchronous>, transform_indices = @transform_9, window_bounds = array<i64: 1, 64>}, {pipeline_mode = #tpu.pipeline_mode<synchronous>, transform_indices = @transform_10, window_bounds = array<i64: 192, 96>}, {pipeline_mode = #tpu.pipeline_mode<synchronous>, transform_indices = @transform_11, window_bounds = array<i64: 1, 96>}, {pipeline_mode = #tpu.pipeline_mode<synchronous>, transform_indices = @transform_12, window_bounds = array<i64: 1, 96>}, {pipeline_mode = #tpu.pipeline_mode<synchronous>, transform_indices = @transform_13, window_bounds = array<i64: 288, 96>}, {pipeline_mode = #tpu.pipeline_mode<synchronous>, transform_indices = @transform_14, window_bounds = array<i64: 1, 96>}, {pipeline_mode = #tpu.pipeline_mode<synchronous>, transform_indices = @transform_15, window_bounds = array<i64: 1, 96>}, {pipeline_mode = #tpu.pipeline_mode<synchronous>, transform_indices = @transform_16, window_bounds = array<i64: 96, 4>}, {pipeline_mode = #tpu.pipeline_mode<synchronous>, transform_indices = @transform_17, window_bounds = array<i64: 1, 4>}, {transform_indices = @transform_18, window_bounds = array<i64: 2, 4>}]} {
    %c0 = arith.constant 0 : index
    %c0_0 = arith.constant 0 : index
    %0 = vector.load %arg1[%c0, %c0_0] : memref<416x5xbf16, #tpu.memory_space<vmem>>, vector<416x5xbf16>
    %c0_1 = arith.constant 0 : index
    %c0_2 = arith.constant 0 : index
    %1 = vector.load %arg2[%c0_1, %c0_2] : memref<5x16xbf16, #tpu.memory_space<vmem>>, vector<5x16xbf16>
    %cst = arith.constant dense<0.000000e+00> : vector<416x16xf32>
    %2 = tpu.matmul %0, %1, %cst {dimension_numbers = #tpu.dot_dimension_numbers<[1], [0], [0], [1], [0, 0, 1, 1], [], []>} : vector<416x5xbf16>, vector<5x16xbf16>, vector<416x16xf32> -> vector<416x16xf32>
    %c0_3 = arith.constant 0 : index
    %c0_4 = arith.constant 0 : index
    %3 = vector.load %arg3[%c0_3, %c0_4] : memref<1x16xf32, #tpu.memory_space<vmem>>, vector<1x16xf32>
    %4 = vector.broadcast %3 : vector<1x16xf32> to vector<416x16xf32>
    %5 = arith.mulf %2, %4 : vector<416x16xf32>
    %c0_5 = arith.constant 0 : index
    %c0_6 = arith.constant 0 : index
    %6 = vector.load %arg4[%c0_5, %c0_6] : memref<1x16xf32, #tpu.memory_space<vmem>>, vector<1x16xf32>
    %7 = vector.broadcast %6 : vector<1x16xf32> to vector<416x16xf32>
    %8 = arith.addf %5, %7 : vector<416x16xf32>
    %cst_7 = arith.constant 0.000000e+00 : f32
    %9 = vector.broadcast %cst_7 : f32 to vector<416x16xf32>
    %10 = arith.maximumf %8, %9 : vector<416x16xf32>
    %c0_8 = arith.constant 0 : index
    %c0_9 = arith.constant 0 : index
    %11 = vector.load %arg20[%c0_8, %c0_9] : memref<416x16xf32, #tpu.memory_space<vmem>>, vector<416x16xf32>
    tpu.vector_store %arg20[%c0_8, %c0_9], %10 {strides = array<i32>} : memref<416x16xf32, #tpu.memory_space<vmem>>, vector<416x16xf32>,
    %c0_10 = arith.constant 0 : index
    %c0_11 = arith.constant 0 : index
    %12 = tpu.strided_load %arg20[%c0_10, %c0_11] {strides = array<i32: 2, 1>} : memref<416x16xf32, #tpu.memory_space<vmem>>, vector<208x16xf32>
    %13 = vector.shape_cast %12 : vector<208x16xf32> to vector<2x104x16xf32>
    %c1 = arith.constant 1 : index
    %c0_12 = arith.constant 0 : index
    %14 = tpu.strided_load %arg20[%c1, %c0_12] {strides = array<i32: 2, 1>} : memref<416x16xf32, #tpu.memory_space<vmem>>, vector<208x16xf32>
    %15 = vector.shape_cast %14 : vector<208x16xf32> to vector<2x104x16xf32>
    %16 = vector.extract_strided_slice %13 {offsets = [0, 0, 0], sizes = [2, 99, 16], strides = [1, 1, 1]} : vector<2x104x16xf32> to vector<2x99x16xf32>
    %17 = vector.extract_strided_slice %15 {offsets = [0, 0, 0], sizes = [2, 99, 16], strides = [1, 1, 1]} : vector<2x104x16xf32> to vector<2x99x16xf32>
    %18 = arith.maximumf %16, %17 : vector<2x99x16xf32>
    %19 = vector.extract_strided_slice %13 {offsets = [0, 1, 0], sizes = [2, 99, 16], strides = [1, 1, 1]} : vector<2x104x16xf32> to vector<2x99x16xf32>
    %20 = arith.maximumf %18, %19 : vector<2x99x16xf32>
    %21 = vector.extract_strided_slice %15 {offsets = [0, 1, 0], sizes = [2, 99, 16], strides = [1, 1, 1]} : vector<2x104x16xf32> to vector<2x99x16xf32>
    %22 = arith.maximumf %20, %21 : vector<2x99x16xf32>
    %23 = vector.extract_strided_slice %13 {offsets = [0, 2, 0], sizes = [2, 99, 16], strides = [1, 1, 1]} : vector<2x104x16xf32> to vector<2x99x16xf32>
    %24 = arith.maximumf %22, %23 : vector<2x99x16xf32>
    %cst_13 = arith.constant 0.000000e+00 : f32
    %25 = vector.broadcast %cst_13 : f32 to vector<2x13x16xf32>
    %26 = tpu.concatenate %24, %25 in 1 : vector<2x99x16xf32>, vector<2x13x16xf32> -> vector<2x112x16xf32>
    %27 = vector.shape_cast %26 : vector<2x112x16xf32> to vector<224x16xf32>
    %c0_14 = arith.constant 0 : index
    %c0_15 = arith.constant 0 : index
    %28 = vector.load %arg21[%c0_14, %c0_15] : memref<224x16xf32, #tpu.memory_space<vmem>>, vector<224x16xf32>
    tpu.vector_store %arg21[%c0_14, %c0_15], %27 {strides = array<i32>} : memref<224x16xf32, #tpu.memory_space<vmem>>, vector<224x16xf32>,
    %c0_16 = arith.constant 0 : index
    %c0_17 = arith.constant 0 : index
    %29 = tpu.strided_load %arg21[%c0_16, %c0_17] {strides = array<i32: 2, 1>} : memref<224x16xf32, #tpu.memory_space<vmem>>, vector<112x16xf32>
    %30 = vector.shape_cast %29 : vector<112x16xf32> to vector<2x56x16xf32>
    %c1_18 = arith.constant 1 : index
    %c0_19 = arith.constant 0 : index
    %31 = tpu.strided_load %arg21[%c1_18, %c0_19] {strides = array<i32: 2, 1>} : memref<224x16xf32, #tpu.memory_space<vmem>>, vector<112x16xf32>
    %32 = vector.shape_cast %31 : vector<112x16xf32> to vector<2x56x16xf32>
    %33 = vector.extract_strided_slice %30 {offsets = [0, 0, 0], sizes = [2, 48, 16], strides = [1, 1, 1]} : vector<2x56x16xf32> to vector<2x48x16xf32>
    %34 = vector.extract_strided_slice %32 {offsets = [0, 0, 0], sizes = [2, 48, 16], strides = [1, 1, 1]} : vector<2x56x16xf32> to vector<2x48x16xf32>
    %35 = vector.extract_strided_slice %30 {offsets = [0, 1, 0], sizes = [2, 48, 16], strides = [1, 1, 1]} : vector<2x56x16xf32> to vector<2x48x16xf32>
    %36 = vector.extract_strided_slice %32 {offsets = [0, 1, 0], sizes = [2, 48, 16], strides = [1, 1, 1]} : vector<2x56x16xf32> to vector<2x48x16xf32>
    %37 = vector.extract_strided_slice %30 {offsets = [0, 2, 0], sizes = [2, 48, 16], strides = [1, 1, 1]} : vector<2x56x16xf32> to vector<2x48x16xf32>
    %38 = tpu.concatenate %33, %34, %35, %36, %37 in 2 : vector<2x48x16xf32>, vector<2x48x16xf32>, vector<2x48x16xf32>, vector<2x48x16xf32>, vector<2x48x16xf32> -> vector<2x48x80xf32>
    %39 = arith.truncf %38 : vector<2x48x80xf32> to vector<2x48x80xbf16>
    %40 = vector.shape_cast %39 : vector<2x48x80xbf16> to vector<96x80xbf16>
    %c0_20 = arith.constant 0 : index
    %c0_21 = arith.constant 0 : index
    %41 = vector.load %arg5[%c0_20, %c0_21] : memref<80x32xbf16, #tpu.memory_space<vmem>>, vector<80x32xbf16>
    %cst_22 = arith.constant dense<0.000000e+00> : vector<96x32xf32>
    %42 = tpu.matmul %40, %41, %cst_22 {dimension_numbers = #tpu.dot_dimension_numbers<[1], [0], [0], [1], [0, 0, 1, 1], [], []>} : vector<96x80xbf16>, vector<80x32xbf16>, vector<96x32xf32> -> vector<96x32xf32>
    %c0_23 = arith.constant 0 : index
    %c0_24 = arith.constant 0 : index
    %43 = vector.load %arg6[%c0_23, %c0_24] : memref<1x32xf32, #tpu.memory_space<vmem>>, vector<1x32xf32>
    %44 = vector.broadcast %43 : vector<1x32xf32> to vector<96x32xf32>
    %45 = arith.mulf %42, %44 : vector<96x32xf32>
    %c0_25 = arith.constant 0 : index
    %c0_26 = arith.constant 0 : index
    %46 = vector.load %arg7[%c0_25, %c0_26] : memref<1x32xf32, #tpu.memory_space<vmem>>, vector<1x32xf32>
    %47 = vector.broadcast %46 : vector<1x32xf32> to vector<96x32xf32>
    %48 = arith.addf %45, %47 : vector<96x32xf32>
    %cst_27 = arith.constant 0.000000e+00 : f32
    %49 = vector.broadcast %cst_27 : f32 to vector<96x32xf32>
    %50 = arith.maximumf %48, %49 : vector<96x32xf32>
    %c0_28 = arith.constant 0 : index
    %c0_29 = arith.constant 0 : index
    %51 = vector.load %arg22[%c0_28, %c0_29] : memref<96x32xf32, #tpu.memory_space<vmem>>, vector<96x32xf32>
    tpu.vector_store %arg22[%c0_28, %c0_29], %50 {strides = array<i32>} : memref<96x32xf32, #tpu.memory_space<vmem>>, vector<96x32xf32>,
    %c0_30 = arith.constant 0 : index
    %c0_31 = arith.constant 0 : index
    %52 = tpu.strided_load %arg22[%c0_30, %c0_31] {strides = array<i32: 2, 1>} : memref<96x32xf32, #tpu.memory_space<vmem>>, vector<48x32xf32>
    %53 = vector.shape_cast %52 : vector<48x32xf32> to vector<2x24x32xf32>
    %c1_32 = arith.constant 1 : index
    %c0_33 = arith.constant 0 : index
    %54 = tpu.strided_load %arg22[%c1_32, %c0_33] {strides = array<i32: 2, 1>} : memref<96x32xf32, #tpu.memory_space<vmem>>, vector<48x32xf32>
    %55 = vector.shape_cast %54 : vector<48x32xf32> to vector<2x24x32xf32>
    %56 = vector.extract_strided_slice %53 {offsets = [0, 0, 0], sizes = [2, 23, 32], strides = [1, 1, 1]} : vector<2x24x32xf32> to vector<2x23x32xf32>
    %57 = vector.extract_strided_slice %55 {offsets = [0, 0, 0], sizes = [2, 23, 32], strides = [1, 1, 1]} : vector<2x24x32xf32> to vector<2x23x32xf32>
    %58 = arith.maximumf %56, %57 : vector<2x23x32xf32>
    %59 = vector.extract_strided_slice %53 {offsets = [0, 1, 0], sizes = [2, 23, 32], strides = [1, 1, 1]} : vector<2x24x32xf32> to vector<2x23x32xf32>
    %60 = arith.maximumf %58, %59 : vector<2x23x32xf32>
    %cst_34 = arith.constant 0.000000e+00 : f32
    %61 = vector.broadcast %cst_34 : f32 to vector<2x13x32xf32>
    %62 = tpu.concatenate %60, %61 in 1 : vector<2x23x32xf32>, vector<2x13x32xf32> -> vector<2x36x32xf32>
    %63 = vector.extract_strided_slice %62 {offsets = [0, 0, 0], sizes = [2, 32, 32], strides = [1, 1, 1]} : vector<2x36x32xf32> to vector<2x32x32xf32>
    %64 = vector.extract_strided_slice %62 {offsets = [0, 1, 0], sizes = [2, 32, 32], strides = [1, 1, 1]} : vector<2x36x32xf32> to vector<2x32x32xf32>
    %65 = vector.extract_strided_slice %62 {offsets = [0, 2, 0], sizes = [2, 32, 32], strides = [1, 1, 1]} : vector<2x36x32xf32> to vector<2x32x32xf32>
    %66 = vector.extract_strided_slice %62 {offsets = [0, 3, 0], sizes = [2, 32, 32], strides = [1, 1, 1]} : vector<2x36x32xf32> to vector<2x32x32xf32>
    %67 = vector.extract_strided_slice %62 {offsets = [0, 4, 0], sizes = [2, 32, 32], strides = [1, 1, 1]} : vector<2x36x32xf32> to vector<2x32x32xf32>
    %68 = tpu.concatenate %63, %64, %65, %66, %67 in 2 : vector<2x32x32xf32>, vector<2x32x32xf32>, vector<2x32x32xf32>, vector<2x32x32xf32>, vector<2x32x32xf32> -> vector<2x32x160xf32>
    %69 = arith.truncf %68 : vector<2x32x160xf32> to vector<2x32x160xbf16>
    %70 = vector.shape_cast %69 : vector<2x32x160xbf16> to vector<64x160xbf16>
    %c0_35 = arith.constant 0 : index
    %c0_36 = arith.constant 0 : index
    %71 = vector.load %arg8[%c0_35, %c0_36] : memref<160x64xbf16, #tpu.memory_space<vmem>>, vector<160x64xbf16>
    %cst_37 = arith.constant dense<0.000000e+00> : vector<64x64xf32>
    %72 = tpu.matmul %70, %71, %cst_37 {dimension_numbers = #tpu.dot_dimension_numbers<[1], [0], [0], [1], [0, 0, 1, 1], [], []>} : vector<64x160xbf16>, vector<160x64xbf16>, vector<64x64xf32> -> vector<64x64xf32>
    %c0_38 = arith.constant 0 : index
    %c0_39 = arith.constant 0 : index
    %73 = vector.load %arg9[%c0_38, %c0_39] : memref<1x64xf32, #tpu.memory_space<vmem>>, vector<1x64xf32>
    %74 = vector.broadcast %73 : vector<1x64xf32> to vector<64x64xf32>
    %75 = arith.mulf %72, %74 : vector<64x64xf32>
    %c0_40 = arith.constant 0 : index
    %c0_41 = arith.constant 0 : index
    %76 = vector.load %arg10[%c0_40, %c0_41] : memref<1x64xf32, #tpu.memory_space<vmem>>, vector<1x64xf32>
    %77 = vector.broadcast %76 : vector<1x64xf32> to vector<64x64xf32>
    %78 = arith.addf %75, %77 : vector<64x64xf32>
    %cst_42 = arith.constant 0.000000e+00 : f32
    %79 = vector.broadcast %cst_42 : f32 to vector<64x64xf32>
    %80 = arith.maximumf %78, %79 : vector<64x64xf32>
    %c0_43 = arith.constant 0 : index
    %c0_44 = arith.constant 0 : index
    %81 = vector.load %arg23[%c0_43, %c0_44] : memref<64x64xf32, #tpu.memory_space<vmem>>, vector<64x64xf32>
    tpu.vector_store %arg23[%c0_43, %c0_44], %80 {strides = array<i32>} : memref<64x64xf32, #tpu.memory_space<vmem>>, vector<64x64xf32>,
    %c0_45 = arith.constant 0 : index
    %c0_46 = arith.constant 0 : index
    %82 = tpu.strided_load %arg23[%c0_45, %c0_46] {strides = array<i32: 2, 1>} : memref<64x64xf32, #tpu.memory_space<vmem>>, vector<32x64xf32>
    %83 = vector.shape_cast %82 : vector<32x64xf32> to vector<2x16x64xf32>
    %c1_47 = arith.constant 1 : index
    %c0_48 = arith.constant 0 : index
    %84 = tpu.strided_load %arg23[%c1_47, %c0_48] {strides = array<i32: 2, 1>} : memref<64x64xf32, #tpu.memory_space<vmem>>, vector<32x64xf32>
    %85 = vector.shape_cast %84 : vector<32x64xf32> to vector<2x16x64xf32>
    %86 = vector.extract_strided_slice %83 {offsets = [0, 0, 0], sizes = [2, 9, 64], strides = [1, 1, 1]} : vector<2x16x64xf32> to vector<2x9x64xf32>
    %87 = vector.extract_strided_slice %85 {offsets = [0, 0, 0], sizes = [2, 9, 64], strides = [1, 1, 1]} : vector<2x16x64xf32> to vector<2x9x64xf32>
    %88 = arith.maximumf %86, %87 : vector<2x9x64xf32>
    %89 = vector.extract_strided_slice %83 {offsets = [0, 1, 0], sizes = [2, 9, 64], strides = [1, 1, 1]} : vector<2x16x64xf32> to vector<2x9x64xf32>
    %90 = arith.maximumf %88, %89 : vector<2x9x64xf32>
    %cst_49 = arith.constant 0.000000e+00 : f32
    %91 = vector.broadcast %cst_49 : f32 to vector<2x9x64xf32>
    %92 = tpu.concatenate %90, %91 in 1 : vector<2x9x64xf32>, vector<2x9x64xf32> -> vector<2x18x64xf32>
    %93 = vector.extract_strided_slice %92 {offsets = [0, 0, 0], sizes = [2, 16, 64], strides = [1, 1, 1]} : vector<2x18x64xf32> to vector<2x16x64xf32>
    %94 = vector.extract_strided_slice %92 {offsets = [0, 1, 0], sizes = [2, 16, 64], strides = [1, 1, 1]} : vector<2x18x64xf32> to vector<2x16x64xf32>
    %95 = vector.extract_strided_slice %92 {offsets = [0, 2, 0], sizes = [2, 16, 64], strides = [1, 1, 1]} : vector<2x18x64xf32> to vector<2x16x64xf32>
    %96 = tpu.concatenate %93, %94, %95 in 2 : vector<2x16x64xf32>, vector<2x16x64xf32>, vector<2x16x64xf32> -> vector<2x16x192xf32>
    %97 = arith.truncf %96 : vector<2x16x192xf32> to vector<2x16x192xbf16>
    %98 = vector.shape_cast %97 : vector<2x16x192xbf16> to vector<32x192xbf16>
    %c0_50 = arith.constant 0 : index
    %c0_51 = arith.constant 0 : index
    %99 = vector.load %arg11[%c0_50, %c0_51] : memref<192x96xbf16, #tpu.memory_space<vmem>>, vector<192x96xbf16>
    %cst_52 = arith.constant dense<0.000000e+00> : vector<32x96xf32>
    %100 = tpu.matmul %98, %99, %cst_52 {dimension_numbers = #tpu.dot_dimension_numbers<[1], [0], [0], [1], [0, 0, 1, 1], [], []>} : vector<32x192xbf16>, vector<192x96xbf16>, vector<32x96xf32> -> vector<32x96xf32>
    %c0_53 = arith.constant 0 : index
    %c0_54 = arith.constant 0 : index
    %101 = vector.load %arg12[%c0_53, %c0_54] : memref<1x96xf32, #tpu.memory_space<vmem>>, vector<1x96xf32>
    %102 = vector.broadcast %101 : vector<1x96xf32> to vector<32x96xf32>
    %103 = arith.mulf %100, %102 : vector<32x96xf32>
    %c0_55 = arith.constant 0 : index
    %c0_56 = arith.constant 0 : index
    %104 = vector.load %arg13[%c0_55, %c0_56] : memref<1x96xf32, #tpu.memory_space<vmem>>, vector<1x96xf32>
    %105 = vector.broadcast %104 : vector<1x96xf32> to vector<32x96xf32>
    %106 = arith.addf %103, %105 : vector<32x96xf32>
    %cst_57 = arith.constant 0.000000e+00 : f32
    %107 = vector.broadcast %cst_57 : f32 to vector<32x96xf32>
    %108 = arith.maximumf %106, %107 : vector<32x96xf32>
    %c0_58 = arith.constant 0 : index
    %c0_59 = arith.constant 0 : index
    %109 = vector.load %arg24[%c0_58, %c0_59] : memref<32x96xf32, #tpu.memory_space<vmem>>, vector<32x96xf32>
    tpu.vector_store %arg24[%c0_58, %c0_59], %108 {strides = array<i32>} : memref<32x96xf32, #tpu.memory_space<vmem>>, vector<32x96xf32>,
    %c0_60 = arith.constant 0 : index
    %c0_61 = arith.constant 0 : index
    %110 = tpu.strided_load %arg24[%c0_60, %c0_61] {strides = array<i32: 2, 1>} : memref<32x96xf32, #tpu.memory_space<vmem>>, vector<16x96xf32>
    %111 = vector.shape_cast %110 : vector<16x96xf32> to vector<2x8x96xf32>
    %c1_62 = arith.constant 1 : index
    %c0_63 = arith.constant 0 : index
    %112 = tpu.strided_load %arg24[%c1_62, %c0_63] {strides = array<i32: 2, 1>} : memref<32x96xf32, #tpu.memory_space<vmem>>, vector<16x96xf32>
    %113 = vector.shape_cast %112 : vector<16x96xf32> to vector<2x8x96xf32>
    %114 = vector.extract_strided_slice %111 {offsets = [0, 0, 0], sizes = [2, 3, 96], strides = [1, 1, 1]} : vector<2x8x96xf32> to vector<2x3x96xf32>
    %115 = vector.extract_strided_slice %113 {offsets = [0, 0, 0], sizes = [2, 3, 96], strides = [1, 1, 1]} : vector<2x8x96xf32> to vector<2x3x96xf32>
    %116 = arith.maximumf %114, %115 : vector<2x3x96xf32>
    %117 = vector.extract_strided_slice %111 {offsets = [0, 1, 0], sizes = [2, 3, 96], strides = [1, 1, 1]} : vector<2x8x96xf32> to vector<2x3x96xf32>
    %118 = arith.maximumf %116, %117 : vector<2x3x96xf32>
    %cst_64 = arith.constant 0.000000e+00 : f32
    %119 = vector.broadcast %cst_64 : f32 to vector<2x7x96xf32>
    %120 = tpu.concatenate %118, %119 in 1 : vector<2x3x96xf32>, vector<2x7x96xf32> -> vector<2x10x96xf32>
    %121 = vector.extract_strided_slice %120 {offsets = [0, 0, 0], sizes = [2, 8, 96], strides = [1, 1, 1]} : vector<2x10x96xf32> to vector<2x8x96xf32>
    %122 = vector.extract_strided_slice %120 {offsets = [0, 1, 0], sizes = [2, 8, 96], strides = [1, 1, 1]} : vector<2x10x96xf32> to vector<2x8x96xf32>
    %123 = vector.extract_strided_slice %120 {offsets = [0, 2, 0], sizes = [2, 8, 96], strides = [1, 1, 1]} : vector<2x10x96xf32> to vector<2x8x96xf32>
    %124 = tpu.concatenate %121, %122, %123 in 2 : vector<2x8x96xf32>, vector<2x8x96xf32>, vector<2x8x96xf32> -> vector<2x8x288xf32>
    %125 = arith.truncf %124 : vector<2x8x288xf32> to vector<2x8x288xbf16>
    %126 = vector.shape_cast %125 : vector<2x8x288xbf16> to vector<16x288xbf16>
    %c0_65 = arith.constant 0 : index
    %c0_66 = arith.constant 0 : index
    %127 = vector.load %arg14[%c0_65, %c0_66] : memref<288x96xbf16, #tpu.memory_space<vmem>>, vector<288x96xbf16>
    %cst_67 = arith.constant dense<0.000000e+00> : vector<16x96xf32>
    %128 = tpu.matmul %126, %127, %cst_67 {dimension_numbers = #tpu.dot_dimension_numbers<[1], [0], [0], [1], [0, 0, 1, 1], [], []>} : vector<16x288xbf16>, vector<288x96xbf16>, vector<16x96xf32> -> vector<16x96xf32>
    %c0_68 = arith.constant 0 : index
    %c0_69 = arith.constant 0 : index
    %129 = vector.load %arg15[%c0_68, %c0_69] : memref<1x96xf32, #tpu.memory_space<vmem>>, vector<1x96xf32>
    %130 = vector.broadcast %129 : vector<1x96xf32> to vector<16x96xf32>
    %131 = arith.mulf %128, %130 : vector<16x96xf32>
    %c0_70 = arith.constant 0 : index
    %c0_71 = arith.constant 0 : index
    %132 = vector.load %arg16[%c0_70, %c0_71] : memref<1x96xf32, #tpu.memory_space<vmem>>, vector<1x96xf32>
    %133 = vector.broadcast %132 : vector<1x96xf32> to vector<16x96xf32>
    %134 = arith.addf %131, %133 : vector<16x96xf32>
    %cst_72 = arith.constant 0.000000e+00 : f32
    %135 = vector.broadcast %cst_72 : f32 to vector<16x96xf32>
    %136 = arith.maximumf %134, %135 : vector<16x96xf32>
    %137 = vector.shape_cast %136 : vector<16x96xf32> to vector<2x8x96xf32>
    %138 = vector.extract_strided_slice %137 {offsets = [0, 0, 0], sizes = [2, 1, 96], strides = [1, 1, 1]} : vector<2x8x96xf32> to vector<2x1x96xf32>
    %cst_73 = arith.constant dense<0.000000e+00> : vector<2x96xf32>
    %139 = vector.multi_reduction <add>, %138, %cst_73 [1] : vector<2x1x96xf32> to vector<2x96xf32>
    %cst_74 = arith.constant 1.000000e+00 : f32
    %140 = vector.broadcast %cst_74 : f32 to vector<2x96xf32>
    %141 = arith.divf %139, %140 : vector<2x96xf32>
    %c0_75 = arith.constant 0 : index
    %c0_76 = arith.constant 0 : index
    %142 = vector.load %arg17[%c0_75, %c0_76] : memref<96x4xf32, #tpu.memory_space<vmem>>, vector<96x4xf32>
    %cst_77 = arith.constant dense<0.000000e+00> : vector<2x4xf32>
    %143 = tpu.matmul %141, %142, %cst_77 {dimension_numbers = #tpu.dot_dimension_numbers<[1], [0], [0], [1], [0, 0, 1, 1], [], []>} : vector<2x96xf32>, vector<96x4xf32>, vector<2x4xf32> -> vector<2x4xf32>
    %c0_78 = arith.constant 0 : index
    %c0_79 = arith.constant 0 : index
    %144 = vector.load %arg18[%c0_78, %c0_79] : memref<1x4xf32, #tpu.memory_space<vmem>>, vector<1x4xf32>
    %145 = vector.broadcast %144 : vector<1x4xf32> to vector<2x4xf32>
    %146 = arith.addf %143, %145 : vector<2x4xf32>
    %c0_80 = arith.constant 0 : index
    %c0_81 = arith.constant 0 : index
    %147 = vector.load %arg19[%c0_80, %c0_81] : memref<2x4xf32, #tpu.memory_space<vmem>>, vector<2x4xf32>
    tpu.vector_store %arg19[%c0_80, %c0_81], %146 {strides = array<i32>} : memref<2x4xf32, #tpu.memory_space<vmem>>, vector<2x4xf32>,
    return
  }
  func.func @transform_0(%arg0: i32) -> (i32, i32) {
    %c0_i32 = arith.constant 0 : i32
    %c0_i32_0 = arith.constant 0 : i32
    return %arg0, %c0_i32 : i32, i32
  }
  func.func @transform_1(%arg0: i32) -> (i32, i32) {
    %c0_i32 = arith.constant 0 : i32
    %c0_i32_0 = arith.constant 0 : i32
    %c0_i32_1 = arith.constant 0 : i32
    return %c0_i32, %c0_i32_0 : i32, i32
  }
  func.func @transform_2(%arg0: i32) -> (i32, i32) {
    %c0_i32 = arith.constant 0 : i32
    %c0_i32_0 = arith.constant 0 : i32
    %c0_i32_1 = arith.constant 0 : i32
    return %c0_i32, %c0_i32_0 : i32, i32
  }
  func.func @transform_3(%arg0: i32) -> (i32, i32) {
    %c0_i32 = arith.constant 0 : i32
    %c0_i32_0 = arith.constant 0 : i32
    %c0_i32_1 = arith.constant 0 : i32
    return %c0_i32, %c0_i32_0 : i32, i32
  }
  func.func @transform_4(%arg0: i32) -> (i32, i32) {
    %c0_i32 = arith.constant 0 : i32
    %c0_i32_0 = arith.constant 0 : i32
    %c0_i32_1 = arith.constant 0 : i32
    return %c0_i32, %c0_i32_0 : i32, i32
  }
  func.func @transform_5(%arg0: i32) -> (i32, i32) {
    %c0_i32 = arith.constant 0 : i32
    %c0_i32_0 = arith.constant 0 : i32
    %c0_i32_1 = arith.constant 0 : i32
    return %c0_i32, %c0_i32_0 : i32, i32
  }
  func.func @transform_6(%arg0: i32) -> (i32, i32) {
    %c0_i32 = arith.constant 0 : i32
    %c0_i32_0 = arith.constant 0 : i32
    %c0_i32_1 = arith.constant 0 : i32
    return %c0_i32, %c0_i32_0 : i32, i32
  }
  func.func @transform_7(%arg0: i32) -> (i32, i32) {
    %c0_i32 = arith.constant 0 : i32
    %c0_i32_0 = arith.constant 0 : i32
    %c0_i32_1 = arith.constant 0 : i32
    return %c0_i32, %c0_i32_0 : i32, i32
  }
  func.func @transform_8(%arg0: i32) -> (i32, i32) {
    %c0_i32 = arith.constant 0 : i32
    %c0_i32_0 = arith.constant 0 : i32
    %c0_i32_1 = arith.constant 0 : i32
    return %c0_i32, %c0_i32_0 : i32, i32
  }
  func.func @transform_9(%arg0: i32) -> (i32, i32) {
    %c0_i32 = arith.constant 0 : i32
    %c0_i32_0 = arith.constant 0 : i32
    %c0_i32_1 = arith.constant 0 : i32
    return %c0_i32, %c0_i32_0 : i32, i32
  }
  func.func @transform_10(%arg0: i32) -> (i32, i32) {
    %c0_i32 = arith.constant 0 : i32
    %c0_i32_0 = arith.constant 0 : i32
    %c0_i32_1 = arith.constant 0 : i32
    return %c0_i32, %c0_i32_0 : i32, i32
  }
  func.func @transform_11(%arg0: i32) -> (i32, i32) {
    %c0_i32 = arith.constant 0 : i32
    %c0_i32_0 = arith.constant 0 : i32
    %c0_i32_1 = arith.constant 0 : i32
    return %c0_i32, %c0_i32_0 : i32, i32
  }
  func.func @transform_12(%arg0: i32) -> (i32, i32) {
    %c0_i32 = arith.constant 0 : i32
    %c0_i32_0 = arith.constant 0 : i32
    %c0_i32_1 = arith.constant 0 : i32
    return %c0_i32, %c0_i32_0 : i32, i32
  }
  func.func @transform_13(%arg0: i32) -> (i32, i32) {
    %c0_i32 = arith.constant 0 : i32
    %c0_i32_0 = arith.constant 0 : i32
    %c0_i32_1 = arith.constant 0 : i32
    return %c0_i32, %c0_i32_0 : i32, i32
  }
  func.func @transform_14(%arg0: i32) -> (i32, i32) {
    %c0_i32 = arith.constant 0 : i32
    %c0_i32_0 = arith.constant 0 : i32
    %c0_i32_1 = arith.constant 0 : i32
    return %c0_i32, %c0_i32_0 : i32, i32
  }
  func.func @transform_15(%arg0: i32) -> (i32, i32) {
    %c0_i32 = arith.constant 0 : i32
    %c0_i32_0 = arith.constant 0 : i32
    %c0_i32_1 = arith.constant 0 : i32
    return %c0_i32, %c0_i32_0 : i32, i32
  }
  func.func @transform_16(%arg0: i32) -> (i32, i32) {
    %c0_i32 = arith.constant 0 : i32
    %c0_i32_0 = arith.constant 0 : i32
    %c0_i32_1 = arith.constant 0 : i32
    return %c0_i32, %c0_i32_0 : i32, i32
  }
  func.func @transform_17(%arg0: i32) -> (i32, i32) {
    %c0_i32 = arith.constant 0 : i32
    %c0_i32_0 = arith.constant 0 : i32
    %c0_i32_1 = arith.constant 0 : i32
    return %c0_i32, %c0_i32_0 : i32, i32
  }
  func.func @transform_18(%arg0: i32) -> (i32, i32) {
    %c0_i32 = arith.constant 0 : i32
    %c0_i32_0 = arith.constant 0 : i32
    return %arg0, %c0_i32 : i32, i32
  }
}

</mosaic_0001>

<llo_original>
// kernel: _net_phy_forward.1
$region0: #{_net_phy_forward.1}
  #allocation0 [shape = 'u32[]', space=smem, size = 0x4, offset = 0x4, fixed_abs, tag = 'smem constant byte address 0x4 - core index']
  #allocation1 [shape = 'u32[144,128]{1,0:T(1,128)}', space=vmem, size = 0x12000, scoped, tag = 'internal scratch']
  #allocation2 [shape = 'f32[416,16]{1,0:T(8,128)}', space=vmem, size = 0x34000, scoped, tag = 'scratch operand']
  #allocation3 [shape = 'f32[224,16]{1,0:T(8,128)}', space=vmem, size = 0x1c000, scoped, tag = 'scratch operand']
  #allocation4 [shape = 'f32[96,32]{1,0:T(8,128)}', space=vmem, size = 0xc000, scoped, tag = 'scratch operand']
  #allocation5 [shape = 'f32[64,64]{1,0:T(8,128)}', space=vmem, size = 0x8000, scoped, tag = 'scratch operand']
  #allocation6 [shape = 'f32[32,96]{1,0:T(8,128)}', space=vmem, size = 0x4000, scoped, tag = 'scratch operand']
  %s0 = inlined_call_operand.vmem [shape: bf16[416,5], index: 0, kind: input, shape index: {}]
  %s1 = inlined_call_operand.vmem [shape: bf16[5,16], index: 1, kind: input, shape index: {}]
  %s2 = inlined_call_operand.vmem [shape: f32[1,16], index: 2, kind: input, shape index: {}]
  %s3 = inlined_call_operand.vmem [shape: f32[1,16], index: 3, kind: input, shape index: {}]
  %s4 = inlined_call_operand.vmem [shape: bf16[80,32], index: 4, kind: input, shape index: {}]
  %s5 = inlined_call_operand.vmem [shape: f32[1,32], index: 5, kind: input, shape index: {}]
  %s6 = inlined_call_operand.vmem [shape: f32[1,32], index: 6, kind: input, shape index: {}]
  %s7 = inlined_call_operand.vmem [shape: bf16[160,64], index: 7, kind: input, shape index: {}]
  %s8 = inlined_call_operand.vmem [shape: f32[1,64], index: 8, kind: input, shape index: {}]
  %s9 = inlined_call_operand.vmem [shape: f32[1,64], index: 9, kind: input, shape index: {}]
  %s10 = inlined_call_operand.vmem [shape: bf16[192,96], index: 10, kind: input, shape index: {}]
  %s11 = inlined_call_operand.vmem [shape: f32[1,96], index: 11, kind: input, shape index: {}]
  %s12 = inlined_call_operand.vmem [shape: f32[1,96], index: 12, kind: input, shape index: {}]
  %s13 = inlined_call_operand.vmem [shape: bf16[288,96], index: 13, kind: input, shape index: {}]
  %s14 = inlined_call_operand.vmem [shape: f32[1,96], index: 14, kind: input, shape index: {}]
  %s15 = inlined_call_operand.vmem [shape: f32[1,96], index: 15, kind: input, shape index: {}]
  %s16 = inlined_call_operand.vmem [shape: f32[96,4], index: 16, kind: input, shape index: {}]
  %s17 = inlined_call_operand.vmem [shape: f32[1,4], index: 17, kind: input, shape index: {}]
  %s18 = inlined_call_operand.hbm [shape: f32[2,4], index: 18, kind: output, shape index: {}]
  %s19 = sld [smem:[#allocation0]]
  $region82: #{_net_phy_forward.1} parent=0
    _
  %s21 = ssub.s32 1, %s19
  %s22 = scalar_select 0, %s21, %s19
  $region1: #{_net_phy_forward.1} parent=0
    #allocation7 [shape = 'u8[1024]{0}', space=vmem, size = 0x400, scoped, tag = 'output window, operand 0, single buffered']
    #allocation8 [shape = 's32[1]{0}', space=sflag, size = 0x4, scoped, tag = 'scoped memory for _net_phy_forward.1']
    %23 = vsyncpa [#allocation8], 0
    // Predicated region
    $region2: #{_net_phy_forward.1} parent=1 // pred_check
      _
    $region3: #{_net_phy_forward.1} parent=1 // pred_check_branch
      %25 = sbr.rel (0) target = $region5
    $region4: #{_net_phy_forward.1} parent=1 // pred_region
      _
    $region5: #{_net_phy_forward.1} parent=1 // pred_fallthru
      _
    // Predicated region
    $region6: #{_net_phy_forward.1} parent=1 // pred_check
      _
    $region7: #{_net_phy_forward.1} parent=1 // pred_check_branch
      %27 = sbr.rel (0) target = $region9
    $region8: #{_net_phy_forward.1} parent=1 // pred_region
      _
    $region9: #{_net_phy_forward.1} parent=1 // pred_fallthru
      _
    // Predicated region
    $region10: #{_net_phy_forward.1} parent=1 // pred_check
      _
    $region11: #{_net_phy_forward.1} parent=1 // pred_check_branch
      %29 = sbr.rel (0) target = $region13
    $region12: #{_net_phy_forward.1} parent=1 // pred_region
      _
    $region13: #{_net_phy_forward.1} parent=1 // pred_fallthru
      _
    // Predicated region
    $region14: #{_net_phy_forward.1} parent=1 // pred_check
      _
    $region15: #{_net_phy_forward.1} parent=1 // pred_check_branch
      %31 = sbr.rel (0) target = $region17
    $region16: #{_net_phy_forward.1} parent=1 // pred_region
      _
    $region17: #{_net_phy_forward.1} parent=1 // pred_fallthru
      _
    // Predicated region
    $region18: #{_net_phy_forward.1} parent=1 // pred_check
      _
    $region19: #{_net_phy_forward.1} parent=1 // pred_check_branch
      %33 = sbr.rel (0) target = $region21
    $region20: #{_net_phy_forward.1} parent=1 // pred_region
      _
    $region21: #{_net_phy_forward.1} parent=1 // pred_fallthru
      _
    // Predicated region
    $region22: #{_net_phy_forward.1} parent=1 // pred_check
      _
    $region23: #{_net_phy_forward.1} parent=1 // pred_check_branch
      %35 = sbr.rel (0) target = $region25
    $region24: #{_net_phy_forward.1} parent=1 // pred_region
      _
    $region25: #{_net_phy_forward.1} parent=1 // pred_fallthru
      _
    // Predicated region
    $region26: #{_net_phy_forward.1} parent=1 // pred_check
      _
    $region27: #{_net_phy_forward.1} parent=1 // pred_check_branch
      %37 = sbr.rel (0) target = $region29
    $region28: #{_net_phy_forward.1} parent=1 // pred_region
      _
    $region29: #{_net_phy_forward.1} parent=1 // pred_fallthru
      _
    // Predicated region
    $region30: #{_net_phy_forward.1} parent=1 // pred_check
      _
    $region31: #{_net_phy_forward.1} parent=1 // pred_check_branch
      %39 = sbr.rel (0) target = $region33
    $region32: #{_net_phy_forward.1} parent=1 // pred_region
      _
    $region33: #{_net_phy_forward.1} parent=1 // pred_fallthru
      _
    // Predicated region
    $region34: #{_net_phy_forward.1} parent=1 // pred_check
      _
    $region35: #{_net_phy_forward.1} parent=1 // pred_check_branch
      %41 = sbr.rel (0) target = $region37
    $region36: #{_net_phy_forward.1} parent=1 // pred_region
      _
    $region37: #{_net_phy_forward.1} parent=1 // pred_fallthru
      _
    // Predicated region
    $region38: #{_net_phy_forward.1} parent=1 // pred_check
      _
    $region39: #{_net_phy_forward.1} parent=1 // pred_check_branch
      %43 = sbr.rel (0) target = $region41
    $region40: #{_net_phy_forward.1} parent=1 // pred_region
      _
    $region41: #{_net_phy_forward.1} parent=1 // pred_fallthru
      _
    // Predicated region
    $region42: #{_net_phy_forward.1} parent=1 // pred_check
      _
    $region43: #{_net_phy_forward.1} parent=1 // pred_check_branch
      %45 = sbr.rel (0) target = $region45
    $region44: #{_net_phy_forward.1} parent=1 // pred_region
      _
    $region45: #{_net_phy_forward.1} parent=1 // pred_fallthru
      _
    // Predicated region
    $region46: #{_net_phy_forward.1} parent=1 // pred_check
      _
    $region47: #{_net_phy_forward.1} parent=1 // pred_check_branch
      %47 = sbr.rel (0) target = $region49
    $region48: #{_net_phy_forward.1} parent=1 // pred_region
      _
    $region49: #{_net_phy_forward.1} parent=1 // pred_fallthru
      _
    // Predicated region
    $region50: #{_net_phy_forward.1} parent=1 // pred_check
      _
    $region51: #{_net_phy_forward.1} parent=1 // pred_check_branch
      %49 = sbr.rel (0) target = $region53
    $region52: #{_net_phy_forward.1} parent=1 // pred_region
      _
    $region53: #{_net_phy_forward.1} parent=1 // pred_fallthru
      _
    // Predicated region
    $region54: #{_net_phy_forward.1} parent=1 // pred_check
      _
    $region55: #{_net_phy_forward.1} parent=1 // pred_check_branch
      %51 = sbr.rel (0) target = $region57
    $region56: #{_net_phy_forward.1} parent=1 // pred_region
      _
    $region57: #{_net_phy_forward.1} parent=1 // pred_fallthru
      _
    // Predicated region
    $region58: #{_net_phy_forward.1} parent=1 // pred_check
      _
    $region59: #{_net_phy_forward.1} parent=1 // pred_check_branch
      %53 = sbr.rel (0) target = $region61
    $region60: #{_net_phy_forward.1} parent=1 // pred_region
      _
    $region61: #{_net_phy_forward.1} parent=1 // pred_fallthru
      _
    // Predicated region
    $region62: #{_net_phy_forward.1} parent=1 // pred_check
      _
    $region63: #{_net_phy_forward.1} parent=1 // pred_check_branch
      %55 = sbr.rel (0) target = $region65
    $region64: #{_net_phy_forward.1} parent=1 // pred_region
      _
    $region65: #{_net_phy_forward.1} parent=1 // pred_fallthru
      _
    // Predicated region
    $region66: #{_net_phy_forward.1} parent=1 // pred_check
      _
    $region67: #{_net_phy_forward.1} parent=1 // pred_check_branch
      %57 = sbr.rel (0) target = $region69
    $region68: #{_net_phy_forward.1} parent=1 // pred_region
      _
    $region69: #{_net_phy_forward.1} parent=1 // pred_fallthru
      _
    // Predicated region
    $region70: #{_net_phy_forward.1} parent=1 // pred_check
      _
    $region71: #{_net_phy_forward.1} parent=1 // pred_check_branch
      %59 = sbr.rel (0) target = $region73
    $region72: #{_net_phy_forward.1} parent=1 // pred_region
      _
    $region73: #{_net_phy_forward.1} parent=1 // pred_fallthru
      _
    %v61 = vld [vmem:[%s0] sm:$0xf]
    %v62 = vld [vmem:[%s0 + $0x4] sm:$0xf]
    %v63 = vld [vmem:[%s0 + $0x8] sm:$0xf]
    %v64 = vld [vmem:[%s0 + $0xc] sm:$0xf]
    %v65 = vld [vmem:[%s0 + $0x10] sm:$0xf]
    %v66 = vld [vmem:[%s0 + $0x14] sm:$0xf]
    %v67 = vld [vmem:[%s0 + $0x18] sm:$0xf]
    %v68 = vld [vmem:[%s0 + $0x1c] sm:$0xf]
    %v69 = vld [vmem:[%s0 + $0x20] sm:$0xf]
    %v70 = vld [vmem:[%s0 + $0x24] sm:$0xf]
    %v71 = vld [vmem:[%s0 + $0x28] sm:$0xf]
    %v72 = vld [vmem:[%s0 + $0x2c] sm:$0xf]
    %v73 = vld [vmem:[%s0 + $0x30] sm:$0xf]
    %v74 = vld [vmem:[%s0 + $0x34] sm:$0xf]
    %v75 = vld [vmem:[%s0 + $0x38] sm:$0xf]
    %v76 = vld [vmem:[%s0 + $0x3c] sm:$0xf]
    %v77 = vld [vmem:[%s0 + $0x40] sm:$0xf]
    %v78 = vld [vmem:[%s0 + $0x44] sm:$0xf]
    %v79 = vld [vmem:[%s0 + $0x48] sm:$0xf]
    %v80 = vld [vmem:[%s0 + $0x4c] sm:$0xf]
    %v81 = vld [vmem:[%s0 + $0x50] sm:$0xf]
    %v82 = vld [vmem:[%s0 + $0x54] sm:$0xf]
    %v83 = vld [vmem:[%s0 + $0x58] sm:$0xf]
    %v84 = vld [vmem:[%s0 + $0x5c] sm:$0xf]
    %v85 = vld [vmem:[%s0 + $0x60] sm:$0xf]
    %v86 = vld [vmem:[%s0 + $0x64] sm:$0xf]
    %v87 = vld [vmem:[%s0 + $0x68] sm:$0xf]
    %v88 = vld [vmem:[%s0 + $0x6c] sm:$0xf]
    %v89 = vld [vmem:[%s0 + $0x70] sm:$0xf]
    %v90 = vld [vmem:[%s0 + $0x74] sm:$0xf]
    %v91 = vld [vmem:[%s0 + $0x78] sm:$0xf]
    %v92 = vld [vmem:[%s0 + $0x7c] sm:$0xf]
    %v93 = vld [vmem:[%s0 + $0x80] sm:$0xf]
    %v94 = vld [vmem:[%s0 + $0x84] sm:$0xf]
    %v95 = vld [vmem:[%s0 + $0x88] sm:$0xf]
    %v96 = vld [vmem:[%s0 + $0x8c] sm:$0xf]
    %v97 = vld [vmem:[%s0 + $0x90] sm:$0xf]
    %v98 = vld [vmem:[%s0 + $0x94] sm:$0xf]
    %v99 = vld [vmem:[%s0 + $0x98] sm:$0xf]
    %v100 = vld [vmem:[%s0 + $0x9c] sm:$0xf]
    %v101 = vld [vmem:[%s0 + $0xa0] sm:$0xf]
    %v102 = vld [vmem:[%s0 + $0xa4] sm:$0xf]
    %v103 = vld [vmem:[%s0 + $0xa8] sm:$0xf]
    %v104 = vld [vmem:[%s0 + $0xac] sm:$0xf]
    %v105 = vld [vmem:[%s0 + $0xb0] sm:$0xf]
    %v106 = vld [vmem:[%s0 + $0xb4] sm:$0xf]
    %v107 = vld [vmem:[%s0 + $0xb8] sm:$0xf]
    %v108 = vld [vmem:[%s0 + $0xbc] sm:$0xf]
    %v109 = vld [vmem:[%s0 + $0xc0] sm:$0xf]
    %v110 = vld [vmem:[%s0 + $0xc4] sm:$0xf]
    %v111 = vld [vmem:[%s0 + $0xc8] sm:$0xf]
    %v112 = vld [vmem:[%s0 + $0xcc] sm:$0xf]
    %v113 = vld [vmem:[%s1] sm:$0x7]
    %v166 = vunpack.c.l.b16 %v61
    %v167 = vunpack.c.l.b16 %v62
    %v168 = vunpack.c.l.b16 %v63
    %v169 = vunpack.c.l.b16 %v64
    %v170 = vunpack.c.l.b16 %v65
    %v171 = vunpack.c.l.b16 %v66
    %v172 = vunpack.c.l.b16 %v67
    %v173 = vunpack.c.l.b16 %v68
    %v174 = vunpack.c.l.b16 %v69
    %v175 = vunpack.c.l.b16 %v70
    %v176 = vunpack.c.l.b16 %v71
    %v177 = vunpack.c.l.b16 %v72
    %v178 = vunpack.c.l.b16 %v73
    %v179 = vunpack.c.l.b16 %v74
    %v180 = vunpack.c.l.b16 %v75
    %v181 = vunpack.c.l.b16 %v76
    %v182 = vunpack.c.l.b16 %v77
    %v183 = vunpack.c.l.b16 %v78
    %v184 = vunpack.c.l.b16 %v79
    %v185 = vunpack.c.l.b16 %v80
    %v186 = vunpack.c.l.b16 %v81
    %v187 = vunpack.c.l.b16 %v82
    %v188 = vunpack.c.l.b16 %v83
    %v189 = vunpack.c.l.b16 %v84
    %v190 = vunpack.c.l.b16 %v85
    %v191 = vunpack.c.l.b16 %v86
    %v192 = vunpack.c.l.b16 %v87
    %v193 = vunpack.c.l.b16 %v88
    %v194 = vunpack.c.l.b16 %v89
    %v195 = vunpack.c.l.b16 %v90
    %v196 = vunpack.c.l.b16 %v91
    %v197 = vunpack.c.l.b16 %v92
    %v198 = vunpack.c.l.b16 %v93
    %v199 = vunpack.c.l.b16 %v94
    %v200 = vunpack.c.l.b16 %v95
    %v201 = vunpack.c.l.b16 %v96
    %v202 = vunpack.c.l.b16 %v97
    %v203 = vunpack.c.l.b16 %v98
    %v204 = vunpack.c.l.b16 %v99
    %v205 = vunpack.c.l.b16 %v100
    %v206 = vunpack.c.l.b16 %v101
    %v207 = vunpack.c.l.b16 %v102
    %v208 = vunpack.c.l.b16 %v103
    %v209 = vunpack.c.l.b16 %v104
    %v210 = vunpack.c.l.b16 %v105
    %v211 = vunpack.c.l.b16 %v106
    %v212 = vunpack.c.l.b16 %v107
    %v213 = vunpack.c.l.b16 %v108
    %v214 = vunpack.c.l.b16 %v109
    %v215 = vunpack.c.l.b16 %v110
    %v216 = vunpack.c.l.b16 %v111
    %v217 = vunpack.c.l.b16 %v112
    %v218 = vpack.c.b16 %v167, %v166
    %v219 = vpack.c.b16 %v169, %v168
    %v220 = vpack.c.b16 %v171, %v170
    %v221 = vpack.c.b16 %v173, %v172
    %v222 = vpack.c.b16 %v175, %v174
    %v223 = vpack.c.b16 %v177, %v176
    %v224 = vpack.c.b16 %v179, %v178
    %v225 = vpack.c.b16 %v181, %v180
    %v226 = vpack.c.b16 %v183, %v182
    %v227 = vpack.c.b16 %v185, %v184
    %v228 = vpack.c.b16 %v187, %v186
    %v229 = vpack.c.b16 %v189, %v188
    %v230 = vpack.c.b16 %v191, %v190
    %v231 = vpack.c.b16 %v193, %v192
    %v232 = vpack.c.b16 %v195, %v194
    %v233 = vpack.c.b16 %v197, %v196
    %v234 = vpack.c.b16 %v199, %v198
    %v235 = vpack.c.b16 %v201, %v200
    %v236 = vpack.c.b16 %v203, %v202
    %v237 = vpack.c.b16 %v205, %v204
    %v238 = vpack.c.b16 %v207, %v206
    %v239 = vpack.c.b16 %v209, %v208
    %v240 = vpack.c.b16 %v211, %v210
    %v241 = vpack.c.b16 %v213, %v212
    %v242 = vpack.c.b16 %v215, %v214
    %v243 = vpack.c.b16 %v217, %v216
    %vm244 = vcmask 39936
    %v246 = vsel %vm244, %v218, 0
    %v249 = vsel %vm244, %v219, 0
    %v252 = vsel %vm244, %v220, 0
    %v255 = vsel %vm244, %v221, 0
    %v258 = vsel %vm244, %v222, 0
    %v261 = vsel %vm244, %v223, 0
    %v264 = vsel %vm244, %v224, 0
    %v267 = vsel %vm244, %v225, 0
    %v270 = vsel %vm244, %v226, 0
    %v273 = vsel %vm244, %v227, 0
    %v276 = vsel %vm244, %v228, 0
    %v279 = vsel %vm244, %v229, 0
    %v282 = vsel %vm244, %v230, 0
    %v285 = vsel %vm244, %v231, 0
    %v288 = vsel %vm244, %v232, 0
    %v291 = vsel %vm244, %v233, 0
    %v294 = vsel %vm244, %v234, 0
    %v297 = vsel %vm244, %v235, 0
    %v300 = vsel %vm244, %v236, 0
    %v303 = vsel %vm244, %v237, 0
    %v306 = vsel %vm244, %v238, 0
    %v309 = vsel %vm244, %v239, 0
    %v312 = vsel %vm244, %v240, 0
    %v315 = vsel %vm244, %v241, 0
    %v318 = vsel %vm244, %v242, 0
    %v321 = vsel %vm244, %v243, 0
    %vm323 = vcmask 1041408
    %vm324 = vcmask 1042432
    %v325 = vsel %vm323, 4294967295, 65535
    %v326 = vsel %vm324, %v325, 0
    %v328 = vand.u32 %v113, %v326
    %330 = vmatprep.subr.bf16.mxu0 0
    %331 = vmatpush1.bf16.msra.mxu0 0
    %332 = vmatprep.subr.bf16.mxu0 0
    %333 = vmatpush1.bf16.msra.mxu0 0
    %334 = vmatprep.subr.bf16.mxu0 0
    %335 = vmatpush1.bf16.msra.mxu0 0
    %336 = vmatprep.subr.bf16.mxu0 0
    %337 = vmatpush1.bf16.msra.mxu0 0
    %338 = vmatprep.subr.bf16.mxu0 0
    %339 = vmatpush1.bf16.msra.mxu0 0
    %340 = vmatprep.subr.bf16.mxu0 0
    %341 = vmatpush1.bf16.msra.mxu0 0
    %342 = vmatprep.subr.bf16.mxu0 0
    %343 = vmatpush1.bf16.msra.mxu0 0
    %344 = vmatprep.subr.bf16.mxu0 0
    %345 = vmatpush1.bf16.msra.mxu0 %v328
    %346 = vmatprep.subr.bf16.mxu0 0
    %347 = vmatpush2.bf16.msra.mxu0 0
    %348 = vmatprep.subr.bf16.mxu0 0
    %349 = vmatpush2.bf16.msra.mxu0 0
    %350 = vmatprep.subr.bf16.mxu0 0
    %351 = vmatpush2.bf16.msra.mxu0 0
    %352 = vmatprep.subr.bf16.mxu0 0
    %353 = vmatpush2.bf16.msra.mxu0 0
    %354 = vmatprep.subr.bf16.mxu0 0
    %355 = vmatpush2.bf16.msra.mxu0 0
    %356 = vmatprep.subr.bf16.mxu0 0
    %357 = vmatpush2.bf16.msra.mxu0 0
    %358 = vmatprep.subr.bf16.mxu0 0
    %359 = vmatpush2.bf16.msra.mxu0 0
    %360 = vmatprep.subr.bf16.mxu0 0
    %361 = vmatpush2.bf16.msra.mxu0 0
    %362 = vmatprep.mubr.bf16.mxu0 0
    %363 = vmatmul.mubr.bf16.gmra.mxu0 %v246
    %v364 = vpop.f32.mrf.mxu0
    %v365 = vadd.f32 0.0, %v364
    %v366 = vpop.f32.mrf.mxu0
    %v367 = vpop.f32.mrf.mxu0
    %v368 = vadd.f32 0.0, %v367
    %v369 = vpop.f32.mrf.mxu0
    %370 = vmatprep.mubr.bf16.mxu0 0
    %371 = vmatmul.mubr.bf16.gmra.mxu0 %v249
    %v372 = vpop.f32.mrf.mxu0
    %v373 = vadd.f32 0.0, %v372
    %v374 = vpop.f32.mrf.mxu0
    %v375 = vpop.f32.mrf.mxu0
    %v376 = vadd.f32 0.0, %v375
    %v377 = vpop.f32.mrf.mxu0
    %378 = vmatprep.mubr.bf16.mxu0 0
    %379 = vmatmul.mubr.bf16.gmra.mxu0 %v252
    %v380 = vpop.f32.mrf.mxu0
    %v381 = vadd.f32 0.0, %v380
    %v382 = vpop.f32.mrf.mxu0
    %v383 = vpop.f32.mrf.mxu0
    %v384 = vadd.f32 0.0, %v383
    %v385 = vpop.f32.mrf.mxu0
    %386 = vmatprep.mubr.bf16.mxu0 0
    %387 = vmatmul.mubr.bf16.gmra.mxu0 %v255
    %v388 = vpop.f32.mrf.mxu0
    %v389 = vadd.f32 0.0, %v388
    %v390 = vpop.f32.mrf.mxu0
    %v391 = vpop.f32.mrf.mxu0
    %v392 = vadd.f32 0.0, %v391
    %v393 = vpop.f32.mrf.mxu0
    %394 = vmatprep.mubr.bf16.mxu0 0
    %395 = vmatmul.mubr.bf16.gmra.mxu0 %v258
    %v396 = vpop.f32.mrf.mxu0
    %v397 = vadd.f32 0.0, %v396
    %v398 = vpop.f32.mrf.mxu0
    %v399 = vpop.f32.mrf.mxu0
    %v400 = vadd.f32 0.0, %v399
    %v401 = vpop.f32.mrf.mxu0
    %402 = vmatprep.mubr.bf16.mxu0 0
    %403 = vmatmul.mubr.bf16.gmra.mxu0 %v261
    %v404 = vpop.f32.mrf.mxu0
    %v405 = vadd.f32 0.0, %v404
    %v406 = vpop.f32.mrf.mxu0
    %v407 = vpop.f32.mrf.mxu0
    %v408 = vadd.f32 0.0, %v407
    %v409 = vpop.f32.mrf.mxu0
    %410 = vmatprep.mubr.bf16.mxu0 0
    %411 = vmatmul.mubr.bf16.gmra.mxu0 %v264
    %v412 = vpop.f32.mrf.mxu0
    %v413 = vadd.f32 0.0, %v412
    %v414 = vpop.f32.mrf.mxu0
    %v415 = vpop.f32.mrf.mxu0
    %v416 = vadd.f32 0.0, %v415
    %v417 = vpop.f32.mrf.mxu0
    %418 = vmatprep.mubr.bf16.mxu0 0
    %419 = vmatmul.mubr.bf16.gmra.mxu0 %v267
    %v420 = vpop.f32.mrf.mxu0
    %v421 = vadd.f32 0.0, %v420
    %v422 = vpop.f32.mrf.mxu0
    %v423 = vpop.f32.mrf.mxu0
    %v424 = vadd.f32 0.0, %v423
    %v425 = vpop.f32.mrf.mxu0
    %426 = vmatprep.mubr.bf16.mxu0 0
    %427 = vmatmul.mubr.bf16.gmra.mxu0 %v270
    %v428 = vpop.f32.mrf.mxu0
    %v429 = vadd.f32 0.0, %v428
    %v430 = vpop.f32.mrf.mxu0
    %v431 = vpop.f32.mrf.mxu0
    %v432 = vadd.f32 0.0, %v431
    %v433 = vpop.f32.mrf.mxu0
    %434 = vmatprep.mubr.bf16.mxu0 0
    %435 = vmatmul.mubr.bf16.gmra.mxu0 %v273
    %v436 = vpop.f32.mrf.mxu0
    %v437 = vadd.f32 0.0, %v436
    %v438 = vpop.f32.mrf.mxu0
    %v439 = vpop.f32.mrf.mxu0
    %v440 = vadd.f32 0.0, %v439
    %v441 = vpop.f32.mrf.mxu0
    %442 = vmatprep.mubr.bf16.mxu0 0
    %443 = vmatmul.mubr.bf16.gmra.mxu0 %v276
    %v444 = vpop.f32.mrf.mxu0
    %v445 = vadd.f32 0.0, %v444
    %v446 = vpop.f32.mrf.mxu0
    %v447 = vpop.f32.mrf.mxu0
    %v448 = vadd.f32 0.0, %v447
    %v449 = vpop.f32.mrf.mxu0
    %450 = vmatprep.mubr.bf16.mxu0 0
    %451 = vmatmul.mubr.bf16.gmra.mxu0 %v279
    %v452 = vpop.f32.mrf.mxu0
    %v453 = vadd.f32 0.0, %v452
    %v454 = vpop.f32.mrf.mxu0
    %v455 = vpop.f32.mrf.mxu0
    %v456 = vadd.f32 0.0, %v455
    %v457 = vpop.f32.mrf.mxu0
    %458 = vmatprep.mubr.bf16.mxu0 0
    %459 = vmatmul.mubr.bf16.gmra.mxu0 %v282
    %v460 = vpop.f32.mrf.mxu0
    %v461 = vadd.f32 0.0, %v460
    %v462 = vpop.f32.mrf.mxu0
    %v463 = vpop.f32.mrf.mxu0
    %v464 = vadd.f32 0.0, %v463
    %v465 = vpop.f32.mrf.mxu0
    %466 = vmatprep.mubr.bf16.mxu0 0
    %467 = vmatmul.mubr.bf16.gmra.mxu0 %v285
    %v468 = vpop.f32.mrf.mxu0
    %v469 = vadd.f32 0.0, %v468
    %v470 = vpop.f32.mrf.mxu0
    %v471 = vpop.f32.mrf.mxu0
    %v472 = vadd.f32 0.0, %v471
    %v473 = vpop.f32.mrf.mxu0
    %474 = vmatprep.mubr.bf16.mxu0 0
    %475 = vmatmul.mubr.bf16.gmra.mxu0 %v288
    %v476 = vpop.f32.mrf.mxu0
    %v477 = vadd.f32 0.0, %v476
    %v478 = vpop.f32.mrf.mxu0
    %v479 = vpop.f32.mrf.mxu0
    %v480 = vadd.f32 0.0, %v479
    %v481 = vpop.f32.mrf.mxu0
    %482 = vmatprep.mubr.bf16.mxu0 0
    %483 = vmatmul.mubr.bf16.gmra.mxu0 %v291
    %v484 = vpop.f32.mrf.mxu0
    %v485 = vadd.f32 0.0, %v484
    %v486 = vpop.f32.mrf.mxu0
    %v487 = vpop.f32.mrf.mxu0
    %v488 = vadd.f32 0.0, %v487
    %v489 = vpop.f32.mrf.mxu0
    %490 = vmatprep.mubr.bf16.mxu0 0
    %491 = vmatmul.mubr.bf16.gmra.mxu0 %v294
    %v492 = vpop.f32.mrf.mxu0
    %v493 = vadd.f32 0.0, %v492
    %v494 = vpop.f32.mrf.mxu0
    %v495 = vpop.f32.mrf.mxu0
    %v496 = vadd.f32 0.0, %v495
    %v497 = vpop.f32.mrf.mxu0
    %498 = vmatprep.mubr.bf16.mxu0 0
    %499 = vmatmul.mubr.bf16.gmra.mxu0 %v297
    %v500 = vpop.f32.mrf.mxu0
    %v501 = vadd.f32 0.0, %v500
    %v502 = vpop.f32.mrf.mxu0
    %v503 = vpop.f32.mrf.mxu0
    %v504 = vadd.f32 0.0, %v503
    %v505 = vpop.f32.mrf.mxu0
    %506 = vmatprep.mubr.bf16.mxu0 0
    %507 = vmatmul.mubr.bf16.gmra.mxu0 %v300
    %v508 = vpop.f32.mrf.mxu0
    %v509 = vadd.f32 0.0, %v508
    %v510 = vpop.f32.mrf.mxu0
    %v511 = vpop.f32.mrf.mxu0
    %v512 = vadd.f32 0.0, %v511
    %v513 = vpop.f32.mrf.mxu0
    %514 = vmatprep.mubr.bf16.mxu0 0
    %515 = vmatmul.mubr.bf16.gmra.mxu0 %v303
    %v516 = vpop.f32.mrf.mxu0
    %v517 = vadd.f32 0.0, %v516
    %v518 = vpop.f32.mrf.mxu0
    %v519 = vpop.f32.mrf.mxu0
    %v520 = vadd.f32 0.0, %v519
    %v521 = vpop.f32.mrf.mxu0
    %522 = vmatprep.mubr.bf16.mxu0 0
    %523 = vmatmul.mubr.bf16.gmra.mxu0 %v306
    %v524 = vpop.f32.mrf.mxu0
    %v525 = vadd.f32 0.0, %v524
    %v526 = vpop.f32.mrf.mxu0
    %v527 = vpop.f32.mrf.mxu0
    %v528 = vadd.f32 0.0, %v527
    %v529 = vpop.f32.mrf.mxu0
    %530 = vmatprep.mubr.bf16.mxu0 0
    %531 = vmatmul.mubr.bf16.gmra.mxu0 %v309
    %v532 = vpop.f32.mrf.mxu0
    %v533 = vadd.f32 0.0, %v532
    %v534 = vpop.f32.mrf.mxu0
    %v535 = vpop.f32.mrf.mxu0
    %v536 = vadd.f32 0.0, %v535
    %v537 = vpop.f32.mrf.mxu0
    %538 = vmatprep.mubr.bf16.mxu0 0
    %539 = vmatmul.mubr.bf16.gmra.mxu0 %v312
    %v540 = vpop.f32.mrf.mxu0
    %v541 = vadd.f32 0.0, %v540
    %v542 = vpop.f32.mrf.mxu0
    %v543 = vpop.f32.mrf.mxu0
    %v544 = vadd.f32 0.0, %v543
    %v545 = vpop.f32.mrf.mxu0
    %546 = vmatprep.mubr.bf16.mxu0 0
    %547 = vmatmul.mubr.bf16.gmra.mxu0 %v315
    %v548 = vpop.f32.mrf.mxu0
    %v549 = vadd.f32 0.0, %v548
    %v550 = vpop.f32.mrf.mxu0
    %v551 = vpop.f32.mrf.mxu0
    %v552 = vadd.f32 0.0, %v551
    %v553 = vpop.f32.mrf.mxu0
    %554 = vmatprep.mubr.bf16.mxu0 0
    %555 = vmatmul.mubr.bf16.gmra.mxu0 %v318
    %v556 = vpop.f32.mrf.mxu0
    %v557 = vadd.f32 0.0, %v556
    %v558 = vpop.f32.mrf.mxu0
    %v559 = vpop.f32.mrf.mxu0
    %v560 = vadd.f32 0.0, %v559
    %v561 = vpop.f32.mrf.mxu0
    %562 = vmatprep.mubr.bf16.mxu0 0
    %563 = vmatmul.mubr.bf16.gmra.mxu0 %v321
    %v564 = vpop.f32.mrf.mxu0
    %v565 = vadd.f32 0.0, %v564
    %v566 = vpop.f32.mrf.mxu0
    %v567 = vpop.f32.mrf.mxu0
    %v568 = vadd.f32 0.0, %v567
    %v569 = vpop.f32.mrf.mxu0
    %570 = vdwg.mxu0
    %v571 = vld [vmem:[%s2] sm:$0x1]
    %v573 = vlaneseq
    %v574 = vshrl.u32 %v573, 7
    %v575 = vsub.s32 0, %v574
    %v576 = vrot.slane %v571, %v575
    %v578 = vmul.f32 %v365, %v576
    %v579 = vmul.f32 %v368, %v576
    %v580 = vmul.f32 %v373, %v576
    %v581 = vmul.f32 %v376, %v576
    %v582 = vmul.f32 %v381, %v576
    %v583 = vmul.f32 %v384, %v576
    %v584 = vmul.f32 %v389, %v576
    %v585 = vmul.f32 %v392, %v576
    %v586 = vmul.f32 %v397, %v576
    %v587 = vmul.f32 %v400, %v576
    %v588 = vmul.f32 %v405, %v576
    %v589 = vmul.f32 %v408, %v576
    %v590 = vmul.f32 %v413, %v576
    %v591 = vmul.f32 %v416, %v576
    %v592 = vmul.f32 %v421, %v576
    %v593 = vmul.f32 %v424, %v576
    %v594 = vmul.f32 %v429, %v576
    %v595 = vmul.f32 %v432, %v576
    %v596 = vmul.f32 %v437, %v576
    %v597 = vmul.f32 %v440, %v576
    %v598 = vmul.f32 %v445, %v576
    %v599 = vmul.f32 %v448, %v576
    %v600 = vmul.f32 %v453, %v576
    %v601 = vmul.f32 %v456, %v576
    %v602 = vmul.f32 %v461, %v576
    %v603 = vmul.f32 %v464, %v576
    %v604 = vmul.f32 %v469, %v576
    %v605 = vmul.f32 %v472, %v576
    %v606 = vmul.f32 %v477, %v576
    %v607 = vmul.f32 %v480, %v576
    %v608 = vmul.f32 %v485, %v576
    %v609 = vmul.f32 %v488, %v576
    %v610 = vmul.f32 %v493, %v576
    %v611 = vmul.f32 %v496, %v576
    %v612 = vmul.f32 %v501, %v576
    %v613 = vmul.f32 %v504, %v576
    %v614 = vmul.f32 %v509, %v576
    %v615 = vmul.f32 %v512, %v576
    %v616 = vmul.f32 %v517, %v576
    %v617 = vmul.f32 %v520, %v576
    %v618 = vmul.f32 %v525, %v576
    %v619 = vmul.f32 %v528, %v576
    %v620 = vmul.f32 %v533, %v576
    %v621 = vmul.f32 %v536, %v576
    %v622 = vmul.f32 %v541, %v576
    %v623 = vmul.f32 %v544, %v576
    %v624 = vmul.f32 %v549, %v576
    %v625 = vmul.f32 %v552, %v576
    %v626 = vmul.f32 %v557, %v576
    %v627 = vmul.f32 %v560, %v576
    %v628 = vmul.f32 %v565, %v576
    %v629 = vmul.f32 %v568, %v576
    %v630 = vld [vmem:[%s3] sm:$0x1]
    %v632 = vlaneseq
    %v633 = vshrl.u32 %v632, 7
    %v634 = vsub.s32 0, %v633
    %v635 = vrot.slane %v630, %v634
    %v637 = vadd.f32 %v578, %v635
    %v638 = vadd.f32 %v579, %v635
    %v639 = vadd.f32 %v580, %v635
    %v640 = vadd.f32 %v581, %v635
    %v641 = vadd.f32 %v582, %v635
    %v642 = vadd.f32 %v583, %v635
    %v643 = vadd.f32 %v584, %v635
    %v644 = vadd.f32 %v585, %v635
    %v645 = vadd.f32 %v586, %v635
    %v646 = vadd.f32 %v587, %v635
    %v647 = vadd.f32 %v588, %v635
    %v648 = vadd.f32 %v589, %v635
    %v649 = vadd.f32 %v590, %v635
    %v650 = vadd.f32 %v591, %v635
    %v651 = vadd.f32 %v592, %v635
    %v652 = vadd.f32 %v593, %v635
    %v653 = vadd.f32 %v594, %v635
    %v654 = vadd.f32 %v595, %v635
    %v655 = vadd.f32 %v596, %v635
    %v656 = vadd.f32 %v597, %v635
    %v657 = vadd.f32 %v598, %v635
    %v658 = vadd.f32 %v599, %v635
    %v659 = vadd.f32 %v600, %v635
    %v660 = vadd.f32 %v601, %v635
    %v661 = vadd.f32 %v602, %v635
    %v662 = vadd.f32 %v603, %v635
    %v663 = vadd.f32 %v604, %v635
    %v664 = vadd.f32 %v605, %v635
    %v665 = vadd.f32 %v606, %v635
    %v666 = vadd.f32 %v607, %v635
    %v667 = vadd.f32 %v608, %v635
    %v668 = vadd.f32 %v609, %v635
    %v669 = vadd.f32 %v610, %v635
    %v670 = vadd.f32 %v611, %v635
    %v671 = vadd.f32 %v612, %v635
    %v672 = vadd.f32 %v613, %v635
    %v673 = vadd.f32 %v614, %v635
    %v674 = vadd.f32 %v615, %v635
    %v675 = vadd.f32 %v616, %v635
    %v676 = vadd.f32 %v617, %v635
    %v677 = vadd.f32 %v618, %v635
    %v678 = vadd.f32 %v619, %v635
    %v679 = vadd.f32 %v620, %v635
    %v680 = vadd.f32 %v621, %v635
    %v681 = vadd.f32 %v622, %v635
    %v682 = vadd.f32 %v623, %v635
    %v683 = vadd.f32 %v624, %v635
    %v684 = vadd.f32 %v625, %v635
    %v685 = vadd.f32 %v626, %v635
    %v686 = vadd.f32 %v627, %v635
    %v687 = vadd.f32 %v628, %v635
    %v688 = vadd.f32 %v629, %v635
    %v689 = vmax.f32 %v637, 0.0
    %v690 = vmax.f32 %v638, 0.0
    %v691 = vmax.f32 %v639, 0.0
    %v692 = vmax.f32 %v640, 0.0
    %v693 = vmax.f32 %v641, 0.0
    %v694 = vmax.f32 %v642, 0.0
    %v695 = vmax.f32 %v643, 0.0
    %v696 = vmax.f32 %v644, 0.0
    %v697 = vmax.f32 %v645, 0.0
    %v698 = vmax.f32 %v646, 0.0
    %v699 = vmax.f32 %v647, 0.0
    %v700 = vmax.f32 %v648, 0.0
    %v701 = vmax.f32 %v649, 0.0
    %v702 = vmax.f32 %v650, 0.0
    %v703 = vmax.f32 %v651, 0.0
    %v704 = vmax.f32 %v652, 0.0
    %v705 = vmax.f32 %v653, 0.0
    %v706 = vmax.f32 %v654, 0.0
    %v707 = vmax.f32 %v655, 0.0
    %v708 = vmax.f32 %v656, 0.0
    %v709 = vmax.f32 %v657, 0.0
    %v710 = vmax.f32 %v658, 0.0
    %v711 = vmax.f32 %v659, 0.0
    %v712 = vmax.f32 %v660, 0.0
    %v713 = vmax.f32 %v661, 0.0
    %v714 = vmax.f32 %v662, 0.0
    %v715 = vmax.f32 %v663, 0.0
    %v716 = vmax.f32 %v664, 0.0
    %v717 = vmax.f32 %v665, 0.0
    %v718 = vmax.f32 %v666, 0.0
    %v719 = vmax.f32 %v667, 0.0
    %v720 = vmax.f32 %v668, 0.0
    %v721 = vmax.f32 %v669, 0.0
    %v722 = vmax.f32 %v670, 0.0
    %v723 = vmax.f32 %v671, 0.0
    %v724 = vmax.f32 %v672, 0.0
    %v725 = vmax.f32 %v673, 0.0
    %v726 = vmax.f32 %v674, 0.0
    %v727 = vmax.f32 %v675, 0.0
    %v728 = vmax.f32 %v676, 0.0
    %v729 = vmax.f32 %v677, 0.0
    %v730 = vmax.f32 %v678, 0.0
    %v731 = vmax.f32 %v679, 0.0
    %v732 = vmax.f32 %v680, 0.0
    %v733 = vmax.f32 %v681, 0.0
    %v734 = vmax.f32 %v682, 0.0
    %v735 = vmax.f32 %v683, 0.0
    %v736 = vmax.f32 %v684, 0.0
    %v737 = vmax.f32 %v685, 0.0
    %v738 = vmax.f32 %v686, 0.0
    %v739 = vmax.f32 %v687, 0.0
    %v740 = vmax.f32 %v688, 0.0
    %vm741 = vcmask 130048
    %742 = vst.msk [vmem:[#allocation2] sm:$0xff] %vm741, %v689
    %743 = vst.msk [vmem:[#allocation2 + $0x8] sm:$0xff] %vm741, %v690
    %744 = vst.msk [vmem:[#allocation2 + $0x10] sm:$0xff] %vm741, %v691
    %745 = vst.msk [vmem:[#allocation2 + $0x18] sm:$0xff] %vm741, %v692
    %746 = vst.msk [vmem:[#allocation2 + $0x20] sm:$0xff] %vm741, %v693
    %747 = vst.msk [vmem:[#allocation2 + $0x28] sm:$0xff] %vm741, %v694
    %748 = vst.msk [vmem:[#allocation2 + $0x30] sm:$0xff] %vm741, %v695
    %749 = vst.msk [vmem:[#allocation2 + $0x38] sm:$0xff] %vm741, %v696
    %750 = vst.msk [vmem:[#allocation2 + $0x40] sm:$0xff] %vm741, %v697
    %751 = vst.msk [vmem:[#allocation2 + $0x48] sm:$0xff] %vm741, %v698
    %752 = vst.msk [vmem:[#allocation2 + $0x50] sm:$0xff] %vm741, %v699
    %753 = vst.msk [vmem:[#allocation2 + $0x58] sm:$0xff] %vm741, %v700
    %754 = vst.msk [vmem:[#allocation2 + $0x60] sm:$0xff] %vm741, %v701
    %755 = vst.msk [vmem:[#allocation2 + $0x68] sm:$0xff] %vm741, %v702
    %756 = vst.msk [vmem:[#allocation2 + $0x70] sm:$0xff] %vm741, %v703
    %757 = vst.msk [vmem:[#allocation2 + $0x78] sm:$0xff] %vm741, %v704
    %758 = vst.msk [vmem:[#allocation2 + $0x80] sm:$0xff] %vm741, %v705
    %759 = vst.msk [vmem:[#allocation2 + $0x88] sm:$0xff] %vm741, %v706
    %760 = vst.msk [vmem:[#allocation2 + $0x90] sm:$0xff] %vm741, %v707
    %761 = vst.msk [vmem:[#allocation2 + $0x98] sm:$0xff] %vm741, %v708
    %762 = vst.msk [vmem:[#allocation2 + $0xa0] sm:$0xff] %vm741, %v709
    %763 = vst.msk [vmem:[#allocation2 + $0xa8] sm:$0xff] %vm741, %v710
    %764 = vst.msk [vmem:[#allocation2 + $0xb0] sm:$0xff] %vm741, %v711
    %765 = vst.msk [vmem:[#allocation2 + $0xb8] sm:$0xff] %vm741, %v712
    %766 = vst.msk [vmem:[#allocation2 + $0xc0] sm:$0xff] %vm741, %v713
    %767 = vst.msk [vmem:[#allocation2 + $0xc8] sm:$0xff] %vm741, %v714
    %768 = vst.msk [vmem:[#allocation2 + $0xd0] sm:$0xff] %vm741, %v715
    %769 = vst.msk [vmem:[#allocation2 + $0xd8] sm:$0xff] %vm741, %v716
    %770 = vst.msk [vmem:[#allocation2 + $0xe0] sm:$0xff] %vm741, %v717
    %771 = vst.msk [vmem:[#allocation2 + $0xe8] sm:$0xff] %vm741, %v718
    %772 = vst.msk [vmem:[#allocation2 + $0xf0] sm:$0xff] %vm741, %v719
    %773 = vst.msk [vmem:[#allocation2 + $0xf8] sm:$0xff] %vm741, %v720
    %774 = vst.msk [vmem:[#allocation2 + $0x100] sm:$0xff] %vm741, %v721
    %775 = vst.msk [vmem:[#allocation2 + $0x108] sm:$0xff] %vm741, %v722
    %776 = vst.msk [vmem:[#allocation2 + $0x110] sm:$0xff] %vm741, %v723
    %777 = vst.msk [vmem:[#allocation2 + $0x118] sm:$0xff] %vm741, %v724
    %778 = vst.msk [vmem:[#allocation2 + $0x120] sm:$0xff] %vm741, %v725
    %779 = vst.msk [vmem:[#allocation2 + $0x128] sm:$0xff] %vm741, %v726
    %780 = vst.msk [vmem:[#allocation2 + $0x130] sm:$0xff] %vm741, %v727
    %781 = vst.msk [vmem:[#allocation2 + $0x138] sm:$0xff] %vm741, %v728
    %782 = vst.msk [vmem:[#allocation2 + $0x140] sm:$0xff] %vm741, %v729
    %783 = vst.msk [vmem:[#allocation2 + $0x148] sm:$0xff] %vm741, %v730
    %784 = vst.msk [vmem:[#allocation2 + $0x150] sm:$0xff] %vm741, %v731
    %785 = vst.msk [vmem:[#allocation2 + $0x158] sm:$0xff] %vm741, %v732
    %786 = vst.msk [vmem:[#allocation2 + $0x160] sm:$0xff] %vm741, %v733
    %787 = vst.msk [vmem:[#allocation2 + $0x168] sm:$0xff] %vm741, %v734
    %788 = vst.msk [vmem:[#allocation2 + $0x170] sm:$0xff] %vm741, %v735
    %789 = vst.msk [vmem:[#allocation2 + $0x178] sm:$0xff] %vm741, %v736
    %790 = vst.msk [vmem:[#allocation2 + $0x180] sm:$0xff] %vm741, %v737
    %791 = vst.msk [vmem:[#allocation2 + $0x188] sm:$0xff] %vm741, %v738
    %792 = vst.msk [vmem:[#allocation2 + $0x190] sm:$0xff] %vm741, %v739
    %793 = vst.msk [vmem:[#allocation2 + $0x198] sm:$0xff] %vm741, %v740
    %v794 = vld [vmem:[#allocation2] ss:$2 sm:$0xff]
    %s795 = scalar_lea.vmem [#allocation2], 16
    %v796 = vld [vmem:[%s795] ss:$2 sm:$0xff]
    %s797 = scalar_lea.vmem [#allocation2], 32
    %v798 = vld [vmem:[%s797] ss:$2 sm:$0xff]
    %s799 = scalar_lea.vmem [#allocation2], 48
    %v800 = vld [vmem:[%s799] ss:$2 sm:$0xff]
    %s801 = scalar_lea.vmem [#allocation2], 64
    %v802 = vld [vmem:[%s801] ss:$2 sm:$0xff]
    %s803 = scalar_lea.vmem [#allocation2], 80
    %v804 = vld [vmem:[%s803] ss:$2 sm:$0xff]
    %s805 = scalar_lea.vmem [#allocation2], 96
    %v806 = vld [vmem:[%s805] ss:$2 sm:$0xff]
    %s807 = scalar_lea.vmem [#allocation2], 112
    %v808 = vld [vmem:[%s807] ss:$2 sm:$0xff]
    %s809 = scalar_lea.vmem [#allocation2], 128
    %v810 = vld [vmem:[%s809] ss:$2 sm:$0xff]
    %s811 = scalar_lea.vmem [#allocation2], 144
    %v812 = vld [vmem:[%s811] ss:$2 sm:$0xff]
    %s813 = scalar_lea.vmem [#allocation2], 160
    %v814 = vld [vmem:[%s813] ss:$2 sm:$0xff]
    %s815 = scalar_lea.vmem [#allocation2], 176
    %v816 = vld [vmem:[%s815] ss:$2 sm:$0xff]
    %s817 = scalar_lea.vmem [#allocation2], 192
    %v818 = vld [vmem:[%s817] ss:$2 sm:$0xff]
    %s819 = scalar_lea.vmem [#allocation2], 208
    %v820 = vld [vmem:[%s819] ss:$2 sm:$0xff]
    %s821 = scalar_lea.vmem [#allocation2], 224
    %v822 = vld [vmem:[%s821] ss:$2 sm:$0xff]
    %s823 = scalar_lea.vmem [#allocation2], 240
    %v824 = vld [vmem:[%s823] ss:$2 sm:$0xff]
    %s825 = scalar_lea.vmem [#allocation2], 256
    %v826 = vld [vmem:[%s825] ss:$2 sm:$0xff]
    %s827 = scalar_lea.vmem [#allocation2], 272
    %v828 = vld [vmem:[%s827] ss:$2 sm:$0xff]
    %s829 = scalar_lea.vmem [#allocation2], 288
    %v830 = vld [vmem:[%s829] ss:$2 sm:$0xff]
    %s831 = scalar_lea.vmem [#allocation2], 304
    %v832 = vld [vmem:[%s831] ss:$2 sm:$0xff]
    %s833 = scalar_lea.vmem [#allocation2], 320
    %v834 = vld [vmem:[%s833] ss:$2 sm:$0xff]
    %s835 = scalar_lea.vmem [#allocation2], 336
    %v836 = vld [vmem:[%s835] ss:$2 sm:$0xff]
    %s837 = scalar_lea.vmem [#allocation2], 352
    %v838 = vld [vmem:[%s837] ss:$2 sm:$0xff]
    %s839 = scalar_lea.vmem [#allocation2], 368
    %v840 = vld [vmem:[%s839] ss:$2 sm:$0xff]
    %s841 = scalar_lea.vmem [#allocation2], 384
    %v842 = vld [vmem:[%s841] ss:$2 sm:$0xff]
    %s843 = scalar_lea.vmem [#allocation2], 400
    %v844 = vld [vmem:[%s843] ss:$2 sm:$0xff]
    %s845 = scalar_lea.vmem [#allocation2], 1
    %v846 = vld [vmem:[%s845] ss:$2 sm:$0xff]
    %s847 = scalar_lea.vmem [#allocation2], 17
    %v848 = vld [vmem:[%s847] ss:$2 sm:$0xff]
    %s849 = scalar_lea.vmem [#allocation2], 33
    %v850 = vld [vmem:[%s849] ss:$2 sm:$0xff]
    %s851 = scalar_lea.vmem [#allocation2], 49
    %v852 = vld [vmem:[%s851] ss:$2 sm:$0xff]
    %s853 = scalar_lea.vmem [#allocation2], 65
    %v854 = vld [vmem:[%s853] ss:$2 sm:$0xff]
    %s855 = scalar_lea.vmem [#allocation2], 81
    %v856 = vld [vmem:[%s855] ss:$2 sm:$0xff]
    %s857 = scalar_lea.vmem [#allocation2], 97
    %v858 = vld [vmem:[%s857] ss:$2 sm:$0xff]
    %s859 = scalar_lea.vmem [#allocation2], 113
    %v860 = vld [vmem:[%s859] ss:$2 sm:$0xff]
    %s861 = scalar_lea.vmem [#allocation2], 129
    %v862 = vld [vmem:[%s861] ss:$2 sm:$0xff]
    %s863 = scalar_lea.vmem [#allocation2], 145
    %v864 = vld [vmem:[%s863] ss:$2 sm:$0xff]
    %s865 = scalar_lea.vmem [#allocation2], 161
    %v866 = vld [vmem:[%s865] ss:$2 sm:$0xff]
    %s867 = scalar_lea.vmem [#allocation2], 177
    %v868 = vld [vmem:[%s867] ss:$2 sm:$0xff]
    %s869 = scalar_lea.vmem [#allocation2], 193
    %v870 = vld [vmem:[%s869] ss:$2 sm:$0xff]
    %s871 = scalar_lea.vmem [#allocation2], 209
    %v872 = vld [vmem:[%s871] ss:$2 sm:$0xff]
    %s873 = scalar_lea.vmem [#allocation2], 225
    %v874 = vld [vmem:[%s873] ss:$2 sm:$0xff]
    %s875 = scalar_lea.vmem [#allocation2], 241
    %v876 = vld [vmem:[%s875] ss:$2 sm:$0xff]
    %s877 = scalar_lea.vmem [#allocation2], 257
    %v878 = vld [vmem:[%s877] ss:$2 sm:$0xff]
    %s879 = scalar_lea.vmem [#allocation2], 273
    %v880 = vld [vmem:[%s879] ss:$2 sm:$0xff]
    %s881 = scalar_lea.vmem [#allocation2], 289
    %v882 = vld [vmem:[%s881] ss:$2 sm:$0xff]
    %s883 = scalar_lea.vmem [#allocation2], 305
    %v884 = vld [vmem:[%s883] ss:$2 sm:$0xff]
    %s885 = scalar_lea.vmem [#allocation2], 321
    %v886 = vld [vmem:[%s885] ss:$2 sm:$0xff]
    %s887 = scalar_lea.vmem [#allocation2], 337
    %v888 = vld [vmem:[%s887] ss:$2 sm:$0xff]
    %s889 = scalar_lea.vmem [#allocation2], 353
    %v890 = vld [vmem:[%s889] ss:$2 sm:$0xff]
    %s891 = scalar_lea.vmem [#allocation2], 369
    %v892 = vld [vmem:[%s891] ss:$2 sm:$0xff]
    %s893 = scalar_lea.vmem [#allocation2], 385
    %v894 = vld [vmem:[%s893] ss:$2 sm:$0xff]
    %s895 = scalar_lea.vmem [#allocation2], 401
    %v896 = vld [vmem:[%s895] ss:$2 sm:$0xff]
    %v897 = vmax.f32 %v794, %v846
    %v898 = vmax.f32 %v796, %v848
    %v899 = vmax.f32 %v798, %v850
    %v900 = vmax.f32 %v800, %v852
    %v901 = vmax.f32 %v802, %v854
    %v902 = vmax.f32 %v804, %v856
    %v903 = vmax.f32 %v806, %v858
    %v904 = vmax.f32 %v808, %v860
    %v905 = vmax.f32 %v810, %v862
    %v906 = vmax.f32 %v812, %v864
    %v907 = vmax.f32 %v814, %v866
    %v908 = vmax.f32 %v816, %v868
    %v909 = vmax.f32 %v818, %v870
    %v910 = vmax.f32 %v820, %v872
    %v911 = vmax.f32 %v822, %v874
    %v912 = vmax.f32 %v824, %v876
    %v913 = vmax.f32 %v826, %v878
    %v914 = vmax.f32 %v828, %v880
    %v915 = vmax.f32 %v830, %v882
    %v916 = vmax.f32 %v832, %v884
    %v917 = vmax.f32 %v834, %v886
    %v918 = vmax.f32 %v836, %v888
    %v919 = vmax.f32 %v838, %v890
    %v920 = vmax.f32 %v840, %v892
    %v921 = vmax.f32 %v842, %v894
    %v922 = vmax.f32 %v844, %v896
    %vm949 = vcmask 1046528
    %v950 = vrot.slane %v794, 1
    %v951 = vrot.slane %v796, 1
    %v952 = vsel %vm949, %v950, %v951
    %v953 = vrot.slane %v798, 1
    %v954 = vsel %vm949, %v951, %v953
    %v955 = vrot.slane %v800, 1
    %v956 = vsel %vm949, %v953, %v955
    %v957 = vrot.slane %v802, 1
    %v958 = vsel %vm949, %v955, %v957
    %v959 = vrot.slane %v804, 1
    %v960 = vsel %vm949, %v957, %v959
    %v961 = vrot.slane %v806, 1
    %v962 = vsel %vm949, %v959, %v961
    %v963 = vrot.slane %v808, 1
    %v964 = vsel %vm949, %v961, %v963
    %v965 = vrot.slane %v810, 1
    %v966 = vsel %vm949, %v963, %v965
    %v967 = vrot.slane %v812, 1
    %v968 = vsel %vm949, %v965, %v967
    %v969 = vrot.slane %v814, 1
    %v970 = vsel %vm949, %v967, %v969
    %v971 = vrot.slane %v816, 1
    %v972 = vsel %vm949, %v969, %v971
    %v973 = vrot.slane %v818, 1
    %v974 = vsel %vm949, %v971, %v973
    %v975 = vrot.slane %v820, 1
    %v976 = vrot.slane %v822, 1
    %v977 = vsel %vm949, %v975, %v976
    %v978 = vrot.slane %v824, 1
    %v979 = vsel %vm949, %v976, %v978
    %v980 = vrot.slane %v826, 1
    %v981 = vsel %vm949, %v978, %v980
    %v982 = vrot.slane %v828, 1
    %v983 = vsel %vm949, %v980, %v982
    %v984 = vrot.slane %v830, 1
    %v985 = vsel %vm949, %v982, %v984
    %v986 = vrot.slane %v832, 1
    %v987 = vsel %vm949, %v984, %v986
    %v988 = vrot.slane %v834, 1
    %v989 = vsel %vm949, %v986, %v988
    %v990 = vrot.slane %v836, 1
    %v991 = vsel %vm949, %v988, %v990
    %v992 = vrot.slane %v838, 1
    %v993 = vsel %vm949, %v990, %v992
    %v994 = vrot.slane %v840, 1
    %v995 = vsel %vm949, %v992, %v994
    %v996 = vrot.slane %v842, 1
    %v997 = vsel %vm949, %v994, %v996
    %v998 = vrot.slane %v844, 1
    %v999 = vsel %vm949, %v996, %v998
    %v1026 = vmax.f32 %v897, %v952
    %v1027 = vmax.f32 %v898, %v954
    %v1028 = vmax.f32 %v899, %v956
    %v1029 = vmax.f32 %v900, %v958
    %v1030 = vmax.f32 %v901, %v960
    %v1031 = vmax.f32 %v902, %v962
    %v1032 = vmax.f32 %v903, %v964
    %v1033 = vmax.f32 %v904, %v966
    %v1034 = vmax.f32 %v905, %v968
    %v1035 = vmax.f32 %v906, %v970
    %v1036 = vmax.f32 %v907, %v972
    %v1037 = vmax.f32 %v908, %v974
    %v1038 = vmax.f32 %v909, %v973
    %v1039 = vmax.f32 %v910, %v977
    %v1040 = vmax.f32 %v911, %v979
    %v1041 = vmax.f32 %v912, %v981
    %v1042 = vmax.f32 %v913, %v983
    %v1043 = vmax.f32 %v914, %v985
    %v1044 = vmax.f32 %v915, %v987
    %v1045 = vmax.f32 %v916, %v989
    %v1046 = vmax.f32 %v917, %v991
    %v1047 = vmax.f32 %v918, %v993
    %v1048 = vmax.f32 %v919, %v995
    %v1049 = vmax.f32 %v920, %v997
    %v1050 = vmax.f32 %v921, %v999
    %v1051 = vmax.f32 %v922, %v998
    %v1078 = vrot.slane %v846, 1
    %v1079 = vrot.slane %v848, 1
    %v1080 = vsel %vm949, %v1078, %v1079
    %v1081 = vrot.slane %v850, 1
    %v1082 = vsel %vm949, %v1079, %v1081
    %v1083 = vrot.slane %v852, 1
    %v1084 = vsel %vm949, %v1081, %v1083
    %v1085 = vrot.slane %v854, 1
    %v1086 = vsel %vm949, %v1083, %v1085
    %v1087 = vrot.slane %v856, 1
    %v1088 = vsel %vm949, %v1085, %v1087
    %v1089 = vrot.slane %v858, 1
    %v1090 = vsel %vm949, %v1087, %v1089
    %v1091 = vrot.slane %v860, 1
    %v1092 = vsel %vm949, %v1089, %v1091
    %v1093 = vrot.slane %v862, 1
    %v1094 = vsel %vm949, %v1091, %v1093
    %v1095 = vrot.slane %v864, 1
    %v1096 = vsel %vm949, %v1093, %v1095
    %v1097 = vrot.slane %v866, 1
    %v1098 = vsel %vm949, %v1095, %v1097
    %v1099 = vrot.slane %v868, 1
    %v1100 = vsel %vm949, %v1097, %v1099
    %v1101 = vrot.slane %v870, 1
    %v1102 = vsel %vm949, %v1099, %v1101
    %v1103 = vrot.slane %v872, 1
    %v1104 = vrot.slane %v874, 1
    %v1105 = vsel %vm949, %v1103, %v1104
    %v1106 = vrot.slane %v876, 1
    %v1107 = vsel %vm949, %v1104, %v1106
    %v1108 = vrot.slane %v878, 1
    %v1109 = vsel %vm949, %v1106, %v1108
    %v1110 = vrot.slane %v880, 1
    %v1111 = vsel %vm949, %v1108, %v1110
    %v1112 = vrot.slane %v882, 1
    %v1113 = vsel %vm949, %v1110, %v1112
    %v1114 = vrot.slane %v884, 1
    %v1115 = vsel %vm949, %v1112, %v1114
    %v1116 = vrot.slane %v886, 1
    %v1117 = vsel %vm949, %v1114, %v1116
    %v1118 = vrot.slane %v888, 1
    %v1119 = vsel %vm949, %v1116, %v1118
    %v1120 = vrot.slane %v890, 1
    %v1121 = vsel %vm949, %v1118, %v1120
    %v1122 = vrot.slane %v892, 1
    %v1123 = vsel %vm949, %v1120, %v1122
    %v1124 = vrot.slane %v894, 1
    %v1125 = vsel %vm949, %v1122, %v1124
    %v1126 = vrot.slane %v896, 1
    %v1127 = vsel %vm949, %v1124, %v1126
    %v1154 = vmax.f32 %v1026, %v1080
    %v1155 = vmax.f32 %v1027, %v1082
    %v1156 = vmax.f32 %v1028, %v1084
    %v1157 = vmax.f32 %v1029, %v1086
    %v1158 = vmax.f32 %v1030, %v1088
    %v1159 = vmax.f32 %v1031, %v1090
    %v1160 = vmax.f32 %v1032, %v1092
    %v1161 = vmax.f32 %v1033, %v1094
    %v1162 = vmax.f32 %v1034, %v1096
    %v1163 = vmax.f32 %v1035, %v1098
    %v1164 = vmax.f32 %v1036, %v1100
    %v1165 = vmax.f32 %v1037, %v1102
    %v1166 = vmax.f32 %v1038, %v1101
    %v1167 = vmax.f32 %v1039, %v1105
    %v1168 = vmax.f32 %v1040, %v1107
    %v1169 = vmax.f32 %v1041, %v1109
    %v1170 = vmax.f32 %v1042, %v1111
    %v1171 = vmax.f32 %v1043, %v1113
    %v1172 = vmax.f32 %v1044, %v1115
    %v1173 = vmax.f32 %v1045, %v1117
    %v1174 = vmax.f32 %v1046, %v1119
    %v1175 = vmax.f32 %v1047, %v1121
    %v1176 = vmax.f32 %v1048, %v1123
    %v1177 = vmax.f32 %v1049, %v1125
    %v1178 = vmax.f32 %v1050, %v1127
    %v1179 = vmax.f32 %v1051, %v1126
    %vm1180 = vcmask 1045504
    %v1181 = vrot.slane %v794, 2
    %v1182 = vrot.slane %v796, 2
    %v1183 = vsel %vm1180, %v1181, %v1182
    %v1184 = vrot.slane %v798, 2
    %v1185 = vsel %vm1180, %v1182, %v1184
    %v1186 = vrot.slane %v800, 2
    %v1187 = vsel %vm1180, %v1184, %v1186
    %v1188 = vrot.slane %v802, 2
    %v1189 = vsel %vm1180, %v1186, %v1188
    %v1190 = vrot.slane %v804, 2
    %v1191 = vsel %vm1180, %v1188, %v1190
    %v1192 = vrot.slane %v806, 2
    %v1193 = vsel %vm1180, %v1190, %v1192
    %v1194 = vrot.slane %v808, 2
    %v1195 = vsel %vm1180, %v1192, %v1194
    %v1196 = vrot.slane %v810, 2
    %v1197 = vsel %vm1180, %v1194, %v1196
    %v1198 = vrot.slane %v812, 2
    %v1199 = vsel %vm1180, %v1196, %v1198
    %v1200 = vrot.slane %v814, 2
    %v1201 = vsel %vm1180, %v1198, %v1200
    %v1202 = vrot.slane %v816, 2
    %v1203 = vsel %vm1180, %v1200, %v1202
    %v1204 = vrot.slane %v818, 2
    %v1205 = vsel %vm1180, %v1202, %v1204
    %v1206 = vrot.slane %v820, 2
    %v1207 = vrot.slane %v822, 2
    %v1208 = vsel %vm1180, %v1206, %v1207
    %v1209 = vrot.slane %v824, 2
    %v1210 = vsel %vm1180, %v1207, %v1209
    %v1211 = vrot.slane %v826, 2
    %v1212 = vsel %vm1180, %v1209, %v1211
    %v1213 = vrot.slane %v828, 2
    %v1214 = vsel %vm1180, %v1211, %v1213
    %v1215 = vrot.slane %v830, 2
    %v1216 = vsel %vm1180, %v1213, %v1215
    %v1217 = vrot.slane %v832, 2
    %v1218 = vsel %vm1180, %v1215, %v1217
    %v1219 = vrot.slane %v834, 2
    %v1220 = vsel %vm1180, %v1217, %v1219
    %v1221 = vrot.slane %v836, 2
    %v1222 = vsel %vm1180, %v1219, %v1221
    %v1223 = vrot.slane %v838, 2
    %v1224 = vsel %vm1180, %v1221, %v1223
    %v1225 = vrot.slane %v840, 2
    %v1226 = vsel %vm1180, %v1223, %v1225
    %v1227 = vrot.slane %v842, 2
    %v1228 = vsel %vm1180, %v1225, %v1227
    %v1229 = vrot.slane %v844, 2
    %v1230 = vsel %vm1180, %v1227, %v1229
    %v1257 = vmax.f32 %v1154, %v1183
    %v1258 = vmax.f32 %v1155, %v1185
    %v1259 = vmax.f32 %v1156, %v1187
    %v1260 = vmax.f32 %v1157, %v1189
    %v1261 = vmax.f32 %v1158, %v1191
    %v1262 = vmax.f32 %v1159, %v1193
    %v1263 = vmax.f32 %v1160, %v1195
    %v1264 = vmax.f32 %v1161, %v1197
    %v1265 = vmax.f32 %v1162, %v1199
    %v1266 = vmax.f32 %v1163, %v1201
    %v1267 = vmax.f32 %v1164, %v1203
    %v1268 = vmax.f32 %v1165, %v1205
    %v1269 = vmax.f32 %v1166, %v1204
    %v1270 = vmax.f32 %v1167, %v1208
    %v1271 = vmax.f32 %v1168, %v1210
    %v1272 = vmax.f32 %v1169, %v1212
    %v1273 = vmax.f32 %v1170, %v1214
    %v1274 = vmax.f32 %v1171, %v1216
    %v1275 = vmax.f32 %v1172, %v1218
    %v1276 = vmax.f32 %v1173, %v1220
    %v1277 = vmax.f32 %v1174, %v1222
    %v1278 = vmax.f32 %v1175, %v1224
    %v1279 = vmax.f32 %v1176, %v1226
    %v1280 = vmax.f32 %v1177, %v1228
    %v1281 = vmax.f32 %v1178, %v1230
    %v1282 = vmax.f32 %v1179, %v1229
    %v1283 = vsel %vm324, %v1269, 0.0
    %v1284 = vsel %vm324, %v1282, 0.0
    %1285 = vst.msk [vmem:[#allocation3] sm:$0xff] %vm741, %v1257
    %1286 = vst.msk [vmem:[#allocation3 + $0x8] sm:$0xff] %vm741, %v1258
    %1287 = vst.msk [vmem:[#allocation3 + $0x10] sm:$0xff] %vm741, %v1259
    %1288 = vst.msk [vmem:[#allocation3 + $0x18] sm:$0xff] %vm741, %v1260
    %1289 = vst.msk [vmem:[#allocation3 + $0x20] sm:$0xff] %vm741, %v1261
    %1290 = vst.msk [vmem:[#allocation3 + $0x28] sm:$0xff] %vm741, %v1262
    %1291 = vst.msk [vmem:[#allocation3 + $0x30] sm:$0xff] %vm741, %v1263
    %1292 = vst.msk [vmem:[#allocation3 + $0x38] sm:$0xff] %vm741, %v1264
    %1293 = vst.msk [vmem:[#allocation3 + $0x40] sm:$0xff] %vm741, %v1265
    %1294 = vst.msk [vmem:[#allocation3 + $0x48] sm:$0xff] %vm741, %v1266
    %1295 = vst.msk [vmem:[#allocation3 + $0x50] sm:$0xff] %vm741, %v1267
    %1296 = vst.msk [vmem:[#allocation3 + $0x58] sm:$0xff] %vm741, %v1268
    %1297 = vst.msk [vmem:[#allocation3 + $0x60] sm:$0xff] %vm741, %v1283
    %1298 = vst.msk [vmem:[#allocation3 + $0x68] sm:$0xff] %vm741, 0.0
    %1299 = vst.msk [vmem:[#allocation3 + $0x70] sm:$0xff] %vm741, %v1270
    %1300 = vst.msk [vmem:[#allocation3 + $0x78] sm:$0xff] %vm741, %v1271
    %1301 = vst.msk [vmem:[#allocation3 + $0x80] sm:$0xff] %vm741, %v1272
    %1302 = vst.msk [vmem:[#allocation3 + $0x88] sm:$0xff] %vm741, %v1273
    %1303 = vst.msk [vmem:[#allocation3 + $0x90] sm:$0xff] %vm741, %v1274
    %1304 = vst.msk [vmem:[#allocation3 + $0x98] sm:$0xff] %vm741, %v1275
    %1305 = vst.msk [vmem:[#allocation3 + $0xa0] sm:$0xff] %vm741, %v1276
    %1306 = vst.msk [vmem:[#allocation3 + $0xa8] sm:$0xff] %vm741, %v1277
    %1307 = vst.msk [vmem:[#allocation3 + $0xb0] sm:$0xff] %vm741, %v1278
    %1308 = vst.msk [vmem:[#allocation3 + $0xb8] sm:$0xff] %vm741, %v1279
    %1309 = vst.msk [vmem:[#allocation3 + $0xc0] sm:$0xff] %vm741, %v1280
    %1310 = vst.msk [vmem:[#allocation3 + $0xc8] sm:$0xff] %vm741, %v1281
    %1311 = vst.msk [vmem:[#allocation3 + $0xd0] sm:$0xff] %vm741, %v1284
    %1312 = vst.msk [vmem:[#allocation3 + $0xd8] sm:$0xff] %vm741, 0.0
    %v1313 = vld [vmem:[#allocation3] ss:$2 sm:$0xff]
    %s1314 = scalar_lea.vmem [#allocation3], 16
    %v1315 = vld [vmem:[%s1314] ss:$2 sm:$0xff]
    %s1316 = scalar_lea.vmem [#allocation3], 32
    %v1317 = vld [vmem:[%s1316] ss:$2 sm:$0xff]
    %s1318 = scalar_lea.vmem [#allocation3], 48
    %v1319 = vld [vmem:[%s1318] ss:$2 sm:$0xff]
    %s1320 = scalar_lea.vmem [#allocation3], 64
    %v1321 = vld [vmem:[%s1320] ss:$2 sm:$0xff]
    %s1322 = scalar_lea.vmem [#allocation3], 80
    %v1323 = vld [vmem:[%s1322] ss:$2 sm:$0xff]
    %s1324 = scalar_lea.vmem [#allocation3], 96
    %v1325 = vld [vmem:[%s1324] ss:$2 sm:$0xff]
    %s1326 = scalar_lea.vmem [#allocation3], 112
    %v1327 = vld [vmem:[%s1326] ss:$2 sm:$0xff]
    %s1328 = scalar_lea.vmem [#allocation3], 128
    %v1329 = vld [vmem:[%s1328] ss:$2 sm:$0xff]
    %s1330 = scalar_lea.vmem [#allocation3], 144
    %v1331 = vld [vmem:[%s1330] ss:$2 sm:$0xff]
    %s1332 = scalar_lea.vmem [#allocation3], 160
    %v1333 = vld [vmem:[%s1332] ss:$2 sm:$0xff]
    %s1334 = scalar_lea.vmem [#allocation3], 176
    %v1335 = vld [vmem:[%s1334] ss:$2 sm:$0xff]
    %s1336 = scalar_lea.vmem [#allocation3], 192
    %v1337 = vld [vmem:[%s1336] ss:$2 sm:$0xff]
    %s1338 = scalar_lea.vmem [#allocation3], 208
    %v1339 = vld [vmem:[%s1338] ss:$2 sm:$0xff]
    %s1340 = scalar_lea.vmem [#allocation3], 1
    %v1341 = vld [vmem:[%s1340] ss:$2 sm:$0xff]
    %s1342 = scalar_lea.vmem [#allocation3], 17
    %v1343 = vld [vmem:[%s1342] ss:$2 sm:$0xff]
    %s1344 = scalar_lea.vmem [#allocation3], 33
    %v1345 = vld [vmem:[%s1344] ss:$2 sm:$0xff]
    %s1346 = scalar_lea.vmem [#allocation3], 49
    %v1347 = vld [vmem:[%s1346] ss:$2 sm:$0xff]
    %s1348 = scalar_lea.vmem [#allocation3], 65
    %v1349 = vld [vmem:[%s1348] ss:$2 sm:$0xff]
    %s1350 = scalar_lea.vmem [#allocation3], 81
    %v1351 = vld [vmem:[%s1350] ss:$2 sm:$0xff]
    %s1352 = scalar_lea.vmem [#allocation3], 97
    %v1353 = vld [vmem:[%s1352] ss:$2 sm:$0xff]
    %s1354 = scalar_lea.vmem [#allocation3], 113
    %v1355 = vld [vmem:[%s1354] ss:$2 sm:$0xff]
    %s1356 = scalar_lea.vmem [#allocation3], 129
    %v1357 = vld [vmem:[%s1356] ss:$2 sm:$0xff]
    %s1358 = scalar_lea.vmem [#allocation3], 145
    %v1359 = vld [vmem:[%s1358] ss:$2 sm:$0xff]
    %s1360 = scalar_lea.vmem [#allocation3], 161
    %v1361 = vld [vmem:[%s1360] ss:$2 sm:$0xff]
    %s1362 = scalar_lea.vmem [#allocation3], 177
    %v1363 = vld [vmem:[%s1362] ss:$2 sm:$0xff]
    %s1364 = scalar_lea.vmem [#allocation3], 193
    %v1365 = vld [vmem:[%s1364] ss:$2 sm:$0xff]
    %s1366 = scalar_lea.vmem [#allocation3], 209
    %v1367 = vld [vmem:[%s1366] ss:$2 sm:$0xff]
    %1380 = vrot.lane.b32.xlu0 %v1341, 16
    %v1381 = vpop.permute.xlu0 %1380
    %1382 = vrot.lane.b32.xlu0 %v1343, 16
    %v1383 = vpop.permute.xlu0 %1382
    %1384 = vrot.lane.b32.xlu0 %v1345, 16
    %v1385 = vpop.permute.xlu0 %1384
    %1386 = vrot.lane.b32.xlu0 %v1347, 16
    %v1387 = vpop.permute.xlu0 %1386
    %1388 = vrot.lane.b32.xlu0 %v1349, 16
    %v1389 = vpop.permute.xlu0 %1388
    %1390 = vrot.lane.b32.xlu0 %v1351, 16
    %v1391 = vpop.permute.xlu0 %1390
    %1392 = vrot.lane.b32.xlu0 %v1355, 16
    %v1393 = vpop.permute.xlu0 %1392
    %1394 = vrot.lane.b32.xlu0 %v1357, 16
    %v1395 = vpop.permute.xlu0 %1394
    %1396 = vrot.lane.b32.xlu0 %v1359, 16
    %v1397 = vpop.permute.xlu0 %1396
    %1398 = vrot.lane.b32.xlu0 %v1361, 16
    %v1399 = vpop.permute.xlu0 %1398
    %1400 = vrot.lane.b32.xlu0 %v1363, 16
    %v1401 = vpop.permute.xlu0 %1400
    %1402 = vrot.lane.b32.xlu0 %v1365, 16
    %v1403 = vpop.permute.xlu0 %1402
    %v1430 = vrot.slane %v1313, 1
    %v1431 = vrot.slane %v1315, 1
    %v1432 = vsel %vm949, %v1430, %v1431
    %v1433 = vrot.slane %v1317, 1
    %v1434 = vsel %vm949, %v1431, %v1433
    %v1435 = vrot.slane %v1319, 1
    %v1436 = vsel %vm949, %v1433, %v1435
    %v1437 = vrot.slane %v1321, 1
    %v1438 = vsel %vm949, %v1435, %v1437
    %v1439 = vrot.slane %v1323, 1
    %v1440 = vsel %vm949, %v1437, %v1439
    %v1441 = vrot.slane %v1325, 1
    %v1442 = vsel %vm949, %v1439, %v1441
    %v1443 = vrot.slane %v1327, 1
    %v1444 = vrot.slane %v1329, 1
    %v1445 = vsel %vm949, %v1443, %v1444
    %v1446 = vrot.slane %v1331, 1
    %v1447 = vsel %vm949, %v1444, %v1446
    %v1448 = vrot.slane %v1333, 1
    %v1449 = vsel %vm949, %v1446, %v1448
    %v1450 = vrot.slane %v1335, 1
    %v1451 = vsel %vm949, %v1448, %v1450
    %v1452 = vrot.slane %v1337, 1
    %v1453 = vsel %vm949, %v1450, %v1452
    %v1454 = vrot.slane %v1339, 1
    %v1455 = vsel %vm949, %v1452, %v1454
    %1456 = vrot.lane.b32.xlu0 %v1432, 32
    %v1457 = vpop.permute.xlu0 %1456
    %1458 = vrot.lane.b32.xlu0 %v1434, 32
    %v1459 = vpop.permute.xlu0 %1458
    %1460 = vrot.lane.b32.xlu0 %v1436, 32
    %v1461 = vpop.permute.xlu0 %1460
    %1462 = vrot.lane.b32.xlu0 %v1438, 32
    %v1463 = vpop.permute.xlu0 %1462
    %1464 = vrot.lane.b32.xlu0 %v1440, 32
    %v1465 = vpop.permute.xlu0 %1464
    %1466 = vrot.lane.b32.xlu0 %v1442, 32
    %v1467 = vpop.permute.xlu0 %1466
    %1468 = vrot.lane.b32.xlu0 %v1445, 32
    %v1469 = vpop.permute.xlu0 %1468
    %1470 = vrot.lane.b32.xlu0 %v1447, 32
    %v1471 = vpop.permute.xlu0 %1470
    %1472 = vrot.lane.b32.xlu0 %v1449, 32
    %v1473 = vpop.permute.xlu0 %1472
    %1474 = vrot.lane.b32.xlu0 %v1451, 32
    %v1475 = vpop.permute.xlu0 %1474
    %1476 = vrot.lane.b32.xlu0 %v1453, 32
    %v1477 = vpop.permute.xlu0 %1476
    %1478 = vrot.lane.b32.xlu0 %v1455, 32
    %v1479 = vpop.permute.xlu0 %1478
    %v1494 = vrot.slane %v1341, 1
    %v1495 = vrot.slane %v1343, 1
    %v1496 = vsel %vm949, %v1494, %v1495
    %v1497 = vrot.slane %v1345, 1
    %v1498 = vsel %vm949, %v1495, %v1497
    %v1499 = vrot.slane %v1347, 1
    %v1500 = vsel %vm949, %v1497, %v1499
    %v1501 = vrot.slane %v1349, 1
    %v1502 = vsel %vm949, %v1499, %v1501
    %v1503 = vrot.slane %v1351, 1
    %v1504 = vsel %vm949, %v1501, %v1503
    %v1505 = vrot.slane %v1353, 1
    %v1506 = vsel %vm949, %v1503, %v1505
    %v1507 = vrot.slane %v1355, 1
    %v1508 = vrot.slane %v1357, 1
    %v1509 = vsel %vm949, %v1507, %v1508
    %v1510 = vrot.slane %v1359, 1
    %v1511 = vsel %vm949, %v1508, %v1510
    %v1512 = vrot.slane %v1361, 1
    %v1513 = vsel %vm949, %v1510, %v1512
    %v1514 = vrot.slane %v1363, 1
    %v1515 = vsel %vm949, %v1512, %v1514
    %v1516 = vrot.slane %v1365, 1
    %v1517 = vsel %vm949, %v1514, %v1516
    %v1518 = vrot.slane %v1367, 1
    %v1519 = vsel %vm949, %v1516, %v1518
    %1520 = vrot.lane.b32.xlu0 %v1496, 48
    %v1521 = vpop.permute.xlu0 %1520
    %1522 = vrot.lane.b32.xlu0 %v1498, 48
    %v1523 = vpop.permute.xlu0 %1522
    %1524 = vrot.lane.b32.xlu0 %v1500, 48
    %v1525 = vpop.permute.xlu0 %1524
    %1526 = vrot.lane.b32.xlu0 %v1502, 48
    %v1527 = vpop.permute.xlu0 %1526
    %1528 = vrot.lane.b32.xlu0 %v1504, 48
    %v1529 = vpop.permute.xlu0 %1528
    %1530 = vrot.lane.b32.xlu0 %v1506, 48
    %v1531 = vpop.permute.xlu0 %1530
    %1532 = vrot.lane.b32.xlu0 %v1509, 48
    %v1533 = vpop.permute.xlu0 %1532
    %1534 = vrot.lane.b32.xlu0 %v1511, 48
    %v1535 = vpop.permute.xlu0 %1534
    %1536 = vrot.lane.b32.xlu0 %v1513, 48
    %v1537 = vpop.permute.xlu0 %1536
    %1538 = vrot.lane.b32.xlu0 %v1515, 48
    %v1539 = vpop.permute.xlu0 %1538
    %1540 = vrot.lane.b32.xlu0 %v1517, 48
    %v1541 = vpop.permute.xlu0 %1540
    %1542 = vrot.lane.b32.xlu0 %v1519, 48
    %v1543 = vpop.permute.xlu0 %1542
    %v1556 = vrot.slane %v1313, 2
    %v1557 = vrot.slane %v1315, 2
    %v1558 = vsel %vm1180, %v1556, %v1557
    %v1559 = vrot.slane %v1317, 2
    %v1560 = vsel %vm1180, %v1557, %v1559
    %v1561 = vrot.slane %v1319, 2
    %v1562 = vsel %vm1180, %v1559, %v1561
    %v1563 = vrot.slane %v1321, 2
    %v1564 = vsel %vm1180, %v1561, %v1563
    %v1565 = vrot.slane %v1323, 2
    %v1566 = vsel %vm1180, %v1563, %v1565
    %v1567 = vrot.slane %v1325, 2
    %v1568 = vsel %vm1180, %v1565, %v1567
    %v1569 = vrot.slane %v1327, 2
    %v1570 = vrot.slane %v1329, 2
    %v1571 = vsel %vm1180, %v1569, %v1570
    %v1572 = vrot.slane %v1331, 2
    %v1573 = vsel %vm1180, %v1570, %v1572
    %v1574 = vrot.slane %v1333, 2
    %v1575 = vsel %vm1180, %v1572, %v1574
    %v1576 = vrot.slane %v1335, 2
    %v1577 = vsel %vm1180, %v1574, %v1576
    %v1578 = vrot.slane %v1337, 2
    %v1579 = vsel %vm1180, %v1576, %v1578
    %v1580 = vrot.slane %v1339, 2
    %v1581 = vsel %vm1180, %v1578, %v1580
    %1582 = vrot.lane.b32.xlu0 %v1558, 64
    %v1583 = vpop.permute.xlu0 %1582
    %1584 = vrot.lane.b32.xlu0 %v1560, 64
    %v1585 = vpop.permute.xlu0 %1584
    %1586 = vrot.lane.b32.xlu0 %v1562, 64
    %v1587 = vpop.permute.xlu0 %1586
    %1588 = vrot.lane.b32.xlu0 %v1564, 64
    %v1589 = vpop.permute.xlu0 %1588
    %1590 = vrot.lane.b32.xlu0 %v1566, 64
    %v1591 = vpop.permute.xlu0 %1590
    %1592 = vrot.lane.b32.xlu0 %v1568, 64
    %v1593 = vpop.permute.xlu0 %1592
    %1594 = vrot.lane.b32.xlu0 %v1571, 64
    %v1595 = vpop.permute.xlu0 %1594
    %1596 = vrot.lane.b32.xlu0 %v1573, 64
    %v1597 = vpop.permute.xlu0 %1596
    %1598 = vrot.lane.b32.xlu0 %v1575, 64
    %v1599 = vpop.permute.xlu0 %1598
    %1600 = vrot.lane.b32.xlu0 %v1577, 64
    %v1601 = vpop.permute.xlu0 %1600
    %1602 = vrot.lane.b32.xlu0 %v1579, 64
    %v1603 = vpop.permute.xlu0 %1602
    %1604 = vrot.lane.b32.xlu0 %v1581, 64
    %v1605 = vpop.permute.xlu0 %1604
    %v1618 = vsel %vm741, %v1313, %v1381
    %v1619 = vsel %vm741, %v1315, %v1383
    %v1620 = vsel %vm741, %v1317, %v1385
    %v1621 = vsel %vm741, %v1319, %v1387
    %v1622 = vsel %vm741, %v1321, %v1389
    %v1623 = vsel %vm741, %v1323, %v1391
    %v1624 = vsel %vm741, %v1327, %v1393
    %v1625 = vsel %vm741, %v1329, %v1395
    %v1626 = vsel %vm741, %v1331, %v1397
    %v1627 = vsel %vm741, %v1333, %v1399
    %v1628 = vsel %vm741, %v1335, %v1401
    %v1629 = vsel %vm741, %v1337, %v1403
    %vm1630 = vcmask 261120
    %v1631 = vsel %vm1630, %v1618, %v1457
    %v1632 = vsel %vm1630, %v1619, %v1459
    %v1633 = vsel %vm1630, %v1620, %v1461
    %v1634 = vsel %vm1630, %v1621, %v1463
    %v1635 = vsel %vm1630, %v1622, %v1465
    %v1636 = vsel %vm1630, %v1623, %v1467
    %v1637 = vsel %vm1630, %v1624, %v1469
    %v1638 = vsel %vm1630, %v1625, %v1471
    %v1639 = vsel %vm1630, %v1626, %v1473
    %v1640 = vsel %vm1630, %v1627, %v1475
    %v1641 = vsel %vm1630, %v1628, %v1477
    %v1642 = vsel %vm1630, %v1629, %v1479
    %vm1643 = vcmask 392192
    %v1644 = vsel %vm1643, %v1631, %v1521
    %v1645 = vsel %vm1643, %v1632, %v1523
    %v1646 = vsel %vm1643, %v1633, %v1525
    %v1647 = vsel %vm1643, %v1634, %v1527
    %v1648 = vsel %vm1643, %v1635, %v1529
    %v1649 = vsel %vm1643, %v1636, %v1531
    %v1650 = vsel %vm1643, %v1637, %v1533
    %v1651 = vsel %vm1643, %v1638, %v1535
    %v1652 = vsel %vm1643, %v1639, %v1537
    %v1653 = vsel %vm1643, %v1640, %v1539
    %v1654 = vsel %vm1643, %v1641, %v1541
    %v1655 = vsel %vm1643, %v1642, %v1543
    %vm1656 = vcmask 523264
    %v1657 = vsel %vm1656, %v1644, %v1583
    %v1658 = vsel %vm1656, %v1645, %v1585
    %v1659 = vsel %vm1656, %v1646, %v1587
    %v1660 = vsel %vm1656, %v1647, %v1589
    %v1661 = vsel %vm1656, %v1648, %v1591
    %v1662 = vsel %vm1656, %v1649, %v1593
    %v1663 = vsel %vm1656, %v1650, %v1595
    %v1664 = vsel %vm1656, %v1651, %v1597
    %v1665 = vsel %vm1656, %v1652, %v1599
    %v1666 = vsel %vm1656, %v1653, %v1601
    %v1667 = vsel %vm1656, %v1654, %v1603
    %v1668 = vsel %vm1656, %v1655, %v1605
    %v1669 = vpack.c.bf16 %v1658, %v1657
    %v1670 = vpack.c.bf16 %v1660, %v1659
    %v1671 = vpack.c.bf16 %v1662, %v1661
    %v1672 = vpack.c.bf16 %v1664, %v1663
    %v1673 = vpack.c.bf16 %v1666, %v1665
    %v1674 = vpack.c.bf16 %v1668, %v1667
    %v1675 = vld [vmem:[%s4] sm:$0xf]
    %v1676 = vld [vmem:[%s4 + $0x4] sm:$0xf]
    %v1677 = vld [vmem:[%s4 + $0x8] sm:$0xf]
    %v1678 = vld [vmem:[%s4 + $0xc] sm:$0xf]
    %v1679 = vld [vmem:[%s4 + $0x10] sm:$0xf]
    %v1680 = vld [vmem:[%s4 + $0x14] sm:$0xf]
    %v1681 = vld [vmem:[%s4 + $0x18] sm:$0xf]
    %v1682 = vld [vmem:[%s4 + $0x1c] sm:$0xf]
    %v1683 = vld [vmem:[%s4 + $0x20] sm:$0xf]
    %v1684 = vld [vmem:[%s4 + $0x24] sm:$0xf]
    %v1695 = vunpack.c.l.b16 %v1675
    %v1696 = vunpack.c.l.b16 %v1676
    %v1697 = vunpack.c.l.b16 %v1677
    %v1698 = vunpack.c.l.b16 %v1678
    %v1699 = vunpack.c.l.b16 %v1679
    %v1700 = vunpack.c.l.b16 %v1680
    %v1701 = vunpack.c.l.b16 %v1681
    %v1702 = vunpack.c.l.b16 %v1682
    %v1703 = vunpack.c.l.b16 %v1683
    %v1704 = vunpack.c.l.b16 %v1684
    %v1705 = vpack.c.b16 %v1696, %v1695
    %v1706 = vpack.c.b16 %v1698, %v1697
    %v1707 = vpack.c.b16 %v1700, %v1699
    %v1708 = vpack.c.b16 %v1702, %v1701
    %v1709 = vpack.c.b16 %v1704, %v1703
    %vm1715 = vcmask 654336
    %v1717 = vsel %vm1715, %v1669, 0
    %v1720 = vsel %vm1715, %v1670, 0
    %v1723 = vsel %vm1715, %v1671, 0
    %v1726 = vsel %vm1715, %v1672, 0
    %v1729 = vsel %vm1715, %v1673, 0
    %v1732 = vsel %vm1715, %v1674, 0
    %1734 = vmatprep.subr.bf16.mxu0 0
    %1735 = vmatpush1.bf16.msra.mxu0 0
    %1736 = vmatprep.subr.bf16.mxu0 0
    %1737 = vmatpush1.bf16.msra.mxu0 0
    %1738 = vmatprep.subr.bf16.mxu0 0
    %1739 = vmatpush1.bf16.msra.mxu0 0
    %1740 = vmatprep.subr.bf16.mxu0 0
    %1741 = vmatpush1.bf16.msra.mxu0 %v1709
    %1742 = vmatprep.subr.bf16.mxu0 0
    %1743 = vmatpush1.bf16.msra.mxu0 %v1708
    %1744 = vmatprep.subr.bf16.mxu0 0
    %1745 = vmatpush1.bf16.msra.mxu0 %v1707
    %1746 = vmatprep.subr.bf16.mxu0 0
    %1747 = vmatpush1.bf16.msra.mxu0 %v1706
    %1748 = vmatprep.subr.bf16.mxu0 0
    %1749 = vmatpush1.bf16.msra.mxu0 %v1705
    %1750 = vmatprep.subr.bf16.mxu0 0
    %1751 = vmatpush2.bf16.msra.mxu0 0
    %1752 = vmatprep.subr.bf16.mxu0 0
    %1753 = vmatpush2.bf16.msra.mxu0 0
    %1754 = vmatprep.subr.bf16.mxu0 0
    %1755 = vmatpush2.bf16.msra.mxu0 0
    %1756 = vmatprep.subr.bf16.mxu0 0
    %1757 = vmatpush2.bf16.msra.mxu0 0
    %1758 = vmatprep.subr.bf16.mxu0 0
    %1759 = vmatpush2.bf16.msra.mxu0 0
    %1760 = vmatprep.subr.bf16.mxu0 0
    %1761 = vmatpush2.bf16.msra.mxu0 0
    %1762 = vmatprep.subr.bf16.mxu0 0
    %1763 = vmatpush2.bf16.msra.mxu0 0
    %1764 = vmatprep.subr.bf16.mxu0 0
    %1765 = vmatpush2.bf16.msra.mxu0 0
    %1766 = vmatprep.mubr.bf16.mxu0 0
    %1767 = vmatmul.mubr.bf16.gmra.mxu0 %v1717
    %v1768 = vpop.f32.mrf.mxu0
    %v1769 = vadd.f32 0.0, %v1768
    %v1770 = vpop.f32.mrf.mxu0
    %v1771 = vpop.f32.mrf.mxu0
    %v1772 = vadd.f32 0.0, %v1771
    %v1773 = vpop.f32.mrf.mxu0
    %1774 = vmatprep.mubr.bf16.mxu0 0
    %1775 = vmatmul.mubr.bf16.gmra.mxu0 %v1720
    %v1776 = vpop.f32.mrf.mxu0
    %v1777 = vadd.f32 0.0, %v1776
    %v1778 = vpop.f32.mrf.mxu0
    %v1779 = vpop.f32.mrf.mxu0
    %v1780 = vadd.f32 0.0, %v1779
    %v1781 = vpop.f32.mrf.mxu0
    %1782 = vmatprep.mubr.bf16.mxu0 0
    %1783 = vmatmul.mubr.bf16.gmra.mxu0 %v1723
    %v1784 = vpop.f32.mrf.mxu0
    %v1785 = vadd.f32 0.0, %v1784
    %v1786 = vpop.f32.mrf.mxu0
    %v1787 = vpop.f32.mrf.mxu0
    %v1788 = vadd.f32 0.0, %v1787
    %v1789 = vpop.f32.mrf.mxu0
    %1790 = vmatprep.mubr.bf16.mxu0 0
    %1791 = vmatmul.mubr.bf16.gmra.mxu0 %v1726
    %v1792 = vpop.f32.mrf.mxu0
    %v1793 = vadd.f32 0.0, %v1792
    %v1794 = vpop.f32.mrf.mxu0
    %v1795 = vpop.f32.mrf.mxu0
    %v1796 = vadd.f32 0.0, %v1795
    %v1797 = vpop.f32.mrf.mxu0
    %1798 = vmatprep.mubr.bf16.mxu0 0
    %1799 = vmatmul.mubr.bf16.gmra.mxu0 %v1729
    %v1800 = vpop.f32.mrf.mxu0
    %v1801 = vadd.f32 0.0, %v1800
    %v1802 = vpop.f32.mrf.mxu0
    %v1803 = vpop.f32.mrf.mxu0
    %v1804 = vadd.f32 0.0, %v1803
    %v1805 = vpop.f32.mrf.mxu0
    %1806 = vmatprep.mubr.bf16.mxu0 0
    %1807 = vmatmul.mubr.bf16.gmra.mxu0 %v1732
    %v1808 = vpop.f32.mrf.mxu0
    %v1809 = vadd.f32 0.0, %v1808
    %v1810 = vpop.f32.mrf.mxu0
    %v1811 = vpop.f32.mrf.mxu0
    %v1812 = vadd.f32 0.0, %v1811
    %v1813 = vpop.f32.mrf.mxu0
    %1814 = vdwg.mxu0
    %v1815 = vld [vmem:[%s5] sm:$0x1]
    %v1817 = vlaneseq
    %v1818 = vshrl.u32 %v1817, 7
    %v1819 = vsub.s32 0, %v1818
    %v1820 = vrot.slane %v1815, %v1819
    %v1822 = vmul.f32 %v1769, %v1820
    %v1823 = vmul.f32 %v1772, %v1820
    %v1824 = vmul.f32 %v1777, %v1820
    %v1825 = vmul.f32 %v1780, %v1820
    %v1826 = vmul.f32 %v1785, %v1820
    %v1827 = vmul.f32 %v1788, %v1820
    %v1828 = vmul.f32 %v1793, %v1820
    %v1829 = vmul.f32 %v1796, %v1820
    %v1830 = vmul.f32 %v1801, %v1820
    %v1831 = vmul.f32 %v1804, %v1820
    %v1832 = vmul.f32 %v1809, %v1820
    %v1833 = vmul.f32 %v1812, %v1820
    %v1834 = vld [vmem:[%s6] sm:$0x1]
    %v1836 = vlaneseq
    %v1837 = vshrl.u32 %v1836, 7
    %v1838 = vsub.s32 0, %v1837
    %v1839 = vrot.slane %v1834, %v1838
    %v1841 = vadd.f32 %v1822, %v1839
    %v1842 = vadd.f32 %v1823, %v1839
    %v1843 = vadd.f32 %v1824, %v1839
    %v1844 = vadd.f32 %v1825, %v1839
    %v1845 = vadd.f32 %v1826, %v1839
    %v1846 = vadd.f32 %v1827, %v1839
    %v1847 = vadd.f32 %v1828, %v1839
    %v1848 = vadd.f32 %v1829, %v1839
    %v1849 = vadd.f32 %v1830, %v1839
    %v1850 = vadd.f32 %v1831, %v1839
    %v1851 = vadd.f32 %v1832, %v1839
    %v1852 = vadd.f32 %v1833, %v1839
    %v1853 = vmax.f32 %v1841, 0.0
    %v1854 = vmax.f32 %v1842, 0.0
    %v1855 = vmax.f32 %v1843, 0.0
    %v1856 = vmax.f32 %v1844, 0.0
    %v1857 = vmax.f32 %v1845, 0.0
    %v1858 = vmax.f32 %v1846, 0.0
    %v1859 = vmax.f32 %v1847, 0.0
    %v1860 = vmax.f32 %v1848, 0.0
    %v1861 = vmax.f32 %v1849, 0.0
    %v1862 = vmax.f32 %v1850, 0.0
    %v1863 = vmax.f32 %v1851, 0.0
    %v1864 = vmax.f32 %v1852, 0.0
    %1865 = vst.msk [vmem:[#allocation4] sm:$0xff] %vm1630, %v1853
    %1866 = vst.msk [vmem:[#allocation4 + $0x8] sm:$0xff] %vm1630, %v1854
    %1867 = vst.msk [vmem:[#allocation4 + $0x10] sm:$0xff] %vm1630, %v1855
    %1868 = vst.msk [vmem:[#allocation4 + $0x18] sm:$0xff] %vm1630, %v1856
    %1869 = vst.msk [vmem:[#allocation4 + $0x20] sm:$0xff] %vm1630, %v1857
    %1870 = vst.msk [vmem:[#allocation4 + $0x28] sm:$0xff] %vm1630, %v1858
    %1871 = vst.msk [vmem:[#allocation4 + $0x30] sm:$0xff] %vm1630, %v1859
    %1872 = vst.msk [vmem:[#allocation4 + $0x38] sm:$0xff] %vm1630, %v1860
    %1873 = vst.msk [vmem:[#allocation4 + $0x40] sm:$0xff] %vm1630, %v1861
    %1874 = vst.msk [vmem:[#allocation4 + $0x48] sm:$0xff] %vm1630, %v1862
    %1875 = vst.msk [vmem:[#allocation4 + $0x50] sm:$0xff] %vm1630, %v1863
    %1876 = vst.msk [vmem:[#allocation4 + $0x58] sm:$0xff] %vm1630, %v1864
    %v1877 = vld [vmem:[#allocation4] ss:$2 sm:$0xff]
    %s1878 = scalar_lea.vmem [#allocation4], 16
    %v1879 = vld [vmem:[%s1878] ss:$2 sm:$0xff]
    %s1880 = scalar_lea.vmem [#allocation4], 32
    %v1881 = vld [vmem:[%s1880] ss:$2 sm:$0xff]
    %s1882 = scalar_lea.vmem [#allocation4], 48
    %v1883 = vld [vmem:[%s1882] ss:$2 sm:$0xff]
    %s1884 = scalar_lea.vmem [#allocation4], 64
    %v1885 = vld [vmem:[%s1884] ss:$2 sm:$0xff]
    %s1886 = scalar_lea.vmem [#allocation4], 80
    %v1887 = vld [vmem:[%s1886] ss:$2 sm:$0xff]
    %s1888 = scalar_lea.vmem [#allocation4], 1
    %v1889 = vld [vmem:[%s1888] ss:$2 sm:$0xff]
    %s1890 = scalar_lea.vmem [#allocation4], 17
    %v1891 = vld [vmem:[%s1890] ss:$2 sm:$0xff]
    %s1892 = scalar_lea.vmem [#allocation4], 33
    %v1893 = vld [vmem:[%s1892] ss:$2 sm:$0xff]
    %s1894 = scalar_lea.vmem [#allocation4], 49
    %v1895 = vld [vmem:[%s1894] ss:$2 sm:$0xff]
    %s1896 = scalar_lea.vmem [#allocation4], 65
    %v1897 = vld [vmem:[%s1896] ss:$2 sm:$0xff]
    %s1898 = scalar_lea.vmem [#allocation4], 81
    %v1899 = vld [vmem:[%s1898] ss:$2 sm:$0xff]
    %v1900 = vmax.f32 %v1877, %v1889
    %v1901 = vmax.f32 %v1879, %v1891
    %v1902 = vmax.f32 %v1881, %v1893
    %v1903 = vmax.f32 %v1883, %v1895
    %v1904 = vmax.f32 %v1885, %v1897
    %v1905 = vmax.f32 %v1887, %v1899
    %v1912 = vrot.slane %v1877, 1
    %v1913 = vrot.slane %v1879, 1
    %v1914 = vsel %vm949, %v1912, %v1913
    %v1915 = vrot.slane %v1881, 1
    %v1916 = vsel %vm949, %v1913, %v1915
    %v1917 = vrot.slane %v1883, 1
    %v1918 = vrot.slane %v1885, 1
    %v1919 = vsel %vm949, %v1917, %v1918
    %v1920 = vrot.slane %v1887, 1
    %v1921 = vsel %vm949, %v1918, %v1920
    %v1928 = vmax.f32 %v1900, %v1914
    %v1929 = vmax.f32 %v1901, %v1916
    %v1930 = vmax.f32 %v1902, %v1915
    %v1931 = vmax.f32 %v1903, %v1919
    %v1932 = vmax.f32 %v1904, %v1921
    %v1933 = vmax.f32 %v1905, %v1920
    %v1934 = vsel %vm949, %v1930, 0.0
    %v1935 = vsel %vm949, %v1933, 0.0
    %v1943 = vrot.slane %v1928, 1
    %v1944 = vrot.slane %v1929, 1
    %v1945 = vsel %vm949, %v1943, %v1944
    %v1946 = vrot.slane %v1934, 1
    %v1947 = vsel %vm949, %v1944, %v1946
    %v1948 = vrot.slane 0.0, 1
    %v1949 = vsel %vm949, %v1946, %v1948
    %v1950 = vsel %vm949, %v1948, %v1948
    %v1951 = vrot.slane %v1931, 1
    %v1952 = vrot.slane %v1932, 1
    %v1953 = vsel %vm949, %v1951, %v1952
    %v1954 = vrot.slane %v1935, 1
    %v1955 = vsel %vm949, %v1952, %v1954
    %v1956 = vsel %vm949, %v1954, %v1948
    %1957 = vrot.lane.b32.xlu0 %v1945, 32
    %v1958 = vpop.permute.xlu0 %1957
    %1959 = vrot.lane.b32.xlu0 %v1947, 32
    %v1960 = vpop.permute.xlu0 %1959
    %1961 = vrot.lane.b32.xlu0 %v1949, 32
    %v1962 = vpop.permute.xlu0 %1961
    %1963 = vrot.lane.b32.xlu0 %v1950, 32
    %v1964 = vpop.permute.xlu0 %1963
    %1965 = vrot.lane.b32.xlu0 %v1953, 32
    %v1966 = vpop.permute.xlu0 %1965
    %1967 = vrot.lane.b32.xlu0 %v1955, 32
    %v1968 = vpop.permute.xlu0 %1967
    %1969 = vrot.lane.b32.xlu0 %v1956, 32
    %v1970 = vpop.permute.xlu0 %1969
    %v1978 = vrot.slane %v1928, 2
    %v1979 = vrot.slane %v1929, 2
    %v1980 = vsel %vm1180, %v1978, %v1979
    %v1981 = vrot.slane %v1934, 2
    %v1982 = vsel %vm1180, %v1979, %v1981
    %v1983 = vrot.slane 0.0, 2
    %v1984 = vsel %vm1180, %v1981, %v1983
    %v1985 = vsel %vm1180, %v1983, %v1983
    %v1986 = vrot.slane %v1931, 2
    %v1987 = vrot.slane %v1932, 2
    %v1988 = vsel %vm1180, %v1986, %v1987
    %v1989 = vrot.slane %v1935, 2
    %v1990 = vsel %vm1180, %v1987, %v1989
    %v1991 = vsel %vm1180, %v1989, %v1983
    %1992 = vrot.lane.b32.xlu0 %v1980, 64
    %v1993 = vpop.permute.xlu0 %1992
    %1994 = vrot.lane.b32.xlu0 %v1982, 64
    %v1995 = vpop.permute.xlu0 %1994
    %1996 = vrot.lane.b32.xlu0 %v1984, 64
    %v1997 = vpop.permute.xlu0 %1996
    %1998 = vrot.lane.b32.xlu0 %v1985, 64
    %v1999 = vpop.permute.xlu0 %1998
    %2000 = vrot.lane.b32.xlu0 %v1988, 64
    %v2001 = vpop.permute.xlu0 %2000
    %2002 = vrot.lane.b32.xlu0 %v1990, 64
    %v2003 = vpop.permute.xlu0 %2002
    %2004 = vrot.lane.b32.xlu0 %v1991, 64
    %v2005 = vpop.permute.xlu0 %2004
    %vm2013 = vcmask 1044480
    %v2014 = vrot.slane %v1928, 3
    %v2015 = vrot.slane %v1929, 3
    %v2016 = vsel %vm2013, %v2014, %v2015
    %v2017 = vrot.slane %v1934, 3
    %v2018 = vsel %vm2013, %v2015, %v2017
    %v2019 = vrot.slane 0.0, 3
    %v2020 = vsel %vm2013, %v2017, %v2019
    %v2021 = vsel %vm2013, %v2019, %v2019
    %v2022 = vrot.slane %v1931, 3
    %v2023 = vrot.slane %v1932, 3
    %v2024 = vsel %vm2013, %v2022, %v2023
    %v2025 = vrot.slane %v1935, 3
    %v2026 = vsel %vm2013, %v2023, %v2025
    %v2027 = vsel %vm2013, %v2025, %v2019
    %2028 = vrot.lane.b32.xlu0 %v2016, 96
    %v2029 = vpop.permute.xlu0 %2028
    %2030 = vrot.lane.b32.xlu0 %v2018, 96
    %v2031 = vpop.permute.xlu0 %2030
    %2032 = vrot.lane.b32.xlu0 %v2020, 96
    %v2033 = vpop.permute.xlu0 %2032
    %2034 = vrot.lane.b32.xlu0 %v2021, 96
    %v2035 = vpop.permute.xlu0 %2034
    %2036 = vrot.lane.b32.xlu0 %v2024, 96
    %v2037 = vpop.permute.xlu0 %2036
    %2038 = vrot.lane.b32.xlu0 %v2026, 96
    %v2039 = vpop.permute.xlu0 %2038
    %2040 = vrot.lane.b32.xlu0 %v2027, 96
    %v2041 = vpop.permute.xlu0 %2040
    %vm2049 = vcmask 1043456
    %v2050 = vrot.slane %v1928, 4
    %v2051 = vrot.slane %v1929, 4
    %v2052 = vsel %vm2049, %v2050, %v2051
    %v2053 = vrot.slane %v1934, 4
    %v2054 = vsel %vm2049, %v2051, %v2053
    %v2055 = vrot.slane 0.0, 4
    %v2056 = vsel %vm2049, %v2053, %v2055
    %v2057 = vsel %vm2049, %v2055, %v2055
    %v2058 = vrot.slane %v1931, 4
    %v2059 = vrot.slane %v1932, 4
    %v2060 = vsel %vm2049, %v2058, %v2059
    %v2061 = vrot.slane %v1935, 4
    %v2062 = vsel %vm2049, %v2059, %v2061
    %v2063 = vsel %vm2049, %v2061, %v2055
    %v2071 = vsel %vm1630, %v1928, %v1958
    %v2072 = vsel %vm1630, %v1929, %v1960
    %v2073 = vsel %vm1630, %v1934, %v1962
    %v2074 = vsel %vm1630, 0.0, %v1964
    %v2075 = vsel %vm1630, %v1931, %v1966
    %v2076 = vsel %vm1630, %v1932, %v1968
    %v2077 = vsel %vm1630, %v1935, %v1970
    %v2078 = vsel %vm1656, %v2071, %v1993
    %v2079 = vsel %vm1656, %v2072, %v1995
    %v2080 = vsel %vm1656, %v2073, %v1997
    %v2081 = vsel %vm1656, %v2074, %v1999
    %v2082 = vsel %vm1656, %v2075, %v2001
    %v2083 = vsel %vm1656, %v2076, %v2003
    %v2084 = vsel %vm1656, %v2077, %v2005
    %vm2085 = vcmask 785408
    %v2086 = vsel %vm2085, %v2078, %v2029
    %v2087 = vsel %vm2085, %v2079, %v2031
    %v2088 = vsel %vm2085, %v2080, %v2033
    %v2089 = vsel %vm2085, %v2081, %v2035
    %v2090 = vsel %vm2085, %v2082, %v2037
    %v2091 = vsel %vm2085, %v2083, %v2039
    %v2092 = vsel %vm2085, %v2084, %v2041
    %v2093 = vpack.c.bf16 %v2087, %v2086
    %v2094 = vpack.c.bf16 %v2054, %v2052
    %v2095 = vpack.c.bf16 %v2089, %v2088
    %v2096 = vpack.c.bf16 %v2057, %v2056
    %v2097 = vpack.c.bf16 %v2091, %v2090
    %v2098 = vpack.c.bf16 %v2062, %v2060
    %v2099 = vpack.c.bf16 %v2089, %v2092
    %v2100 = vpack.c.bf16 %v2057, %v2063
    %v2101 = vld [vmem:[%s7] sm:$0xf]
    %v2102 = vld [vmem:[%s7 + $0x4] sm:$0xf]
    %v2103 = vld [vmem:[%s7 + $0x8] sm:$0xf]
    %v2104 = vld [vmem:[%s7 + $0xc] sm:$0xf]
    %v2105 = vld [vmem:[%s7 + $0x10] sm:$0xf]
    %v2106 = vld [vmem:[%s7 + $0x14] sm:$0xf]
    %v2107 = vld [vmem:[%s7 + $0x18] sm:$0xf]
    %v2108 = vld [vmem:[%s7 + $0x1c] sm:$0xf]
    %v2109 = vld [vmem:[%s7 + $0x20] sm:$0xf]
    %v2110 = vld [vmem:[%s7 + $0x24] sm:$0xf]
    %v2111 = vld [vmem:[%s7 + $0x28] sm:$0xf]
    %v2112 = vld [vmem:[%s7 + $0x2c] sm:$0xf]
    %v2113 = vld [vmem:[%s7 + $0x30] sm:$0xf]
    %v2114 = vld [vmem:[%s7 + $0x34] sm:$0xf]
    %v2115 = vld [vmem:[%s7 + $0x38] sm:$0xf]
    %v2116 = vld [vmem:[%s7 + $0x3c] sm:$0xf]
    %v2117 = vld [vmem:[%s7 + $0x40] sm:$0xf]
    %v2118 = vld [vmem:[%s7 + $0x44] sm:$0xf]
    %v2119 = vld [vmem:[%s7 + $0x48] sm:$0xf]
    %v2120 = vld [vmem:[%s7 + $0x4c] sm:$0xf]
    %v2141 = vunpack.c.l.b16 %v2101
    %v2142 = vunpack.c.l.b16 %v2102
    %v2143 = vunpack.c.l.b16 %v2103
    %v2144 = vunpack.c.l.b16 %v2104
    %v2145 = vunpack.c.l.b16 %v2105
    %v2146 = vunpack.c.l.b16 %v2106
    %v2147 = vunpack.c.l.b16 %v2107
    %v2148 = vunpack.c.l.b16 %v2108
    %v2149 = vunpack.c.l.b16 %v2109
    %v2150 = vunpack.c.l.b16 %v2110
    %v2151 = vunpack.c.l.b16 %v2111
    %v2152 = vunpack.c.l.b16 %v2112
    %v2153 = vunpack.c.l.b16 %v2113
    %v2154 = vunpack.c.l.b16 %v2114
    %v2155 = vunpack.c.l.b16 %v2115
    %v2156 = vunpack.c.l.b16 %v2116
    %v2157 = vunpack.c.l.b16 %v2117
    %v2158 = vunpack.c.l.b16 %v2118
    %v2159 = vunpack.c.l.b16 %v2119
    %v2160 = vunpack.c.l.b16 %v2120
    %v2161 = vpack.c.b16 %v2142, %v2141
    %v2162 = vpack.c.b16 %v2144, %v2143
    %v2163 = vpack.c.b16 %v2146, %v2145
    %v2164 = vpack.c.b16 %v2148, %v2147
    %v2165 = vpack.c.b16 %v2150, %v2149
    %v2166 = vpack.c.b16 %v2152, %v2151
    %v2167 = vpack.c.b16 %v2154, %v2153
    %v2168 = vpack.c.b16 %v2156, %v2155
    %v2169 = vpack.c.b16 %v2158, %v2157
    %v2170 = vpack.c.b16 %v2160, %v2159
    %v2182 = vsel %vm1630, %v2094, 0
    %v2185 = vsel %vm1630, %v2096, 0
    %v2188 = vsel %vm1630, %v2098, 0
    %v2191 = vsel %vm1630, %v2100, 0
    %2193 = vmatprep.subr.bf16.mxu0 0
    %2194 = vmatpush1.bf16.msra.mxu0 %v2168
    %2195 = vmatprep.subr.bf16.mxu0 0
    %2196 = vmatpush1.bf16.msra.mxu0 %v2167
    %2197 = vmatprep.subr.bf16.mxu0 0
    %2198 = vmatpush1.bf16.msra.mxu0 %v2166
    %2199 = vmatprep.subr.bf16.mxu0 0
    %2200 = vmatpush1.bf16.msra.mxu0 %v2165
    %2201 = vmatprep.subr.bf16.mxu0 0
    %2202 = vmatpush1.bf16.msra.mxu0 %v2164
    %2203 = vmatprep.subr.bf16.mxu0 0
    %2204 = vmatpush1.bf16.msra.mxu0 %v2163
    %2205 = vmatprep.subr.bf16.mxu0 0
    %2206 = vmatpush1.bf16.msra.mxu0 %v2162
    %2207 = vmatprep.subr.bf16.mxu0 0
    %2208 = vmatpush1.bf16.msra.mxu0 %v2161
    %2209 = vmatprep.subr.bf16.mxu0 0
    %2210 = vmatpush2.bf16.msra.mxu0 0
    %2211 = vmatprep.subr.bf16.mxu0 0
    %2212 = vmatpush2.bf16.msra.mxu0 0
    %2213 = vmatprep.subr.bf16.mxu0 0
    %2214 = vmatpush2.bf16.msra.mxu0 0
    %2215 = vmatprep.subr.bf16.mxu0 0
    %2216 = vmatpush2.bf16.msra.mxu0 0
    %2217 = vmatprep.subr.bf16.mxu0 0
    %2218 = vmatpush2.bf16.msra.mxu0 0
    %2219 = vmatprep.subr.bf16.mxu0 0
    %2220 = vmatpush2.bf16.msra.mxu0 0
    %2221 = vmatprep.subr.bf16.mxu0 0
    %2222 = vmatpush2.bf16.msra.mxu0 %v2170
    %2223 = vmatprep.subr.bf16.mxu0 0
    %2224 = vmatpush2.bf16.msra.mxu0 %v2169
    %2225 = vmatprep.mubr.bf16.mxu0 %v2182
    %2226 = vmatmul.mubr.bf16.gmra.mxu0 %v2093
    %v2227 = vpop.f32.mrf.mxu0
    %v2228 = vadd.f32 0.0, %v2227
    %v2229 = vpop.f32.mrf.mxu0
    %v2230 = vpop.f32.mrf.mxu0
    %v2231 = vadd.f32 0.0, %v2230
    %v2232 = vpop.f32.mrf.mxu0
    %2233 = vmatprep.mubr.bf16.mxu0 %v2185
    %2234 = vmatmul.mubr.bf16.gmra.mxu0 %v2095
    %v2235 = vpop.f32.mrf.mxu0
    %v2236 = vadd.f32 0.0, %v2235
    %v2237 = vpop.f32.mrf.mxu0
    %v2238 = vpop.f32.mrf.mxu0
    %v2239 = vadd.f32 0.0, %v2238
    %v2240 = vpop.f32.mrf.mxu0
    %2241 = vmatprep.mubr.bf16.mxu0 %v2188
    %2242 = vmatmul.mubr.bf16.gmra.mxu0 %v2097
    %v2243 = vpop.f32.mrf.mxu0
    %v2244 = vadd.f32 0.0, %v2243
    %v2245 = vpop.f32.mrf.mxu0
    %v2246 = vpop.f32.mrf.mxu0
    %v2247 = vadd.f32 0.0, %v2246
    %v2248 = vpop.f32.mrf.mxu0
    %2249 = vmatprep.mubr.bf16.mxu0 %v2191
    %2250 = vmatmul.mubr.bf16.gmra.mxu0 %v2099
    %v2251 = vpop.f32.mrf.mxu0
    %v2252 = vadd.f32 0.0, %v2251
    %v2253 = vpop.f32.mrf.mxu0
    %v2254 = vpop.f32.mrf.mxu0
    %v2255 = vadd.f32 0.0, %v2254
    %v2256 = vpop.f32.mrf.mxu0
    %2257 = vdwg.mxu0
    %v2258 = vld [vmem:[%s8] sm:$0x1]
    %v2260 = vlaneseq
    %v2261 = vshrl.u32 %v2260, 7
    %v2262 = vsub.s32 0, %v2261
    %v2263 = vrot.slane %v2258, %v2262
    %v2265 = vmul.f32 %v2228, %v2263
    %v2266 = vmul.f32 %v2231, %v2263
    %v2267 = vmul.f32 %v2236, %v2263
    %v2268 = vmul.f32 %v2239, %v2263
    %v2269 = vmul.f32 %v2244, %v2263
    %v2270 = vmul.f32 %v2247, %v2263
    %v2271 = vmul.f32 %v2252, %v2263
    %v2272 = vmul.f32 %v2255, %v2263
    %v2273 = vld [vmem:[%s9] sm:$0x1]
    %v2275 = vlaneseq
    %v2276 = vshrl.u32 %v2275, 7
    %v2277 = vsub.s32 0, %v2276
    %v2278 = vrot.slane %v2273, %v2277
    %v2280 = vadd.f32 %v2265, %v2278
    %v2281 = vadd.f32 %v2266, %v2278
    %v2282 = vadd.f32 %v2267, %v2278
    %v2283 = vadd.f32 %v2268, %v2278
    %v2284 = vadd.f32 %v2269, %v2278
    %v2285 = vadd.f32 %v2270, %v2278
    %v2286 = vadd.f32 %v2271, %v2278
    %v2287 = vadd.f32 %v2272, %v2278
    %v2288 = vmax.f32 %v2280, 0.0
    %v2289 = vmax.f32 %v2281, 0.0
    %v2290 = vmax.f32 %v2282, 0.0
    %v2291 = vmax.f32 %v2283, 0.0
    %v2292 = vmax.f32 %v2284, 0.0
    %v2293 = vmax.f32 %v2285, 0.0
    %v2294 = vmax.f32 %v2286, 0.0
    %v2295 = vmax.f32 %v2287, 0.0
    %2296 = vst.msk [vmem:[#allocation5] sm:$0xff] %vm1656, %v2288
    %2297 = vst.msk [vmem:[#allocation5 + $0x8] sm:$0xff] %vm1656, %v2289
    %2298 = vst.msk [vmem:[#allocation5 + $0x10] sm:$0xff] %vm1656, %v2290
    %2299 = vst.msk [vmem:[#allocation5 + $0x18] sm:$0xff] %vm1656, %v2291
    %2300 = vst.msk [vmem:[#allocation5 + $0x20] sm:$0xff] %vm1656, %v2292
    %2301 = vst.msk [vmem:[#allocation5 + $0x28] sm:$0xff] %vm1656, %v2293
    %2302 = vst.msk [vmem:[#allocation5 + $0x30] sm:$0xff] %vm1656, %v2294
    %2303 = vst.msk [vmem:[#allocation5 + $0x38] sm:$0xff] %vm1656, %v2295
    %v2304 = vld [vmem:[#allocation5] ss:$2 sm:$0xff]
    %s2305 = scalar_lea.vmem [#allocation5], 16
    %v2306 = vld [vmem:[%s2305] ss:$2 sm:$0xff]
    %s2307 = scalar_lea.vmem [#allocation5], 32
    %v2308 = vld [vmem:[%s2307] ss:$2 sm:$0xff]
    %s2309 = scalar_lea.vmem [#allocation5], 48
    %v2310 = vld [vmem:[%s2309] ss:$2 sm:$0xff]
    %s2311 = scalar_lea.vmem [#allocation5], 1
    %v2312 = vld [vmem:[%s2311] ss:$2 sm:$0xff]
    %s2313 = scalar_lea.vmem [#allocation5], 17
    %v2314 = vld [vmem:[%s2313] ss:$2 sm:$0xff]
    %s2315 = scalar_lea.vmem [#allocation5], 33
    %v2316 = vld [vmem:[%s2315] ss:$2 sm:$0xff]
    %s2317 = scalar_lea.vmem [#allocation5], 49
    %v2318 = vld [vmem:[%s2317] ss:$2 sm:$0xff]
    %v2319 = vmax.f32 %v2304, %v2312
    %v2320 = vmax.f32 %v2306, %v2314
    %v2321 = vmax.f32 %v2308, %v2316
    %v2322 = vmax.f32 %v2310, %v2318
    %v2327 = vrot.slane %v2304, 1
    %v2328 = vrot.slane %v2306, 1
    %v2329 = vsel %vm949, %v2327, %v2328
    %v2330 = vrot.slane %v2308, 1
    %v2331 = vrot.slane %v2310, 1
    %v2332 = vsel %vm949, %v2330, %v2331
    %v2337 = vmax.f32 %v2319, %v2329
    %v2338 = vmax.f32 %v2320, %v2328
    %v2339 = vmax.f32 %v2321, %v2332
    %v2340 = vmax.f32 %v2322, %v2331
    %vm2341 = vcmask 1040384
    %v2342 = vsel %vm2341, %v2338, 0.0
    %v2343 = vsel %vm2341, %v2340, 0.0
    %v2348 = vrot.slane %v2337, 1
    %v2349 = vrot.slane %v2342, 1
    %v2350 = vsel %vm949, %v2348, %v2349
    %v2351 = vsel %vm949, %v2349, %v1948
    %v2352 = vrot.slane %v2339, 1
    %v2353 = vrot.slane %v2343, 1
    %v2354 = vsel %vm949, %v2352, %v2353
    %v2355 = vsel %vm949, %v2353, %v1948
    %2356 = vrot.lane.b32.xlu0 %v2350, 64
    %v2357 = vpop.permute.xlu0 %2356
    %2358 = vrot.lane.b32.xlu0 %v2351, 64
    %v2359 = vpop.permute.xlu0 %2358
    %2360 = vrot.lane.b32.xlu0 %v2354, 64
    %v2361 = vpop.permute.xlu0 %2360
    %2362 = vrot.lane.b32.xlu0 %v2355, 64
    %v2363 = vpop.permute.xlu0 %2362
    %v2368 = vrot.slane %v2337, 2
    %v2369 = vrot.slane %v2342, 2
    %v2370 = vsel %vm1180, %v2368, %v2369
    %v2371 = vsel %vm1180, %v2369, %v1983
    %v2372 = vrot.slane %v2339, 2
    %v2373 = vrot.slane %v2343, 2
    %v2374 = vsel %vm1180, %v2372, %v2373
    %v2375 = vsel %vm1180, %v2373, %v1983
    %v2380 = vsel %vm1656, %v2337, %v2357
    %v2381 = vsel %vm1656, %v2342, %v2359
    %v2382 = vsel %vm1656, %v2339, %v2361
    %v2383 = vsel %vm1656, %v2343, %v2363
    %v2384 = vpack.c.bf16 %v2381, %v2380
    %v2385 = vpack.c.bf16 %v2371, %v2370
    %v2386 = vpack.c.bf16 %v2383, %v2382
    %v2387 = vpack.c.bf16 %v2375, %v2374
    %v2388 = vld [vmem:[%s10] sm:$0xf]
    %v2389 = vld [vmem:[%s10 + $0x4] sm:$0xf]
    %v2390 = vld [vmem:[%s10 + $0x8] sm:$0xf]
    %v2391 = vld [vmem:[%s10 + $0xc] sm:$0xf]
    %v2392 = vld [vmem:[%s10 + $0x10] sm:$0xf]
    %v2393 = vld [vmem:[%s10 + $0x14] sm:$0xf]
    %v2394 = vld [vmem:[%s10 + $0x18] sm:$0xf]
    %v2395 = vld [vmem:[%s10 + $0x1c] sm:$0xf]
    %v2396 = vld [vmem:[%s10 + $0x20] sm:$0xf]
    %v2397 = vld [vmem:[%s10 + $0x24] sm:$0xf]
    %v2398 = vld [vmem:[%s10 + $0x28] sm:$0xf]
    %v2399 = vld [vmem:[%s10 + $0x2c] sm:$0xf]
    %v2400 = vld [vmem:[%s10 + $0x30] sm:$0xf]
    %v2401 = vld [vmem:[%s10 + $0x34] sm:$0xf]
    %v2402 = vld [vmem:[%s10 + $0x38] sm:$0xf]
    %v2403 = vld [vmem:[%s10 + $0x3c] sm:$0xf]
    %v2404 = vld [vmem:[%s10 + $0x40] sm:$0xf]
    %v2405 = vld [vmem:[%s10 + $0x44] sm:$0xf]
    %v2406 = vld [vmem:[%s10 + $0x48] sm:$0xf]
    %v2407 = vld [vmem:[%s10 + $0x4c] sm:$0xf]
    %v2408 = vld [vmem:[%s10 + $0x50] sm:$0xf]
    %v2409 = vld [vmem:[%s10 + $0x54] sm:$0xf]
    %v2410 = vld [vmem:[%s10 + $0x58] sm:$0xf]
    %v2411 = vld [vmem:[%s10 + $0x5c] sm:$0xf]
    %v2436 = vunpack.c.l.b16 %v2388
    %v2437 = vunpack.c.l.b16 %v2389
    %v2438 = vunpack.c.l.b16 %v2390
    %v2439 = vunpack.c.l.b16 %v2391
    %v2440 = vunpack.c.l.b16 %v2392
    %v2441 = vunpack.c.l.b16 %v2393
    %v2442 = vunpack.c.l.b16 %v2394
    %v2443 = vunpack.c.l.b16 %v2395
    %v2444 = vunpack.c.l.b16 %v2396
    %v2445 = vunpack.c.l.b16 %v2397
    %v2446 = vunpack.c.l.b16 %v2398
    %v2447 = vunpack.c.l.b16 %v2399
    %v2448 = vunpack.c.l.b16 %v2400
    %v2449 = vunpack.c.l.b16 %v2401
    %v2450 = vunpack.c.l.b16 %v2402
    %v2451 = vunpack.c.l.b16 %v2403
    %v2452 = vunpack.c.l.b16 %v2404
    %v2453 = vunpack.c.l.b16 %v2405
    %v2454 = vunpack.c.l.b16 %v2406
    %v2455 = vunpack.c.l.b16 %v2407
    %v2456 = vunpack.c.l.b16 %v2408
    %v2457 = vunpack.c.l.b16 %v2409
    %v2458 = vunpack.c.l.b16 %v2410
    %v2459 = vunpack.c.l.b16 %v2411
    %v2460 = vpack.c.b16 %v2437, %v2436
    %v2461 = vpack.c.b16 %v2439, %v2438
    %v2462 = vpack.c.b16 %v2441, %v2440
    %v2463 = vpack.c.b16 %v2443, %v2442
    %v2464 = vpack.c.b16 %v2445, %v2444
    %v2465 = vpack.c.b16 %v2447, %v2446
    %v2466 = vpack.c.b16 %v2449, %v2448
    %v2467 = vpack.c.b16 %v2451, %v2450
    %v2468 = vpack.c.b16 %v2453, %v2452
    %v2469 = vpack.c.b16 %v2455, %v2454
    %v2470 = vpack.c.b16 %v2457, %v2456
    %v2471 = vpack.c.b16 %v2459, %v2458
    %v2485 = vsel %vm1656, %v2385, 0
    %v2488 = vsel %vm1656, %v2387, 0
    %2490 = vmatprep.subr.bf16.mxu0 0
    %2491 = vmatpush1.bf16.msra.mxu0 %v2467
    %2492 = vmatprep.subr.bf16.mxu0 0
    %2493 = vmatpush1.bf16.msra.mxu0 %v2466
    %2494 = vmatprep.subr.bf16.mxu0 0
    %2495 = vmatpush1.bf16.msra.mxu0 %v2465
    %2496 = vmatprep.subr.bf16.mxu0 0
    %2497 = vmatpush1.bf16.msra.mxu0 %v2464
    %2498 = vmatprep.subr.bf16.mxu0 0
    %2499 = vmatpush1.bf16.msra.mxu0 %v2463
    %2500 = vmatprep.subr.bf16.mxu0 0
    %2501 = vmatpush1.bf16.msra.mxu0 %v2462
    %2502 = vmatprep.subr.bf16.mxu0 0
    %2503 = vmatpush1.bf16.msra.mxu0 %v2461
    %2504 = vmatprep.subr.bf16.mxu0 0
    %2505 = vmatpush1.bf16.msra.mxu0 %v2460
    %2506 = vmatprep.subr.bf16.mxu0 0
    %2507 = vmatpush2.bf16.msra.mxu0 0
    %2508 = vmatprep.subr.bf16.mxu0 0
    %2509 = vmatpush2.bf16.msra.mxu0 0
    %2510 = vmatprep.subr.bf16.mxu0 0
    %2511 = vmatpush2.bf16.msra.mxu0 0
    %2512 = vmatprep.subr.bf16.mxu0 0
    %2513 = vmatpush2.bf16.msra.mxu0 0
    %2514 = vmatprep.subr.bf16.mxu0 0
    %2515 = vmatpush2.bf16.msra.mxu0 %v2471
    %2516 = vmatprep.subr.bf16.mxu0 0
    %2517 = vmatpush2.bf16.msra.mxu0 %v2470
    %2518 = vmatprep.subr.bf16.mxu0 0
    %2519 = vmatpush2.bf16.msra.mxu0 %v2469
    %2520 = vmatprep.subr.bf16.mxu0 0
    %2521 = vmatpush2.bf16.msra.mxu0 %v2468
    %2522 = vmatprep.mubr.bf16.mxu0 %v2485
    %2523 = vmatmul.mubr.bf16.gmra.mxu0 %v2384
    %v2524 = vpop.f32.mrf.mxu0
    %v2525 = vadd.f32 0.0, %v2524
    %v2526 = vpop.f32.mrf.mxu0
    %v2527 = vpop.f32.mrf.mxu0
    %v2528 = vadd.f32 0.0, %v2527
    %v2529 = vpop.f32.mrf.mxu0
    %2530 = vmatprep.mubr.bf16.mxu0 %v2488
    %2531 = vmatmul.mubr.bf16.gmra.mxu0 %v2386
    %v2532 = vpop.f32.mrf.mxu0
    %v2533 = vadd.f32 0.0, %v2532
    %v2534 = vpop.f32.mrf.mxu0
    %v2535 = vpop.f32.mrf.mxu0
    %v2536 = vadd.f32 0.0, %v2535
    %v2537 = vpop.f32.mrf.mxu0
    %2538 = vdwg.mxu0
    %v2539 = vld [vmem:[%s11] sm:$0x1]
    %v2541 = vlaneseq
    %v2542 = vshrl.u32 %v2541, 7
    %v2543 = vsub.s32 0, %v2542
    %v2544 = vrot.slane %v2539, %v2543
    %v2546 = vmul.f32 %v2525, %v2544
    %v2547 = vmul.f32 %v2528, %v2544
    %v2548 = vmul.f32 %v2533, %v2544
    %v2549 = vmul.f32 %v2536, %v2544
    %v2550 = vld [vmem:[%s12] sm:$0x1]
    %v2552 = vlaneseq
    %v2553 = vshrl.u32 %v2552, 7
    %v2554 = vsub.s32 0, %v2553
    %v2555 = vrot.slane %v2550, %v2554
    %v2557 = vadd.f32 %v2546, %v2555
    %v2558 = vadd.f32 %v2547, %v2555
    %v2559 = vadd.f32 %v2548, %v2555
    %v2560 = vadd.f32 %v2549, %v2555
    %v2561 = vmax.f32 %v2557, 0.0
    %v2562 = vmax.f32 %v2558, 0.0
    %v2563 = vmax.f32 %v2559, 0.0
    %v2564 = vmax.f32 %v2560, 0.0
    %2565 = vst.msk [vmem:[#allocation6] sm:$0xff] %vm2085, %v2561
    %2566 = vst.msk [vmem:[#allocation6 + $0x8] sm:$0xff] %vm2085, %v2562
    %2567 = vst.msk [vmem:[#allocation6 + $0x10] sm:$0xff] %vm2085, %v2563
    %2568 = vst.msk [vmem:[#allocation6 + $0x18] sm:$0xff] %vm2085, %v2564
    %v2569 = vld [vmem:[#allocation6] ss:$2 sm:$0xff]
    %s2570 = scalar_lea.vmem [#allocation6], 16
    %v2571 = vld [vmem:[%s2570] ss:$2 sm:$0xff]
    %s2572 = scalar_lea.vmem [#allocation6], 1
    %v2573 = vld [vmem:[%s2572] ss:$2 sm:$0xff]
    %s2574 = scalar_lea.vmem [#allocation6], 17
    %v2575 = vld [vmem:[%s2574] ss:$2 sm:$0xff]
    %v2576 = vmax.f32 %v2569, %v2573
    %v2577 = vmax.f32 %v2571, %v2575
    %v2580 = vrot.slane %v2569, 1
    %v2581 = vrot.slane %v2571, 1
    %v2584 = vmax.f32 %v2576, %v2580
    %v2585 = vmax.f32 %v2577, %v2581
    %v2586 = vsel %vm324, %v2584, 0.0
    %v2587 = vsel %vm324, %v2585, 0.0
    %v2590 = vrot.slane %v2586, 1
    %v2591 = vsel %vm949, %v2590, %v1948
    %v2592 = vrot.slane %v2587, 1
    %v2593 = vsel %vm949, %v2592, %v1948
    %2594 = vrot.lane.b32.xlu0 %v2591, 96
    %v2595 = vpop.permute.xlu0 %2594
    %2596 = vrot.lane.b32.xlu0 %v2593, 96
    %v2597 = vpop.permute.xlu0 %2596
    %v2600 = vrot.slane %v2586, 2
    %v2601 = vsel %vm1180, %v2600, %v1983
    %v2602 = vrot.slane %v2587, 2
    %v2603 = vsel %vm1180, %v2602, %v1983
    %2604 = vrot.lane.b32.xlu0 %v2601, 64
    %v2605 = vpop.permute.xlu0 %2604
    %2606 = vrot.lane.b32.xlu0 %v2603, 64
    %v2607 = vpop.permute.xlu0 %2606
    %v2610 = vsel %vm2085, %v2586, %v2595
    %v2611 = vsel %vm2085, %v2587, %v2597
    %v2612 = vsel %vm1656, %v2595, %v2605
    %v2613 = vsel %vm1656, %v2597, %v2607
    %v2614 = vpack.c.bf16 %v2610, %v2610
    %v2615 = vpack.c.bf16 %v2612, %v2612
    %v2616 = vpack.c.bf16 %v2605, %v2605
    %v2617 = vpack.c.bf16 %v2611, %v2611
    %v2618 = vpack.c.bf16 %v2613, %v2613
    %v2619 = vpack.c.bf16 %v2607, %v2607
    %v2626 = vunpack.c.l.b16 %v2614
    %v2627 = vunpack.c.l.b16 %v2615
    %v2628 = vunpack.c.l.b16 %v2616
    %v2629 = vunpack.c.l.b16 %v2617
    %v2630 = vunpack.c.l.b16 %v2618
    %v2631 = vunpack.c.l.b16 %v2619
    %v2632 = vld [vmem:[%s13] sm:$0xf]
    %v2633 = vld [vmem:[%s13 + $0x4] sm:$0xf]
    %v2634 = vld [vmem:[%s13 + $0x8] sm:$0xf]
    %v2635 = vld [vmem:[%s13 + $0xc] sm:$0xf]
    %v2636 = vld [vmem:[%s13 + $0x10] sm:$0xf]
    %v2637 = vld [vmem:[%s13 + $0x14] sm:$0xf]
    %v2638 = vld [vmem:[%s13 + $0x18] sm:$0xf]
    %v2639 = vld [vmem:[%s13 + $0x1c] sm:$0xf]
    %v2640 = vld [vmem:[%s13 + $0x20] sm:$0xf]
    %v2641 = vld [vmem:[%s13 + $0x24] sm:$0xf]
    %v2642 = vld [vmem:[%s13 + $0x28] sm:$0xf]
    %v2643 = vld [vmem:[%s13 + $0x2c] sm:$0xf]
    %v2644 = vld [vmem:[%s13 + $0x30] sm:$0xf]
    %v2645 = vld [vmem:[%s13 + $0x34] sm:$0xf]
    %v2646 = vld [vmem:[%s13 + $0x38] sm:$0xf]
    %v2647 = vld [vmem:[%s13 + $0x3c] sm:$0xf]
    %v2648 = vld [vmem:[%s13 + $0x40] sm:$0xf]
    %v2649 = vld [vmem:[%s13 + $0x44] sm:$0xf]
    %v2650 = vld [vmem:[%s13 + $0x48] sm:$0xf]
    %v2651 = vld [vmem:[%s13 + $0x4c] sm:$0xf]
    %v2652 = vld [vmem:[%s13 + $0x50] sm:$0xf]
    %v2653 = vld [vmem:[%s13 + $0x54] sm:$0xf]
    %v2654 = vld [vmem:[%s13 + $0x58] sm:$0xf]
    %v2655 = vld [vmem:[%s13 + $0x5c] sm:$0xf]
    %v2656 = vld [vmem:[%s13 + $0x60] sm:$0xf]
    %v2657 = vld [vmem:[%s13 + $0x64] sm:$0xf]
    %v2658 = vld [vmem:[%s13 + $0x68] sm:$0xf]
    %v2659 = vld [vmem:[%s13 + $0x6c] sm:$0xf]
    %v2660 = vld [vmem:[%s13 + $0x70] sm:$0xf]
    %v2661 = vld [vmem:[%s13 + $0x74] sm:$0xf]
    %v2662 = vld [vmem:[%s13 + $0x78] sm:$0xf]
    %v2663 = vld [vmem:[%s13 + $0x7c] sm:$0xf]
    %v2664 = vld [vmem:[%s13 + $0x80] sm:$0xf]
    %v2665 = vld [vmem:[%s13 + $0x84] sm:$0xf]
    %v2666 = vld [vmem:[%s13 + $0x88] sm:$0xf]
    %v2667 = vld [vmem:[%s13 + $0x8c] sm:$0xf]
    %v2668 = vpack.c.b16 %v2629, %v2626
    %v2669 = vpack.c.b16 %v2630, %v2627
    %v2670 = vpack.c.b16 %v2631, %v2628
    %v2709 = vunpack.c.l.b16 %v2632
    %v2710 = vunpack.c.l.b16 %v2633
    %v2711 = vunpack.c.l.b16 %v2634
    %v2712 = vunpack.c.l.b16 %v2635
    %v2713 = vunpack.c.l.b16 %v2636
    %v2714 = vunpack.c.l.b16 %v2637
    %v2715 = vunpack.c.l.b16 %v2638
    %v2716 = vunpack.c.l.b16 %v2639
    %v2717 = vunpack.c.l.b16 %v2640
    %v2718 = vunpack.c.l.b16 %v2641
    %v2719 = vunpack.c.l.b16 %v2642
    %v2720 = vunpack.c.l.b16 %v2643
    %v2721 = vunpack.c.l.b16 %v2644
    %v2722 = vunpack.c.l.b16 %v2645
    %v2723 = vunpack.c.l.b16 %v2646
    %v2724 = vunpack.c.l.b16 %v2647
    %v2725 = vunpack.c.l.b16 %v2648
    %v2726 = vunpack.c.l.b16 %v2649
    %v2727 = vunpack.c.l.b16 %v2650
    %v2728 = vunpack.c.l.b16 %v2651
    %v2729 = vunpack.c.l.b16 %v2652
    %v2730 = vunpack.c.l.b16 %v2653
    %v2731 = vunpack.c.l.b16 %v2654
    %v2732 = vunpack.c.l.b16 %v2655
    %v2733 = vunpack.c.l.b16 %v2656
    %v2734 = vunpack.c.l.b16 %v2657
    %v2735 = vunpack.c.l.b16 %v2658
    %v2736 = vunpack.c.l.b16 %v2659
    %v2737 = vunpack.c.l.b16 %v2660
    %v2738 = vunpack.c.l.b16 %v2661
    %v2739 = vunpack.c.l.b16 %v2662
    %v2740 = vunpack.c.l.b16 %v2663
    %v2741 = vunpack.c.l.b16 %v2664
    %v2742 = vunpack.c.l.b16 %v2665
    %v2743 = vunpack.c.l.b16 %v2666
    %v2744 = vunpack.c.l.b16 %v2667
    %v2745 = vpack.c.b16 %v2710, %v2709
    %v2746 = vpack.c.b16 %v2712, %v2711
    %v2747 = vpack.c.b16 %v2714, %v2713
    %v2748 = vpack.c.b16 %v2716, %v2715
    %v2749 = vpack.c.b16 %v2718, %v2717
    %v2750 = vpack.c.b16 %v2720, %v2719
    %v2751 = vpack.c.b16 %v2722, %v2721
    %v2752 = vpack.c.b16 %v2724, %v2723
    %v2753 = vpack.c.b16 %v2726, %v2725
    %v2754 = vpack.c.b16 %v2728, %v2727
    %v2755 = vpack.c.b16 %v2730, %v2729
    %v2756 = vpack.c.b16 %v2732, %v2731
    %v2757 = vpack.c.b16 %v2734, %v2733
    %v2758 = vpack.c.b16 %v2736, %v2735
    %v2759 = vpack.c.b16 %v2738, %v2737
    %v2760 = vpack.c.b16 %v2740, %v2739
    %v2761 = vpack.c.b16 %v2742, %v2741
    %v2762 = vpack.c.b16 %v2744, %v2743
    %v2782 = vsel %vm1630, %v2670, 0
    %2784 = vmatprep.subr.bf16.mxu0 0
    %2785 = vmatpush1.bf16.msra.mxu0 %v2752
    %2786 = vmatprep.subr.bf16.mxu0 0
    %2787 = vmatpush1.bf16.msra.mxu0 %v2751
    %2788 = vmatprep.subr.bf16.mxu0 0
    %2789 = vmatpush1.bf16.msra.mxu0 %v2750
    %2790 = vmatprep.subr.bf16.mxu0 0
    %2791 = vmatpush1.bf16.msra.mxu0 %v2749
    %2792 = vmatprep.subr.bf16.mxu0 0
    %2793 = vmatpush1.bf16.msra.mxu0 %v2748
    %2794 = vmatprep.subr.bf16.mxu0 0
    %2795 = vmatpush1.bf16.msra.mxu0 %v2747
    %2796 = vmatprep.subr.bf16.mxu0 0
    %2797 = vmatpush1.bf16.msra.mxu0 %v2746
    %2798 = vmatprep.subr.bf16.mxu0 0
    %2799 = vmatpush1.bf16.msra.mxu0 %v2745
    %2800 = vmatprep.subr.bf16.mxu0 0
    %2801 = vmatpush2.bf16.msra.mxu0 %v2760
    %2802 = vmatprep.subr.bf16.mxu0 0
    %2803 = vmatpush2.bf16.msra.mxu0 %v2759
    %2804 = vmatprep.subr.bf16.mxu0 0
    %2805 = vmatpush2.bf16.msra.mxu0 %v2758
    %2806 = vmatprep.subr.bf16.mxu0 0
    %2807 = vmatpush2.bf16.msra.mxu0 %v2757
    %2808 = vmatprep.subr.bf16.mxu0 0
    %2809 = vmatpush2.bf16.msra.mxu0 %v2756
    %2810 = vmatprep.subr.bf16.mxu0 0
    %2811 = vmatpush2.bf16.msra.mxu0 %v2755
    %2812 = vmatprep.subr.bf16.mxu0 0
    %2813 = vmatpush2.bf16.msra.mxu0 %v2754
    %2814 = vmatprep.subr.bf16.mxu0 0
    %2815 = vmatpush2.bf16.msra.mxu0 %v2753
    %2816 = vmatprep.mubr.bf16.mxu0 %v2669
    %2817 = vmatmul.mubr.bf16.gmra.mxu0 %v2668
    %v2818 = vpop.f32.mrf.mxu0
    %v2819 = vadd.f32 0.0, %v2818
    %v2820 = vpop.f32.mrf.mxu0
    %v2821 = vpop.f32.mrf.mxu0
    %v2822 = vadd.f32 0.0, %v2821
    %v2823 = vpop.f32.mrf.mxu0
    %2824 = vdwg.mxu0
    %2825 = vmatprep.subr.bf16.mxu0 0
    %2826 = vmatpush1.bf16.msra.mxu0 0
    %2827 = vmatprep.subr.bf16.mxu0 0
    %2828 = vmatpush1.bf16.msra.mxu0 0
    %2829 = vmatprep.subr.bf16.mxu0 0
    %2830 = vmatpush1.bf16.msra.mxu0 0
    %2831 = vmatprep.subr.bf16.mxu0 0
    %2832 = vmatpush1.bf16.msra.mxu0 0
    %2833 = vmatprep.subr.bf16.mxu0 0
    %2834 = vmatpush1.bf16.msra.mxu0 0
    %2835 = vmatprep.subr.bf16.mxu0 0
    %2836 = vmatpush1.bf16.msra.mxu0 0
    %2837 = vmatprep.subr.bf16.mxu0 0
    %2838 = vmatpush1.bf16.msra.mxu0 %v2762
    %2839 = vmatprep.subr.bf16.mxu0 0
    %2840 = vmatpush1.bf16.msra.mxu0 %v2761
    %2841 = vmatprep.subr.bf16.mxu0 0
    %2842 = vmatpush2.bf16.msra.mxu0 0
    %2843 = vmatprep.subr.bf16.mxu0 0
    %2844 = vmatpush2.bf16.msra.mxu0 0
    %2845 = vmatprep.subr.bf16.mxu0 0
    %2846 = vmatpush2.bf16.msra.mxu0 0
    %2847 = vmatprep.subr.bf16.mxu0 0
    %2848 = vmatpush2.bf16.msra.mxu0 0
    %2849 = vmatprep.subr.bf16.mxu0 0
    %2850 = vmatpush2.bf16.msra.mxu0 0
    %2851 = vmatprep.subr.bf16.mxu0 0
    %2852 = vmatpush2.bf16.msra.mxu0 0
    %2853 = vmatprep.subr.bf16.mxu0 0
    %2854 = vmatpush2.bf16.msra.mxu0 0
    %2855 = vmatprep.subr.bf16.mxu0 0
    %2856 = vmatpush2.bf16.msra.mxu0 0
    %2857 = vmatprep.mubr.bf16.mxu0 0
    %2858 = vmatmul.mubr.bf16.gmra.mxu0 %v2782
    %v2859 = vpop.f32.mrf.mxu0
    %v2860 = vadd.f32 %v2819, %v2859
    %v2861 = vpop.f32.mrf.mxu0
    %v2862 = vpop.f32.mrf.mxu0
    %v2863 = vadd.f32 %v2822, %v2862
    %v2864 = vpop.f32.mrf.mxu0
    %2865 = vdwg.mxu0
    %v2866 = vld [vmem:[%s14] sm:$0x1]
    %v2868 = vlaneseq
    %v2869 = vshrl.u32 %v2868, 7
    %v2870 = vsub.s32 0, %v2869
    %v2871 = vrot.slane %v2866, %v2870
    %v2873 = vmul.f32 %v2860, %v2871
    %v2874 = vmul.f32 %v2863, %v2871
    %v2875 = vld [vmem:[%s15] sm:$0x1]
    %v2877 = vlaneseq
    %v2878 = vshrl.u32 %v2877, 7
    %v2879 = vsub.s32 0, %v2878
    %v2880 = vrot.slane %v2875, %v2879
    %v2882 = vadd.f32 %v2873, %v2880
    %v2883 = vadd.f32 %v2874, %v2880
    %v2884 = vmax.f32 %v2882, 0.0
    %v2885 = vmax.f32 %v2883, 0.0
    %v2886 = vadd.f32 %v2884, 0.0
    %v2887 = vadd.f32 %v2885, 0.0
    %v2888 = vld [vmem:[%s16] sm:$0xff]
    %v2889 = vld [vmem:[%s16 + $0x8] sm:$0xff]
    %v2890 = vld [vmem:[%s16 + $0x10] sm:$0xff]
    %v2891 = vld [vmem:[%s16 + $0x18] sm:$0xff]
    %v2892 = vld [vmem:[%s16 + $0x20] sm:$0xff]
    %v2893 = vld [vmem:[%s16 + $0x28] sm:$0xff]
    %v2894 = vld [vmem:[%s16 + $0x30] sm:$0xff]
    %v2895 = vld [vmem:[%s16 + $0x38] sm:$0xff]
    %v2896 = vld [vmem:[%s16 + $0x40] sm:$0xff]
    %v2897 = vld [vmem:[%s16 + $0x48] sm:$0xff]
    %v2898 = vld [vmem:[%s16 + $0x50] sm:$0xff]
    %v2899 = vld [vmem:[%s16 + $0x58] sm:$0xff]
    %v2900 = vld [vmem:[%s17] sm:$0x1]
    %v2902 = vlaneseq
    %v2903 = vshrl.u32 %v2902, 7
    %v2904 = vsub.s32 0, %v2903
    %v2905 = vrot.slane %v2900, %v2904
    %v2909 = vrot.slane %v2887, 7
    %vm2910 = vcmask 1041409
    %v2911 = vsel %vm2910, %v2909, %v2886
    %v2912 = vsel %vm2085, %v2911, 0
    %2914 = vmatprep.subr.mxu0 0.0
    %2915 = vmatpush1.msra.mxu0 0.0
    %2916 = vmatprep.subr.mxu0 0.0
    %2917 = vmatpush1.msra.mxu0 0.0
    %2918 = vmatprep.subr.mxu0 0.0
    %2919 = vmatpush1.msra.mxu0 0.0
    %2920 = vmatprep.subr.mxu0 0.0
    %2921 = vmatpush1.msra.mxu0 0.0
    %2922 = vmatprep.subr.mxu0 0.0
    %2923 = vmatpush1.msra.mxu0 %v2899
    %2924 = vmatprep.subr.mxu0 0.0
    %2925 = vmatpush1.msra.mxu0 %v2898
    %2926 = vmatprep.subr.mxu0 0.0
    %2927 = vmatpush1.msra.mxu0 %v2897
    %2928 = vmatprep.subr.mxu0 0.0
    %2929 = vmatpush1.msra.mxu0 %v2896
    %2930 = vmatprep.subr.mxu0 0.0
    %2931 = vmatpush1.msra.mxu0 %v2895
    %2932 = vmatprep.subr.mxu0 0.0
    %2933 = vmatpush1.msra.mxu0 %v2894
    %2934 = vmatprep.subr.mxu0 0.0
    %2935 = vmatpush1.msra.mxu0 %v2893
    %2936 = vmatprep.subr.mxu0 0.0
    %2937 = vmatpush1.msra.mxu0 %v2892
    %2938 = vmatprep.subr.mxu0 0.0
    %2939 = vmatpush1.msra.mxu0 %v2891
    %2940 = vmatprep.subr.mxu0 0.0
    %2941 = vmatpush1.msra.mxu0 %v2890
    %2942 = vmatprep.subr.mxu0 0.0
    %2943 = vmatpush1.msra.mxu0 %v2889
    %2944 = vmatprep.subr.mxu0 0.0
    %2945 = vmatpush1.msra.mxu0 %v2888
    %2946 = vmatprep.subr.mxu0 0.0
    %2947 = vmatpush2.msra.mxu0 0.0
    %2948 = vmatprep.subr.mxu0 0.0
    %2949 = vmatpush2.msra.mxu0 0.0
    %2950 = vmatprep.subr.mxu0 0.0
    %2951 = vmatpush2.msra.mxu0 0.0
    %2952 = vmatprep.subr.mxu0 0.0
    %2953 = vmatpush2.msra.mxu0 0.0
    %2954 = vmatprep.subr.mxu0 0.0
    %2955 = vmatpush2.msra.mxu0 0.0
    %2956 = vmatprep.subr.mxu0 0.0
    %2957 = vmatpush2.msra.mxu0 0.0
    %2958 = vmatprep.subr.mxu0 0.0
    %2959 = vmatpush2.msra.mxu0 0.0
    %2960 = vmatprep.subr.mxu0 0.0
    %2961 = vmatpush2.msra.mxu0 0.0
    %2962 = vmatprep.subr.mxu0 0.0
    %2963 = vmatpush2.msra.mxu0 0.0
    %2964 = vmatprep.subr.mxu0 0.0
    %2965 = vmatpush2.msra.mxu0 0.0
    %2966 = vmatprep.subr.mxu0 0.0
    %2967 = vmatpush2.msra.mxu0 0.0
    %2968 = vmatprep.subr.mxu0 0.0
    %2969 = vmatpush2.msra.mxu0 0.0
    %2970 = vmatprep.subr.mxu0 0.0
    %2971 = vmatpush2.msra.mxu0 0.0
    %2972 = vmatprep.subr.mxu0 0.0
    %2973 = vmatpush2.msra.mxu0 0.0
    %2974 = vmatprep.subr.mxu0 0.0
    %2975 = vmatpush2.msra.mxu0 0.0
    %2976 = vmatprep.subr.mxu0 0.0
    %2977 = vmatpush2.msra.mxu0 0.0
    %2978 = vmatprep.mubr.f32.mxu0 0.0
    %2979 = vmatmul.mubr.f32.gmra.mxu0 %v2912
    %v2980 = vpop.f32.mrf.mxu0
    %v2981 = vadd.f32 %v2905, %v2980
    %v2982 = vpop.f32.mrf.mxu0
    %2983 = vdwg.mxu0
    %vm2984 = vcmask 25600
    %2985 = vst.msk [vmem:[#allocation7] sm:$0x3] %vm2984, %v2981
    // Predicated region
    $region74: #{_net_phy_forward.1} parent=1 // pred_check
      _
    $region75: #{_net_phy_forward.1} parent=1 // pred_check_branch
      %2987 = sbr.rel (0) target = $region77
    $region76: #{_net_phy_forward.1} parent=1 // pred_region
      %s2989 = ssub.s32 32, 32
      %2990 = vsyncadd [#allocation8], %s2989
      %s2992 = sshll.u32 [#allocation7], 4
      %s2993 = int_to_ptr.vmem [resolvable:$true] %s2992
      %2995 = dma.vmem_to_hbm [thread:$0]  %s2993, 32, %s18, [#allocation8]
    $region77: #{_net_phy_forward.1} parent=1 // pred_fallthru
      _
    // Predicated region
    $region78: #{_net_phy_forward.1} parent=1 // pred_check
      _
    $region79: #{_net_phy_forward.1} parent=1 // pred_check_branch
      %2997 = sbr.rel (0) target = $region81
    $region80: #{_net_phy_forward.1} parent=1 // pred_region
      %2998 = dma.done [#allocation8], 32
    $region81: #{_net_phy_forward.1} parent=1 // pred_fallthru
      _
    %2999 = vsyncpa [#allocation8], 1

</llo_original>
